<compile_context>
chip_gen: v7x
topology: tpu7x:2x2x1
jax: 0.10.0
libtpu: 0.0.40
codegen_flags: <defaults>
</compile_context>

<pallas_src>
import functools
import math

import jax
import jax.numpy as jnp
from jax.experimental import pallas as pl
from jax.experimental.pallas import tpu as pltpu

_LN_EPS = 1e-5  # nn.LayerNorm default


# ------------------------------ Pallas kernel ------------------------------ #

def _layernorm_sd(xb, gamma, beta):
    # LayerNorm over the full (S, D) block == nn.LayerNorm((seq_len, d_model)).
    mean = jnp.mean(xb)
    var = jnp.mean((xb - mean) ** 2)
    return (xb - mean) * jax.lax.rsqrt(var + _LN_EPS) * gamma + beta


def _encoder_layer_kernel(x_ref, mask_ref,
                          wqkv_ref, bqkv_ref, wo_ref, bo_ref,
                          g1_ref, be1_ref, w1_ref, b1_ref, w2_ref, b2_ref,
                          g2_ref, be2_ref,
                          o_ref, *, n_heads, d_k, bb):
    D = n_heads * d_k
    S = mask_ref.shape[0]
    scale = 1.0 / math.sqrt(d_k)

    # Hoisted loads: activation block / mask / weights read once.
    x = x_ref[...].astype(jnp.float32)            # (bb, S, D)
    mask = mask_ref[...].astype(jnp.float32)      # (S, S)
    wqkv = wqkv_ref[...]                          # (D, 3D)
    bqkv = bqkv_ref[...].astype(jnp.float32)      # (1, 3D)
    wo = wo_ref[...]                              # (D, D)
    bo = bo_ref[...].astype(jnp.float32)          # (1, D)
    g1, be1 = g1_ref[...], be1_ref[...]           # (S, D)
    w1, b1 = w1_ref[...], b1_ref[...].astype(jnp.float32)   # (D, DFF)/(1, DFF)
    w2, b2 = w2_ref[...], b2_ref[...].astype(jnp.float32)   # (DFF, D)/(1, D)
    g2, be2 = g2_ref[...], be2_ref[...]           # (S, D)

    # ---- fused QKV: one lane-dense (bb*S, D) x (D, 3D) matmul; batch folded
    # into the MXU M dimension; f32 accumulation. ----
    xf = x.reshape(bb * S, D)
    qkv = jnp.dot(xf.astype(wqkv.dtype), wqkv,
                  preferred_element_type=jnp.float32) + bqkv
    q = qkv[:, 0 * D:1 * D]
    k = qkv[:, 1 * D:2 * D]
    v = qkv[:, 2 * D:3 * D]

    # ---- attention + residual + LayerNorm1. Scores/softmax/LayerNorm are per
    # batch element; each head output is projected through its WO row-slice
    # and accumulated in f32 (no lane-axis head concatenate). ----
    x1_rows = []
    for b in range(bb):
        rows = slice(b * S, (b + 1) * S)
        acc = jnp.zeros((S, D), jnp.float32)
        for h in range(n_heads):
            cols = slice(h * d_k, (h + 1) * d_k)
            qh = q[rows, cols]
            kh = k[rows, cols]
            vh = v[rows, cols]
            s = jax.lax.dot_general(qh, kh, (((1,), (1,)), ((), ())),
                                    preferred_element_type=jnp.float32)
            s = s * scale + mask
            s = s - jnp.max(s, axis=-1, keepdims=True)   # stable softmax (dim=2)
            p = jnp.exp(s)
            denom = jnp.sum(p, axis=-1, keepdims=True)
            oh = jnp.dot(p, vh, preferred_element_type=jnp.float32)
            oh = oh / denom                               # deferred normalization
            acc = acc + jnp.dot(oh.astype(wo.dtype), wo[cols, :],
                                preferred_element_type=jnp.float32)
        xb = x[b] + acc + bo                              # residual (f32)
        x1_rows.append(_layernorm_sd(xb, g1, be1))
    x1 = jnp.stack(x1_rows, axis=0)                       # (bb, S, D) f32

    # ---- FFN, batch folded into M; f32 accumulation. ----
    x1f = x1.reshape(bb * S, D)
    h1 = jnp.dot(x1f.astype(w1.dtype), w1,
                 preferred_element_type=jnp.float32) + b1
    h1 = jnp.maximum(h1, 0.0)
    ffn = jnp.dot(h1.astype(w2.dtype), w2,
                  preferred_element_type=jnp.float32) + b2

    # ---- residual + LayerNorm2; single lane-dense store of the full block ----
    out_rows = []
    for b in range(bb):
        xb = x1[b] + ffn[b * S:(b + 1) * S]
        out_rows.append(_layernorm_sd(xb, g2, be2))
    o_ref[...] = jnp.stack(out_rows, axis=0).astype(o_ref.dtype)


# ------------------------- host-side weight packing ------------------------- #

def _pack_params(params, matmul_dtype):
    (wq, bq, wk, bk, wv, bv, wo, bo, g1, be1, w1, b1, w2, b2, g2, be2) = params
    H, D, dk = wq.shape

    def fuse_w(w):   # (H, D, d_k) -> (D, H*d_k), head-major columns
        return jnp.transpose(w, (1, 0, 2)).reshape(D, H * dk)

    def fuse_b(b):   # (H, 1, d_k) -> (1, H*d_k)
        return jnp.transpose(b, (1, 0, 2)).reshape(1, H * dk)

    wqkv = jnp.concatenate([fuse_w(wq), fuse_w(wk), fuse_w(wv)], axis=-1)
    bqkv = jnp.concatenate([fuse_b(bq), fuse_b(bk), fuse_b(bv)], axis=-1)
    return (wqkv.astype(matmul_dtype), bqkv.astype(jnp.float32),
            wo.astype(matmul_dtype), bo.astype(jnp.float32),
            g1.astype(jnp.float32), be1.astype(jnp.float32),
            w1.astype(matmul_dtype), b1.astype(jnp.float32),
            w2.astype(matmul_dtype), b2.astype(jnp.float32),
            g2.astype(jnp.float32), be2.astype(jnp.float32))


def _vmem_budget(packed, bb, S, D):
    # double-buffered weight blocks + in/out activation blocks + mask +
    # compiler headroom; clamp to v7x physical VMEM (64 MiB).
    wbytes = sum(int(a.size) * a.dtype.itemsize for a in packed)
    act = bb * S * D * 4
    total = 2 * wbytes + 4 * act + S * S * 4 + (16 << 20)
    return int(min(max(total, 32 << 20), 64 << 20))


# --------------------------------- wrapper ---------------------------------- #

def encoder_layer(x, mask, params, *, n_heads, batch_block=None,
                  matmul_dtype=jnp.float32):
    B, S, D = x.shape
    assert D % n_heads == 0
    d_k = D // n_heads

    # Fold the whole batch into the matmul M dimension by default (best MXU row
    # utilization on single-TC v5e/v6e).  On v7x (2 TensorCores) pass
    # batch_block=B//2 so the 'parallel' grid axis has >=2 iterations.
    if batch_block is None:
        batch_block = B
    assert B % batch_block == 0
    nb = B // batch_block

    packed = _pack_params(params, matmul_dtype)

    kernel = functools.partial(_encoder_layer_kernel, n_heads=n_heads, d_k=d_k,
                               bb=batch_block)

    in_specs = ([pl.BlockSpec((batch_block, S, D), lambda i: (i, 0, 0)),   # x
                 pl.BlockSpec((S, S), lambda i: (0, 0))]                   # mask
                + [pl.BlockSpec(a.shape, lambda i: (0, 0))                 # weights
                   for a in packed])
    out_spec = pl.BlockSpec((batch_block, S, D), lambda i: (i, 0, 0))

    return pl.pallas_call(
        kernel,
        out_shape=jax.ShapeDtypeStruct((B, S, D), jnp.float32),
        grid_spec=pltpu.PrefetchScalarGridSpec(
            num_scalar_prefetch=0,
            grid=(nb,),
            in_specs=in_specs,
            out_specs=out_spec,
        ),
        compiler_params=pltpu.CompilerParams(
            dimension_semantics=("parallel",),
            vmem_limit_bytes=_vmem_budget(packed, batch_block, S, D),
        ),
    )(x.astype(jnp.float32), mask.astype(jnp.float32), *packed)


# ---------------------------- pure-JAX reference ---------------------------- #
# Mirrors the PyTorch module exactly (f32 everywhere).

def encoder_layer_ref(x, mask, params, n_heads):
    (wq, bq, wk, bk, wv, bv, wo, bo, g1, be1, w1, b1, w2, b2, g2, be2) = params
    _, _, D = x.shape
    d_k = D // n_heads
    scale = 1.0 / math.sqrt(d_k)

    heads = []
    for h in range(n_heads):
        q = jnp.einsum("bsd,dk->bsk", x, wq[h]) + bq[h]
        k = jnp.einsum("bsd,dk->bsk", x, wk[h]) + bk[h]
        v = jnp.einsum("bsd,dk->bsk", x, wv[h]) + bv[h]
        s = jnp.einsum("bqd,bkd->bqk", q, k) * scale + mask
        p = jax.nn.softmax(s, axis=-1)
        heads.append(jnp.einsum("bqk,bkd->bqd", p, v))
    attn = jnp.concatenate(heads, axis=-1)
    attn = jnp.einsum("bsd,de->bse", attn, wo) + bo

    x = x + attn
    mean = jnp.mean(x, axis=(1, 2), keepdims=True)
    var = jnp.mean((x - mean) ** 2, axis=(1, 2), keepdims=True)
    x = (x - mean) * jax.lax.rsqrt(var + _LN_EPS) * g1 + be1

    h1 = jax.nn.relu(jnp.einsum("bsd,df->bsf", x, w1) + b1)
    ffn = jnp.einsum("bsf,fd->bsd", h1, w2) + b2

    x = x + ffn
    mean = jnp.mean(x, axis=(1, 2), keepdims=True)
    var = jnp.mean((x - mean) ** 2, axis=(1, 2), keepdims=True)
    x = (x - mean) * jax.lax.rsqrt(var + _LN_EPS) * g2 + be2
    return x


# -------------------------------- params init ------------------------------- #

def init_layer_params(key, d_model, d_ff, n_heads, seq_len):
    d_k = d_model // n_heads
    ks = jax.random.split(key, 12)
    s = 0.05
    wq = jax.random.normal(ks[0], (n_heads, d_model, d_k), jnp.float32) * s
    bq = jax.random.normal(ks[1], (n_heads, 1, d_k), jnp.float32) * s
    wk = jax.random.normal(ks[2], (n_heads, d_model, d_k), jnp.float32) * s
    bk = jax.random.normal(ks[3], (n_heads, 1, d_k), jnp.float32) * s
    wv = jax.random.normal(ks[4], (n_heads, d_model, d_k), jnp.float32) * s
    bv = jax.random.normal(ks[5], (n_heads, 1, d_k), jnp.float32) * s
    wo = jax.random.normal(ks[6], (d_model, d_model), jnp.float32) * s
    bo = jax.random.normal(ks[7], (1, d_model), jnp.float32) * s
    g1 = jnp.ones((seq_len, d_model), jnp.float32)
    be1 = jnp.zeros((seq_len, d_model), jnp.float32)
    w1 = jax.random.normal(ks[8], (d_model, d_ff), jnp.float32) * s
    b1 = jax.random.normal(ks[9], (1, d_ff), jnp.float32) * s
    w2 = jax.random.normal(ks[10], (d_ff, d_model), jnp.float32) * s
    b2 = jax.random.normal(ks[11], (1, d_model), jnp.float32) * s
    g2 = jnp.ones((seq_len, d_model), jnp.float32)
    be2 = jnp.zeros((seq_len, d_model), jnp.float32)
    return (wq, bq, wk, bk, wv, bv, wo, bo, g1, be1, w1, b1, w2, b2, g2, be2)


# ----------------------------------- main ----------------------------------- #

if __name__ == "__main__":
    B, S, D, H, DFF = 2, 8, 128, 4, 256

    key = jax.random.PRNGKey(0)
    kx, kp = jax.random.split(key)
    x = jax.random.normal(kx, (B, S, D), jnp.float32)
    # Additive attention mask (seq, seq); causal here just to exercise the path.
    mask = jnp.where(jnp.arange(S)[None, :] <= jnp.arange(S)[:, None],
                     0.0, -1e9).astype(jnp.float32)
    params = init_layer_params(kp, D, DFF, H, S)

    out = jax.block_until_ready(encoder_layer(x, mask, params, n_heads=H))

    ref = encoder_layer_ref(x, mask, params, n_heads=H)
    max_err = float(jnp.max(jnp.abs(out - ref)))
    # f32 matmul operands in both kernel and reference; residual divergence is
    # only accumulation-order / deferred-softmax-normalization, well below 2e-3.
    assert max_err < 2e-3, f"mismatch vs reference, max_err={max_err}"

    print("KERNEL_OK")
</pallas_src>

<mosaic_0001>
module attributes {stable_mosaic.version = 11 : i64} {
  func.func @_encoder_layer_kernel(%arg0: i32, %arg1: memref<2x8x128xf32, #tpu.memory_space<vmem>>, %arg2: memref<8x8xf32, #tpu.memory_space<vmem>>, %arg3: memref<128x384xf32, #tpu.memory_space<vmem>>, %arg4: memref<1x384xf32, #tpu.memory_space<vmem>>, %arg5: memref<128x128xf32, #tpu.memory_space<vmem>>, %arg6: memref<1x128xf32, #tpu.memory_space<vmem>>, %arg7: memref<8x128xf32, #tpu.memory_space<vmem>>, %arg8: memref<8x128xf32, #tpu.memory_space<vmem>>, %arg9: memref<128x256xf32, #tpu.memory_space<vmem>>, %arg10: memref<1x256xf32, #tpu.memory_space<vmem>>, %arg11: memref<256x128xf32, #tpu.memory_space<vmem>>, %arg12: memref<1x128xf32, #tpu.memory_space<vmem>>, %arg13: memref<8x128xf32, #tpu.memory_space<vmem>>, %arg14: memref<8x128xf32, #tpu.memory_space<vmem>>, %arg15: memref<2x8x128xf32, #tpu.memory_space<vmem>>) attributes {dimension_semantics = [#tpu.dimension_semantics<parallel>], iteration_bounds = array<i64: 1>, scalar_prefetch = 0 : i64, scratch_operands = 0 : i64, tpu.core_type = #tpu.core_type<tc>, window_params = [{transform_indices = @transform_0, window_bounds = array<i64: 2, 8, 128>}, {pipeline_mode = #tpu.pipeline_mode<synchronous>, transform_indices = @transform_1, window_bounds = array<i64: 8, 8>}, {pipeline_mode = #tpu.pipeline_mode<synchronous>, transform_indices = @transform_2, window_bounds = array<i64: 128, 384>}, {pipeline_mode = #tpu.pipeline_mode<synchronous>, transform_indices = @transform_3, window_bounds = array<i64: 1, 384>}, {pipeline_mode = #tpu.pipeline_mode<synchronous>, transform_indices = @transform_4, window_bounds = array<i64: 128, 128>}, {pipeline_mode = #tpu.pipeline_mode<synchronous>, transform_indices = @transform_5, window_bounds = array<i64: 1, 128>}, {pipeline_mode = #tpu.pipeline_mode<synchronous>, transform_indices = @transform_6, window_bounds = array<i64: 8, 128>}, {pipeline_mode = #tpu.pipeline_mode<synchronous>, transform_indices = @transform_7, window_bounds = array<i64: 8, 128>}, {pipeline_mode = #tpu.pipeline_mode<synchronous>, transform_indices = @transform_8, window_bounds = array<i64: 128, 256>}, {pipeline_mode = #tpu.pipeline_mode<synchronous>, transform_indices = @transform_9, window_bounds = array<i64: 1, 256>}, {pipeline_mode = #tpu.pipeline_mode<synchronous>, transform_indices = @transform_10, window_bounds = array<i64: 256, 128>}, {pipeline_mode = #tpu.pipeline_mode<synchronous>, transform_indices = @transform_11, window_bounds = array<i64: 1, 128>}, {pipeline_mode = #tpu.pipeline_mode<synchronous>, transform_indices = @transform_12, window_bounds = array<i64: 8, 128>}, {pipeline_mode = #tpu.pipeline_mode<synchronous>, transform_indices = @transform_13, window_bounds = array<i64: 8, 128>}, {transform_indices = @transform_14, window_bounds = array<i64: 2, 8, 128>}]} {
    %c0 = arith.constant 0 : index
    %c0_0 = arith.constant 0 : index
    %c0_1 = arith.constant 0 : index
    %0 = vector.load %arg1[%c0, %c0_0, %c0_1] : memref<2x8x128xf32, #tpu.memory_space<vmem>>, vector<2x8x128xf32>
    %c0_2 = arith.constant 0 : index
    %c0_3 = arith.constant 0 : index
    %1 = vector.load %arg2[%c0_2, %c0_3] : memref<8x8xf32, #tpu.memory_space<vmem>>, vector<8x8xf32>
    %c0_4 = arith.constant 0 : index
    %c0_5 = arith.constant 0 : index
    %2 = vector.load %arg3[%c0_4, %c0_5] : memref<128x384xf32, #tpu.memory_space<vmem>>, vector<128x384xf32>
    %c0_6 = arith.constant 0 : index
    %c0_7 = arith.constant 0 : index
    %3 = vector.load %arg4[%c0_6, %c0_7] : memref<1x384xf32, #tpu.memory_space<vmem>>, vector<1x384xf32>
    %c0_8 = arith.constant 0 : index
    %c0_9 = arith.constant 0 : index
    %4 = vector.load %arg5[%c0_8, %c0_9] : memref<128x128xf32, #tpu.memory_space<vmem>>, vector<128x128xf32>
    %c0_10 = arith.constant 0 : index
    %c0_11 = arith.constant 0 : index
    %5 = vector.load %arg6[%c0_10, %c0_11] : memref<1x128xf32, #tpu.memory_space<vmem>>, vector<1x128xf32>
    %c0_12 = arith.constant 0 : index
    %c0_13 = arith.constant 0 : index
    %6 = vector.load %arg7[%c0_12, %c0_13] : memref<8x128xf32, #tpu.memory_space<vmem>>, vector<8x128xf32>
    %c0_14 = arith.constant 0 : index
    %c0_15 = arith.constant 0 : index
    %7 = vector.load %arg8[%c0_14, %c0_15] : memref<8x128xf32, #tpu.memory_space<vmem>>, vector<8x128xf32>
    %c0_16 = arith.constant 0 : index
    %c0_17 = arith.constant 0 : index
    %8 = vector.load %arg9[%c0_16, %c0_17] : memref<128x256xf32, #tpu.memory_space<vmem>>, vector<128x256xf32>
    %c0_18 = arith.constant 0 : index
    %c0_19 = arith.constant 0 : index
    %9 = vector.load %arg10[%c0_18, %c0_19] : memref<1x256xf32, #tpu.memory_space<vmem>>, vector<1x256xf32>
    %c0_20 = arith.constant 0 : index
    %c0_21 = arith.constant 0 : index
    %10 = vector.load %arg11[%c0_20, %c0_21] : memref<256x128xf32, #tpu.memory_space<vmem>>, vector<256x128xf32>
    %c0_22 = arith.constant 0 : index
    %c0_23 = arith.constant 0 : index
    %11 = vector.load %arg12[%c0_22, %c0_23] : memref<1x128xf32, #tpu.memory_space<vmem>>, vector<1x128xf32>
    %c0_24 = arith.constant 0 : index
    %c0_25 = arith.constant 0 : index
    %12 = vector.load %arg13[%c0_24, %c0_25] : memref<8x128xf32, #tpu.memory_space<vmem>>, vector<8x128xf32>
    %c0_26 = arith.constant 0 : index
    %c0_27 = arith.constant 0 : index
    %13 = vector.load %arg14[%c0_26, %c0_27] : memref<8x128xf32, #tpu.memory_space<vmem>>, vector<8x128xf32>
    %14 = vector.shape_cast %0 : vector<2x8x128xf32> to vector<16x128xf32>
    %cst = arith.constant dense<0.000000e+00> : vector<16x384xf32>
    %15 = tpu.matmul %14, %2, %cst {dimension_numbers = #tpu.dot_dimension_numbers<[1], [0], [0], [1], [0, 0, 1, 1], [], []>} : vector<16x128xf32>, vector<128x384xf32>, vector<16x384xf32> -> vector<16x384xf32>
    %16 = vector.broadcast %3 : vector<1x384xf32> to vector<16x384xf32>
    %17 = arith.addf %15, %16 : vector<16x384xf32>
    %18 = vector.extract_strided_slice %17 {offsets = [0, 0], sizes = [16, 128], strides = [1, 1]} : vector<16x384xf32> to vector<16x128xf32>
    %19 = vector.extract_strided_slice %17 {offsets = [0, 128], sizes = [16, 128], strides = [1, 1]} : vector<16x384xf32> to vector<16x128xf32>
    %20 = vector.extract_strided_slice %17 {offsets = [0, 256], sizes = [16, 128], strides = [1, 1]} : vector<16x384xf32> to vector<16x128xf32>
    %cst_28 = arith.constant 0.000000e+00 : f32
    %21 = vector.broadcast %cst_28 : f32 to vector<8x128xf32>
    %22 = vector.extract_strided_slice %18 {offsets = [0, 0], sizes = [8, 32], strides = [1, 1]} : vector<16x128xf32> to vector<8x32xf32>
    %23 = vector.extract_strided_slice %19 {offsets = [0, 0], sizes = [8, 32], strides = [1, 1]} : vector<16x128xf32> to vector<8x32xf32>
    %24 = vector.extract_strided_slice %20 {offsets = [0, 0], sizes = [8, 32], strides = [1, 1]} : vector<16x128xf32> to vector<8x32xf32>
    %cst_29 = arith.constant dense<0.000000e+00> : vector<8x8xf32>
    %25 = tpu.matmul %22, %23, %cst_29 {dimension_numbers = #tpu.dot_dimension_numbers<[1], [1], [0], [0], [0, 0, 1, 0], [], []>} : vector<8x32xf32>, vector<8x32xf32>, vector<8x8xf32> -> vector<8x8xf32>
    %cst_30 = arith.constant 0.176776692 : f32
    %26 = vector.broadcast %cst_30 : f32 to vector<8x8xf32>
    %27 = arith.mulf %25, %26 : vector<8x8xf32>
    %28 = arith.addf %27, %1 : vector<8x8xf32>
    %cst_31 = arith.constant dense<0xFF800000> : vector<8xf32>
    %29 = vector.multi_reduction <maximumf>, %28, %cst_31 [1] : vector<8x8xf32> to vector<8xf32>
    %30 = vector.shape_cast %29 : vector<8xf32> to vector<8x1xf32>
    %31 = vector.broadcast %30 : vector<8x1xf32> to vector<8x8xf32>
    %32 = arith.subf %28, %31 : vector<8x8xf32>
    %33 = math.exp %32 : vector<8x8xf32>
    %cst_32 = arith.constant dense<0.000000e+00> : vector<8xf32>
    %34 = vector.multi_reduction <add>, %33, %cst_32 [1] : vector<8x8xf32> to vector<8xf32>
    %35 = vector.shape_cast %34 : vector<8xf32> to vector<8x1xf32>
    %cst_33 = arith.constant dense<0.000000e+00> : vector<8x32xf32>
    %36 = tpu.matmul %33, %24, %cst_33 {dimension_numbers = #tpu.dot_dimension_numbers<[1], [0], [0], [1], [0, 0, 1, 1], [], []>} : vector<8x8xf32>, vector<8x32xf32>, vector<8x32xf32> -> vector<8x32xf32>
    %37 = vector.broadcast %35 : vector<8x1xf32> to vector<8x32xf32>
    %38 = arith.divf %36, %37 : vector<8x32xf32>
    %39 = vector.extract_strided_slice %4 {offsets = [0, 0], sizes = [32, 128], strides = [1, 1]} : vector<128x128xf32> to vector<32x128xf32>
    %cst_34 = arith.constant dense<0.000000e+00> : vector<8x128xf32>
    %40 = tpu.matmul %38, %39, %cst_34 {dimension_numbers = #tpu.dot_dimension_numbers<[1], [0], [0], [1], [0, 0, 1, 1], [], []>} : vector<8x32xf32>, vector<32x128xf32>, vector<8x128xf32> -> vector<8x128xf32>
    %41 = arith.addf %21, %40 : vector<8x128xf32>
    %42 = vector.extract_strided_slice %18 {offsets = [0, 32], sizes = [8, 32], strides = [1, 1]} : vector<16x128xf32> to vector<8x32xf32>
    %43 = vector.extract_strided_slice %19 {offsets = [0, 32], sizes = [8, 32], strides = [1, 1]} : vector<16x128xf32> to vector<8x32xf32>
    %44 = vector.extract_strided_slice %20 {offsets = [0, 32], sizes = [8, 32], strides = [1, 1]} : vector<16x128xf32> to vector<8x32xf32>
    %cst_35 = arith.constant dense<0.000000e+00> : vector<8x8xf32>
    %45 = tpu.matmul %42, %43, %cst_35 {dimension_numbers = #tpu.dot_dimension_numbers<[1], [1], [0], [0], [0, 0, 1, 0], [], []>} : vector<8x32xf32>, vector<8x32xf32>, vector<8x8xf32> -> vector<8x8xf32>
    %cst_36 = arith.constant 0.176776692 : f32
    %46 = vector.broadcast %cst_36 : f32 to vector<8x8xf32>
    %47 = arith.mulf %45, %46 : vector<8x8xf32>
    %48 = arith.addf %47, %1 : vector<8x8xf32>
    %cst_37 = arith.constant dense<0xFF800000> : vector<8xf32>
    %49 = vector.multi_reduction <maximumf>, %48, %cst_37 [1] : vector<8x8xf32> to vector<8xf32>
    %50 = vector.shape_cast %49 : vector<8xf32> to vector<8x1xf32>
    %51 = vector.broadcast %50 : vector<8x1xf32> to vector<8x8xf32>
    %52 = arith.subf %48, %51 : vector<8x8xf32>
    %53 = math.exp %52 : vector<8x8xf32>
    %cst_38 = arith.constant dense<0.000000e+00> : vector<8xf32>
    %54 = vector.multi_reduction <add>, %53, %cst_38 [1] : vector<8x8xf32> to vector<8xf32>
    %55 = vector.shape_cast %54 : vector<8xf32> to vector<8x1xf32>
    %cst_39 = arith.constant dense<0.000000e+00> : vector<8x32xf32>
    %56 = tpu.matmul %53, %44, %cst_39 {dimension_numbers = #tpu.dot_dimension_numbers<[1], [0], [0], [1], [0, 0, 1, 1], [], []>} : vector<8x8xf32>, vector<8x32xf32>, vector<8x32xf32> -> vector<8x32xf32>
    %57 = vector.broadcast %55 : vector<8x1xf32> to vector<8x32xf32>
    %58 = arith.divf %56, %57 : vector<8x32xf32>
    %59 = vector.extract_strided_slice %4 {offsets = [32, 0], sizes = [32, 128], strides = [1, 1]} : vector<128x128xf32> to vector<32x128xf32>
    %cst_40 = arith.constant dense<0.000000e+00> : vector<8x128xf32>
    %60 = tpu.matmul %58, %59, %cst_40 {dimension_numbers = #tpu.dot_dimension_numbers<[1], [0], [0], [1], [0, 0, 1, 1], [], []>} : vector<8x32xf32>, vector<32x128xf32>, vector<8x128xf32> -> vector<8x128xf32>
    %61 = arith.addf %41, %60 : vector<8x128xf32>
    %62 = vector.extract_strided_slice %18 {offsets = [0, 64], sizes = [8, 32], strides = [1, 1]} : vector<16x128xf32> to vector<8x32xf32>
    %63 = vector.extract_strided_slice %19 {offsets = [0, 64], sizes = [8, 32], strides = [1, 1]} : vector<16x128xf32> to vector<8x32xf32>
    %64 = vector.extract_strided_slice %20 {offsets = [0, 64], sizes = [8, 32], strides = [1, 1]} : vector<16x128xf32> to vector<8x32xf32>
    %cst_41 = arith.constant dense<0.000000e+00> : vector<8x8xf32>
    %65 = tpu.matmul %62, %63, %cst_41 {dimension_numbers = #tpu.dot_dimension_numbers<[1], [1], [0], [0], [0, 0, 1, 0], [], []>} : vector<8x32xf32>, vector<8x32xf32>, vector<8x8xf32> -> vector<8x8xf32>
    %cst_42 = arith.constant 0.176776692 : f32
    %66 = vector.broadcast %cst_42 : f32 to vector<8x8xf32>
    %67 = arith.mulf %65, %66 : vector<8x8xf32>
    %68 = arith.addf %67, %1 : vector<8x8xf32>
    %cst_43 = arith.constant dense<0xFF800000> : vector<8xf32>
    %69 = vector.multi_reduction <maximumf>, %68, %cst_43 [1] : vector<8x8xf32> to vector<8xf32>
    %70 = vector.shape_cast %69 : vector<8xf32> to vector<8x1xf32>
    %71 = vector.broadcast %70 : vector<8x1xf32> to vector<8x8xf32>
    %72 = arith.subf %68, %71 : vector<8x8xf32>
    %73 = math.exp %72 : vector<8x8xf32>
    %cst_44 = arith.constant dense<0.000000e+00> : vector<8xf32>
    %74 = vector.multi_reduction <add>, %73, %cst_44 [1] : vector<8x8xf32> to vector<8xf32>
    %75 = vector.shape_cast %74 : vector<8xf32> to vector<8x1xf32>
    %cst_45 = arith.constant dense<0.000000e+00> : vector<8x32xf32>
    %76 = tpu.matmul %73, %64, %cst_45 {dimension_numbers = #tpu.dot_dimension_numbers<[1], [0], [0], [1], [0, 0, 1, 1], [], []>} : vector<8x8xf32>, vector<8x32xf32>, vector<8x32xf32> -> vector<8x32xf32>
    %77 = vector.broadcast %75 : vector<8x1xf32> to vector<8x32xf32>
    %78 = arith.divf %76, %77 : vector<8x32xf32>
    %79 = vector.extract_strided_slice %4 {offsets = [64, 0], sizes = [32, 128], strides = [1, 1]} : vector<128x128xf32> to vector<32x128xf32>
    %cst_46 = arith.constant dense<0.000000e+00> : vector<8x128xf32>
    %80 = tpu.matmul %78, %79, %cst_46 {dimension_numbers = #tpu.dot_dimension_numbers<[1], [0], [0], [1], [0, 0, 1, 1], [], []>} : vector<8x32xf32>, vector<32x128xf32>, vector<8x128xf32> -> vector<8x128xf32>
    %81 = arith.addf %61, %80 : vector<8x128xf32>
    %82 = vector.extract_strided_slice %18 {offsets = [0, 96], sizes = [8, 32], strides = [1, 1]} : vector<16x128xf32> to vector<8x32xf32>
    %83 = vector.extract_strided_slice %19 {offsets = [0, 96], sizes = [8, 32], strides = [1, 1]} : vector<16x128xf32> to vector<8x32xf32>
    %84 = vector.extract_strided_slice %20 {offsets = [0, 96], sizes = [8, 32], strides = [1, 1]} : vector<16x128xf32> to vector<8x32xf32>
    %cst_47 = arith.constant dense<0.000000e+00> : vector<8x8xf32>
    %85 = tpu.matmul %82, %83, %cst_47 {dimension_numbers = #tpu.dot_dimension_numbers<[1], [1], [0], [0], [0, 0, 1, 0], [], []>} : vector<8x32xf32>, vector<8x32xf32>, vector<8x8xf32> -> vector<8x8xf32>
    %cst_48 = arith.constant 0.176776692 : f32
    %86 = vector.broadcast %cst_48 : f32 to vector<8x8xf32>
    %87 = arith.mulf %85, %86 : vector<8x8xf32>
    %88 = arith.addf %87, %1 : vector<8x8xf32>
    %cst_49 = arith.constant dense<0xFF800000> : vector<8xf32>
    %89 = vector.multi_reduction <maximumf>, %88, %cst_49 [1] : vector<8x8xf32> to vector<8xf32>
    %90 = vector.shape_cast %89 : vector<8xf32> to vector<8x1xf32>
    %91 = vector.broadcast %90 : vector<8x1xf32> to vector<8x8xf32>
    %92 = arith.subf %88, %91 : vector<8x8xf32>
    %93 = math.exp %92 : vector<8x8xf32>
    %cst_50 = arith.constant dense<0.000000e+00> : vector<8xf32>
    %94 = vector.multi_reduction <add>, %93, %cst_50 [1] : vector<8x8xf32> to vector<8xf32>
    %95 = vector.shape_cast %94 : vector<8xf32> to vector<8x1xf32>
    %cst_51 = arith.constant dense<0.000000e+00> : vector<8x32xf32>
    %96 = tpu.matmul %93, %84, %cst_51 {dimension_numbers = #tpu.dot_dimension_numbers<[1], [0], [0], [1], [0, 0, 1, 1], [], []>} : vector<8x8xf32>, vector<8x32xf32>, vector<8x32xf32> -> vector<8x32xf32>
    %97 = vector.broadcast %95 : vector<8x1xf32> to vector<8x32xf32>
    %98 = arith.divf %96, %97 : vector<8x32xf32>
    %99 = vector.extract_strided_slice %4 {offsets = [96, 0], sizes = [32, 128], strides = [1, 1]} : vector<128x128xf32> to vector<32x128xf32>
    %cst_52 = arith.constant dense<0.000000e+00> : vector<8x128xf32>
    %100 = tpu.matmul %98, %99, %cst_52 {dimension_numbers = #tpu.dot_dimension_numbers<[1], [0], [0], [1], [0, 0, 1, 1], [], []>} : vector<8x32xf32>, vector<32x128xf32>, vector<8x128xf32> -> vector<8x128xf32>
    %101 = arith.addf %81, %100 : vector<8x128xf32>
    %102 = vector.extract_strided_slice %0 {offsets = [0, 0, 0], sizes = [1, 8, 128], strides = [1, 1, 1]} : vector<2x8x128xf32> to vector<1x8x128xf32>
    %103 = vector.shape_cast %102 : vector<1x8x128xf32> to vector<8x128xf32>
    %104 = arith.addf %103, %101 : vector<8x128xf32>
    %105 = vector.broadcast %5 : vector<1x128xf32> to vector<8x128xf32>
    %106 = arith.addf %104, %105 : vector<8x128xf32>
    %107 = vector.shape_cast %106 : vector<8x128xf32> to vector<1x8x128xf32>
    %cst_53 = arith.constant dense<0.000000e+00> : vector<1xf32>
    %108 = vector.multi_reduction <add>, %107, %cst_53 [1, 2] : vector<1x8x128xf32> to vector<1xf32>
    %109 = vector.shape_cast %108 : vector<1xf32> to vector<1x1x1xf32>
    %110 = vector.extract %109[0, 0, 0] : f32 from vector<1x1x1xf32>
    %cst_54 = arith.constant 1.024000e+03 : f32
    %111 = arith.divf %110, %cst_54 : f32
    %112 = vector.broadcast %111 : f32 to vector<8x128xf32>
    %113 = arith.subf %106, %112 : vector<8x128xf32>
    %114 = arith.mulf %113, %113 : vector<8x128xf32>
    %115 = vector.shape_cast %114 : vector<8x128xf32> to vector<1x8x128xf32>
    %cst_55 = arith.constant dense<0.000000e+00> : vector<1xf32>
    %116 = vector.multi_reduction <add>, %115, %cst_55 [1, 2] : vector<1x8x128xf32> to vector<1xf32>
    %117 = vector.shape_cast %116 : vector<1xf32> to vector<1x1x1xf32>
    %118 = vector.extract %117[0, 0, 0] : f32 from vector<1x1x1xf32>
    %cst_56 = arith.constant 1.024000e+03 : f32
    %119 = arith.divf %118, %cst_56 : f32
    %120 = vector.broadcast %111 : f32 to vector<8x128xf32>
    %121 = arith.subf %106, %120 : vector<8x128xf32>
    %cst_57 = arith.constant 9.99999974E-6 : f32
    %122 = arith.addf %119, %cst_57 : f32
    %123 = math.rsqrt %122 : f32
    %124 = vector.broadcast %123 : f32 to vector<8x128xf32>
    %125 = arith.mulf %121, %124 : vector<8x128xf32>
    %126 = arith.mulf %125, %6 : vector<8x128xf32>
    %127 = arith.addf %126, %7 : vector<8x128xf32>
    %cst_58 = arith.constant 0.000000e+00 : f32
    %128 = vector.broadcast %cst_58 : f32 to vector<8x128xf32>
    %129 = vector.extract_strided_slice %18 {offsets = [8, 0], sizes = [8, 32], strides = [1, 1]} : vector<16x128xf32> to vector<8x32xf32>
    %130 = vector.extract_strided_slice %19 {offsets = [8, 0], sizes = [8, 32], strides = [1, 1]} : vector<16x128xf32> to vector<8x32xf32>
    %131 = vector.extract_strided_slice %20 {offsets = [8, 0], sizes = [8, 32], strides = [1, 1]} : vector<16x128xf32> to vector<8x32xf32>
    %cst_59 = arith.constant dense<0.000000e+00> : vector<8x8xf32>
    %132 = tpu.matmul %129, %130, %cst_59 {dimension_numbers = #tpu.dot_dimension_numbers<[1], [1], [0], [0], [0, 0, 1, 0], [], []>} : vector<8x32xf32>, vector<8x32xf32>, vector<8x8xf32> -> vector<8x8xf32>
    %cst_60 = arith.constant 0.176776692 : f32
    %133 = vector.broadcast %cst_60 : f32 to vector<8x8xf32>
    %134 = arith.mulf %132, %133 : vector<8x8xf32>
    %135 = arith.addf %134, %1 : vector<8x8xf32>
    %cst_61 = arith.constant dense<0xFF800000> : vector<8xf32>
    %136 = vector.multi_reduction <maximumf>, %135, %cst_61 [1] : vector<8x8xf32> to vector<8xf32>
    %137 = vector.shape_cast %136 : vector<8xf32> to vector<8x1xf32>
    %138 = vector.broadcast %137 : vector<8x1xf32> to vector<8x8xf32>
    %139 = arith.subf %135, %138 : vector<8x8xf32>
    %140 = math.exp %139 : vector<8x8xf32>
    %cst_62 = arith.constant dense<0.000000e+00> : vector<8xf32>
    %141 = vector.multi_reduction <add>, %140, %cst_62 [1] : vector<8x8xf32> to vector<8xf32>
    %142 = vector.shape_cast %141 : vector<8xf32> to vector<8x1xf32>
    %cst_63 = arith.constant dense<0.000000e+00> : vector<8x32xf32>
    %143 = tpu.matmul %140, %131, %cst_63 {dimension_numbers = #tpu.dot_dimension_numbers<[1], [0], [0], [1], [0, 0, 1, 1], [], []>} : vector<8x8xf32>, vector<8x32xf32>, vector<8x32xf32> -> vector<8x32xf32>
    %144 = vector.broadcast %142 : vector<8x1xf32> to vector<8x32xf32>
    %145 = arith.divf %143, %144 : vector<8x32xf32>
    %146 = vector.extract_strided_slice %4 {offsets = [0, 0], sizes = [32, 128], strides = [1, 1]} : vector<128x128xf32> to vector<32x128xf32>
    %cst_64 = arith.constant dense<0.000000e+00> : vector<8x128xf32>
    %147 = tpu.matmul %145, %146, %cst_64 {dimension_numbers = #tpu.dot_dimension_numbers<[1], [0], [0], [1], [0, 0, 1, 1], [], []>} : vector<8x32xf32>, vector<32x128xf32>, vector<8x128xf32> -> vector<8x128xf32>
    %148 = arith.addf %128, %147 : vector<8x128xf32>
    %149 = vector.extract_strided_slice %18 {offsets = [8, 32], sizes = [8, 32], strides = [1, 1]} : vector<16x128xf32> to vector<8x32xf32>
    %150 = vector.extract_strided_slice %19 {offsets = [8, 32], sizes = [8, 32], strides = [1, 1]} : vector<16x128xf32> to vector<8x32xf32>
    %151 = vector.extract_strided_slice %20 {offsets = [8, 32], sizes = [8, 32], strides = [1, 1]} : vector<16x128xf32> to vector<8x32xf32>
    %cst_65 = arith.constant dense<0.000000e+00> : vector<8x8xf32>
    %152 = tpu.matmul %149, %150, %cst_65 {dimension_numbers = #tpu.dot_dimension_numbers<[1], [1], [0], [0], [0, 0, 1, 0], [], []>} : vector<8x32xf32>, vector<8x32xf32>, vector<8x8xf32> -> vector<8x8xf32>
    %cst_66 = arith.constant 0.176776692 : f32
    %153 = vector.broadcast %cst_66 : f32 to vector<8x8xf32>
    %154 = arith.mulf %152, %153 : vector<8x8xf32>
    %155 = arith.addf %154, %1 : vector<8x8xf32>
    %cst_67 = arith.constant dense<0xFF800000> : vector<8xf32>
    %156 = vector.multi_reduction <maximumf>, %155, %cst_67 [1] : vector<8x8xf32> to vector<8xf32>
    %157 = vector.shape_cast %156 : vector<8xf32> to vector<8x1xf32>
    %158 = vector.broadcast %157 : vector<8x1xf32> to vector<8x8xf32>
    %159 = arith.subf %155, %158 : vector<8x8xf32>
    %160 = math.exp %159 : vector<8x8xf32>
    %cst_68 = arith.constant dense<0.000000e+00> : vector<8xf32>
    %161 = vector.multi_reduction <add>, %160, %cst_68 [1] : vector<8x8xf32> to vector<8xf32>
    %162 = vector.shape_cast %161 : vector<8xf32> to vector<8x1xf32>
    %cst_69 = arith.constant dense<0.000000e+00> : vector<8x32xf32>
    %163 = tpu.matmul %160, %151, %cst_69 {dimension_numbers = #tpu.dot_dimension_numbers<[1], [0], [0], [1], [0, 0, 1, 1], [], []>} : vector<8x8xf32>, vector<8x32xf32>, vector<8x32xf32> -> vector<8x32xf32>
    %164 = vector.broadcast %162 : vector<8x1xf32> to vector<8x32xf32>
    %165 = arith.divf %163, %164 : vector<8x32xf32>
    %166 = vector.extract_strided_slice %4 {offsets = [32, 0], sizes = [32, 128], strides = [1, 1]} : vector<128x128xf32> to vector<32x128xf32>
    %cst_70 = arith.constant dense<0.000000e+00> : vector<8x128xf32>
    %167 = tpu.matmul %165, %166, %cst_70 {dimension_numbers = #tpu.dot_dimension_numbers<[1], [0], [0], [1], [0, 0, 1, 1], [], []>} : vector<8x32xf32>, vector<32x128xf32>, vector<8x128xf32> -> vector<8x128xf32>
    %168 = arith.addf %148, %167 : vector<8x128xf32>
    %169 = vector.extract_strided_slice %18 {offsets = [8, 64], sizes = [8, 32], strides = [1, 1]} : vector<16x128xf32> to vector<8x32xf32>
    %170 = vector.extract_strided_slice %19 {offsets = [8, 64], sizes = [8, 32], strides = [1, 1]} : vector<16x128xf32> to vector<8x32xf32>
    %171 = vector.extract_strided_slice %20 {offsets = [8, 64], sizes = [8, 32], strides = [1, 1]} : vector<16x128xf32> to vector<8x32xf32>
    %cst_71 = arith.constant dense<0.000000e+00> : vector<8x8xf32>
    %172 = tpu.matmul %169, %170, %cst_71 {dimension_numbers = #tpu.dot_dimension_numbers<[1], [1], [0], [0], [0, 0, 1, 0], [], []>} : vector<8x32xf32>, vector<8x32xf32>, vector<8x8xf32> -> vector<8x8xf32>
    %cst_72 = arith.constant 0.176776692 : f32
    %173 = vector.broadcast %cst_72 : f32 to vector<8x8xf32>
    %174 = arith.mulf %172, %173 : vector<8x8xf32>
    %175 = arith.addf %174, %1 : vector<8x8xf32>
    %cst_73 = arith.constant dense<0xFF800000> : vector<8xf32>
    %176 = vector.multi_reduction <maximumf>, %175, %cst_73 [1] : vector<8x8xf32> to vector<8xf32>
    %177 = vector.shape_cast %176 : vector<8xf32> to vector<8x1xf32>
    %178 = vector.broadcast %177 : vector<8x1xf32> to vector<8x8xf32>
    %179 = arith.subf %175, %178 : vector<8x8xf32>
    %180 = math.exp %179 : vector<8x8xf32>
    %cst_74 = arith.constant dense<0.000000e+00> : vector<8xf32>
    %181 = vector.multi_reduction <add>, %180, %cst_74 [1] : vector<8x8xf32> to vector<8xf32>
    %182 = vector.shape_cast %181 : vector<8xf32> to vector<8x1xf32>
    %cst_75 = arith.constant dense<0.000000e+00> : vector<8x32xf32>
    %183 = tpu.matmul %180, %171, %cst_75 {dimension_numbers = #tpu.dot_dimension_numbers<[1], [0], [0], [1], [0, 0, 1, 1], [], []>} : vector<8x8xf32>, vector<8x32xf32>, vector<8x32xf32> -> vector<8x32xf32>
    %184 = vector.broadcast %182 : vector<8x1xf32> to vector<8x32xf32>
    %185 = arith.divf %183, %184 : vector<8x32xf32>
    %186 = vector.extract_strided_slice %4 {offsets = [64, 0], sizes = [32, 128], strides = [1, 1]} : vector<128x128xf32> to vector<32x128xf32>
    %cst_76 = arith.constant dense<0.000000e+00> : vector<8x128xf32>
    %187 = tpu.matmul %185, %186, %cst_76 {dimension_numbers = #tpu.dot_dimension_numbers<[1], [0], [0], [1], [0, 0, 1, 1], [], []>} : vector<8x32xf32>, vector<32x128xf32>, vector<8x128xf32> -> vector<8x128xf32>
    %188 = arith.addf %168, %187 : vector<8x128xf32>
    %189 = vector.extract_strided_slice %18 {offsets = [8, 96], sizes = [8, 32], strides = [1, 1]} : vector<16x128xf32> to vector<8x32xf32>
    %190 = vector.extract_strided_slice %19 {offsets = [8, 96], sizes = [8, 32], strides = [1, 1]} : vector<16x128xf32> to vector<8x32xf32>
    %191 = vector.extract_strided_slice %20 {offsets = [8, 96], sizes = [8, 32], strides = [1, 1]} : vector<16x128xf32> to vector<8x32xf32>
    %cst_77 = arith.constant dense<0.000000e+00> : vector<8x8xf32>
    %192 = tpu.matmul %189, %190, %cst_77 {dimension_numbers = #tpu.dot_dimension_numbers<[1], [1], [0], [0], [0, 0, 1, 0], [], []>} : vector<8x32xf32>, vector<8x32xf32>, vector<8x8xf32> -> vector<8x8xf32>
    %cst_78 = arith.constant 0.176776692 : f32
    %193 = vector.broadcast %cst_78 : f32 to vector<8x8xf32>
    %194 = arith.mulf %192, %193 : vector<8x8xf32>
    %195 = arith.addf %194, %1 : vector<8x8xf32>
    %cst_79 = arith.constant dense<0xFF800000> : vector<8xf32>
    %196 = vector.multi_reduction <maximumf>, %195, %cst_79 [1] : vector<8x8xf32> to vector<8xf32>
    %197 = vector.shape_cast %196 : vector<8xf32> to vector<8x1xf32>
    %198 = vector.broadcast %197 : vector<8x1xf32> to vector<8x8xf32>
    %199 = arith.subf %195, %198 : vector<8x8xf32>
    %200 = math.exp %199 : vector<8x8xf32>
    %cst_80 = arith.constant dense<0.000000e+00> : vector<8xf32>
    %201 = vector.multi_reduction <add>, %200, %cst_80 [1] : vector<8x8xf32> to vector<8xf32>
    %202 = vector.shape_cast %201 : vector<8xf32> to vector<8x1xf32>
    %cst_81 = arith.constant dense<0.000000e+00> : vector<8x32xf32>
    %203 = tpu.matmul %200, %191, %cst_81 {dimension_numbers = #tpu.dot_dimension_numbers<[1], [0], [0], [1], [0, 0, 1, 1], [], []>} : vector<8x8xf32>, vector<8x32xf32>, vector<8x32xf32> -> vector<8x32xf32>
    %204 = vector.broadcast %202 : vector<8x1xf32> to vector<8x32xf32>
    %205 = arith.divf %203, %204 : vector<8x32xf32>
    %206 = vector.extract_strided_slice %4 {offsets = [96, 0], sizes = [32, 128], strides = [1, 1]} : vector<128x128xf32> to vector<32x128xf32>
    %cst_82 = arith.constant dense<0.000000e+00> : vector<8x128xf32>
    %207 = tpu.matmul %205, %206, %cst_82 {dimension_numbers = #tpu.dot_dimension_numbers<[1], [0], [0], [1], [0, 0, 1, 1], [], []>} : vector<8x32xf32>, vector<32x128xf32>, vector<8x128xf32> -> vector<8x128xf32>
    %208 = arith.addf %188, %207 : vector<8x128xf32>
    %209 = vector.extract_strided_slice %0 {offsets = [1, 0, 0], sizes = [1, 8, 128], strides = [1, 1, 1]} : vector<2x8x128xf32> to vector<1x8x128xf32>
    %210 = vector.shape_cast %209 : vector<1x8x128xf32> to vector<8x128xf32>
    %211 = arith.addf %210, %208 : vector<8x128xf32>
    %212 = vector.broadcast %5 : vector<1x128xf32> to vector<8x128xf32>
    %213 = arith.addf %211, %212 : vector<8x128xf32>
    %214 = vector.shape_cast %213 : vector<8x128xf32> to vector<1x8x128xf32>
    %cst_83 = arith.constant dense<0.000000e+00> : vector<1xf32>
    %215 = vector.multi_reduction <add>, %214, %cst_83 [1, 2] : vector<1x8x128xf32> to vector<1xf32>
    %216 = vector.shape_cast %215 : vector<1xf32> to vector<1x1x1xf32>
    %217 = vector.extract %216[0, 0, 0] : f32 from vector<1x1x1xf32>
    %cst_84 = arith.constant 1.024000e+03 : f32
    %218 = arith.divf %217, %cst_84 : f32
    %219 = vector.broadcast %218 : f32 to vector<8x128xf32>
    %220 = arith.subf %213, %219 : vector<8x128xf32>
    %221 = arith.mulf %220, %220 : vector<8x128xf32>
    %222 = vector.shape_cast %221 : vector<8x128xf32> to vector<1x8x128xf32>
    %cst_85 = arith.constant dense<0.000000e+00> : vector<1xf32>
    %223 = vector.multi_reduction <add>, %222, %cst_85 [1, 2] : vector<1x8x128xf32> to vector<1xf32>
    %224 = vector.shape_cast %223 : vector<1xf32> to vector<1x1x1xf32>
    %225 = vector.extract %224[0, 0, 0] : f32 from vector<1x1x1xf32>
    %cst_86 = arith.constant 1.024000e+03 : f32
    %226 = arith.divf %225, %cst_86 : f32
    %227 = vector.broadcast %218 : f32 to vector<8x128xf32>
    %228 = arith.subf %213, %227 : vector<8x128xf32>
    %cst_87 = arith.constant 9.99999974E-6 : f32
    %229 = arith.addf %226, %cst_87 : f32
    %230 = math.rsqrt %229 : f32
    %231 = vector.broadcast %230 : f32 to vector<8x128xf32>
    %232 = arith.mulf %228, %231 : vector<8x128xf32>
    %233 = arith.mulf %232, %6 : vector<8x128xf32>
    %234 = arith.addf %233, %7 : vector<8x128xf32>
    %235 = vector.shape_cast %127 : vector<8x128xf32> to vector<1x8x128xf32>
    %236 = vector.shape_cast %234 : vector<8x128xf32> to vector<1x8x128xf32>
    %237 = tpu.concatenate %235, %236 in 0 : vector<1x8x128xf32>, vector<1x8x128xf32> -> vector<2x8x128xf32>
    %238 = vector.shape_cast %237 : vector<2x8x128xf32> to vector<16x128xf32>
    %cst_88 = arith.constant dense<0.000000e+00> : vector<16x256xf32>
    %239 = tpu.matmul %238, %8, %cst_88 {dimension_numbers = #tpu.dot_dimension_numbers<[1], [0], [0], [1], [0, 0, 1, 1], [], []>} : vector<16x128xf32>, vector<128x256xf32>, vector<16x256xf32> -> vector<16x256xf32>
    %240 = vector.broadcast %9 : vector<1x256xf32> to vector<16x256xf32>
    %241 = arith.addf %239, %240 : vector<16x256xf32>
    %cst_89 = arith.constant 0.000000e+00 : f32
    %242 = vector.broadcast %cst_89 : f32 to vector<16x256xf32>
    %243 = arith.maximumf %241, %242 : vector<16x256xf32>
    %cst_90 = arith.constant dense<0.000000e+00> : vector<16x128xf32>
    %244 = tpu.matmul %243, %10, %cst_90 {dimension_numbers = #tpu.dot_dimension_numbers<[1], [0], [0], [1], [0, 0, 1, 1], [], []>} : vector<16x256xf32>, vector<256x128xf32>, vector<16x128xf32> -> vector<16x128xf32>
    %245 = vector.broadcast %11 : vector<1x128xf32> to vector<16x128xf32>
    %246 = arith.addf %244, %245 : vector<16x128xf32>
    %247 = vector.extract_strided_slice %237 {offsets = [0, 0, 0], sizes = [1, 8, 128], strides = [1, 1, 1]} : vector<2x8x128xf32> to vector<1x8x128xf32>
    %248 = vector.shape_cast %247 : vector<1x8x128xf32> to vector<8x128xf32>
    %249 = vector.extract_strided_slice %246 {offsets = [0, 0], sizes = [8, 128], strides = [1, 1]} : vector<16x128xf32> to vector<8x128xf32>
    %250 = arith.addf %248, %249 : vector<8x128xf32>
    %251 = vector.shape_cast %250 : vector<8x128xf32> to vector<1x8x128xf32>
    %cst_91 = arith.constant dense<0.000000e+00> : vector<1xf32>
    %252 = vector.multi_reduction <add>, %251, %cst_91 [1, 2] : vector<1x8x128xf32> to vector<1xf32>
    %253 = vector.shape_cast %252 : vector<1xf32> to vector<1x1x1xf32>
    %254 = vector.extract %253[0, 0, 0] : f32 from vector<1x1x1xf32>
    %cst_92 = arith.constant 1.024000e+03 : f32
    %255 = arith.divf %254, %cst_92 : f32
    %256 = vector.broadcast %255 : f32 to vector<8x128xf32>
    %257 = arith.subf %250, %256 : vector<8x128xf32>
    %258 = arith.mulf %257, %257 : vector<8x128xf32>
    %259 = vector.shape_cast %258 : vector<8x128xf32> to vector<1x8x128xf32>
    %cst_93 = arith.constant dense<0.000000e+00> : vector<1xf32>
    %260 = vector.multi_reduction <add>, %259, %cst_93 [1, 2] : vector<1x8x128xf32> to vector<1xf32>
    %261 = vector.shape_cast %260 : vector<1xf32> to vector<1x1x1xf32>
    %262 = vector.extract %261[0, 0, 0] : f32 from vector<1x1x1xf32>
    %cst_94 = arith.constant 1.024000e+03 : f32
    %263 = arith.divf %262, %cst_94 : f32
    %264 = vector.broadcast %255 : f32 to vector<8x128xf32>
    %265 = arith.subf %250, %264 : vector<8x128xf32>
    %cst_95 = arith.constant 9.99999974E-6 : f32
    %266 = arith.addf %263, %cst_95 : f32
    %267 = math.rsqrt %266 : f32
    %268 = vector.broadcast %267 : f32 to vector<8x128xf32>
    %269 = arith.mulf %265, %268 : vector<8x128xf32>
    %270 = arith.mulf %269, %12 : vector<8x128xf32>
    %271 = arith.addf %270, %13 : vector<8x128xf32>
    %272 = vector.extract_strided_slice %237 {offsets = [1, 0, 0], sizes = [1, 8, 128], strides = [1, 1, 1]} : vector<2x8x128xf32> to vector<1x8x128xf32>
    %273 = vector.shape_cast %272 : vector<1x8x128xf32> to vector<8x128xf32>
    %274 = vector.extract_strided_slice %246 {offsets = [8, 0], sizes = [8, 128], strides = [1, 1]} : vector<16x128xf32> to vector<8x128xf32>
    %275 = arith.addf %273, %274 : vector<8x128xf32>
    %276 = vector.shape_cast %275 : vector<8x128xf32> to vector<1x8x128xf32>
    %cst_96 = arith.constant dense<0.000000e+00> : vector<1xf32>
    %277 = vector.multi_reduction <add>, %276, %cst_96 [1, 2] : vector<1x8x128xf32> to vector<1xf32>
    %278 = vector.shape_cast %277 : vector<1xf32> to vector<1x1x1xf32>
    %279 = vector.extract %278[0, 0, 0] : f32 from vector<1x1x1xf32>
    %cst_97 = arith.constant 1.024000e+03 : f32
    %280 = arith.divf %279, %cst_97 : f32
    %281 = vector.broadcast %280 : f32 to vector<8x128xf32>
    %282 = arith.subf %275, %281 : vector<8x128xf32>
    %283 = arith.mulf %282, %282 : vector<8x128xf32>
    %284 = vector.shape_cast %283 : vector<8x128xf32> to vector<1x8x128xf32>
    %cst_98 = arith.constant dense<0.000000e+00> : vector<1xf32>
    %285 = vector.multi_reduction <add>, %284, %cst_98 [1, 2] : vector<1x8x128xf32> to vector<1xf32>
    %286 = vector.shape_cast %285 : vector<1xf32> to vector<1x1x1xf32>
    %287 = vector.extract %286[0, 0, 0] : f32 from vector<1x1x1xf32>
    %cst_99 = arith.constant 1.024000e+03 : f32
    %288 = arith.divf %287, %cst_99 : f32
    %289 = vector.broadcast %280 : f32 to vector<8x128xf32>
    %290 = arith.subf %275, %289 : vector<8x128xf32>
    %cst_100 = arith.constant 9.99999974E-6 : f32
    %291 = arith.addf %288, %cst_100 : f32
    %292 = math.rsqrt %291 : f32
    %293 = vector.broadcast %292 : f32 to vector<8x128xf32>
    %294 = arith.mulf %290, %293 : vector<8x128xf32>
    %295 = arith.mulf %294, %12 : vector<8x128xf32>
    %296 = arith.addf %295, %13 : vector<8x128xf32>
    %297 = vector.shape_cast %271 : vector<8x128xf32> to vector<1x8x128xf32>
    %298 = vector.shape_cast %296 : vector<8x128xf32> to vector<1x8x128xf32>
    %299 = tpu.concatenate %297, %298 in 0 : vector<1x8x128xf32>, vector<1x8x128xf32> -> vector<2x8x128xf32>
    %c0_101 = arith.constant 0 : index
    %c0_102 = arith.constant 0 : index
    %c0_103 = arith.constant 0 : index
    %300 = vector.load %arg15[%c0_101, %c0_102, %c0_103] : memref<2x8x128xf32, #tpu.memory_space<vmem>>, vector<2x8x128xf32>
    tpu.vector_store %arg15[%c0_101, %c0_102, %c0_103], %299 {strides = array<i32>} : memref<2x8x128xf32, #tpu.memory_space<vmem>>, vector<2x8x128xf32>,
    return
  }
  func.func @transform_0(%arg0: i32) -> (i32, i32, i32) {
    %c0_i32 = arith.constant 0 : i32
    %c0_i32_0 = arith.constant 0 : i32
    %c0_i32_1 = arith.constant 0 : i32
    return %arg0, %c0_i32, %c0_i32_0 : i32, i32, i32
  }
  func.func @transform_1(%arg0: i32) -> (i32, i32) {
    %c0_i32 = arith.constant 0 : i32
    %c0_i32_0 = arith.constant 0 : i32
    %c0_i32_1 = arith.constant 0 : i32
    return %c0_i32, %c0_i32_0 : i32, i32
  }
  func.func @transform_2(%arg0: i32) -> (i32, i32) {
    %c0_i32 = arith.constant 0 : i32
    %c0_i32_0 = arith.constant 0 : i32
    %c0_i32_1 = arith.constant 0 : i32
    return %c0_i32, %c0_i32_0 : i32, i32
  }
  func.func @transform_3(%arg0: i32) -> (i32, i32) {
    %c0_i32 = arith.constant 0 : i32
    %c0_i32_0 = arith.constant 0 : i32
    %c0_i32_1 = arith.constant 0 : i32
    return %c0_i32, %c0_i32_0 : i32, i32
  }
  func.func @transform_4(%arg0: i32) -> (i32, i32) {
    %c0_i32 = arith.constant 0 : i32
    %c0_i32_0 = arith.constant 0 : i32
    %c0_i32_1 = arith.constant 0 : i32
    return %c0_i32, %c0_i32_0 : i32, i32
  }
  func.func @transform_5(%arg0: i32) -> (i32, i32) {
    %c0_i32 = arith.constant 0 : i32
    %c0_i32_0 = arith.constant 0 : i32
    %c0_i32_1 = arith.constant 0 : i32
    return %c0_i32, %c0_i32_0 : i32, i32
  }
  func.func @transform_6(%arg0: i32) -> (i32, i32) {
    %c0_i32 = arith.constant 0 : i32
    %c0_i32_0 = arith.constant 0 : i32
    %c0_i32_1 = arith.constant 0 : i32
    return %c0_i32, %c0_i32_0 : i32, i32
  }
  func.func @transform_7(%arg0: i32) -> (i32, i32) {
    %c0_i32 = arith.constant 0 : i32
    %c0_i32_0 = arith.constant 0 : i32
    %c0_i32_1 = arith.constant 0 : i32
    return %c0_i32, %c0_i32_0 : i32, i32
  }
  func.func @transform_8(%arg0: i32) -> (i32, i32) {
    %c0_i32 = arith.constant 0 : i32
    %c0_i32_0 = arith.constant 0 : i32
    %c0_i32_1 = arith.constant 0 : i32
    return %c0_i32, %c0_i32_0 : i32, i32
  }
  func.func @transform_9(%arg0: i32) -> (i32, i32) {
    %c0_i32 = arith.constant 0 : i32
    %c0_i32_0 = arith.constant 0 : i32
    %c0_i32_1 = arith.constant 0 : i32
    return %c0_i32, %c0_i32_0 : i32, i32
  }
  func.func @transform_10(%arg0: i32) -> (i32, i32) {
    %c0_i32 = arith.constant 0 : i32
    %c0_i32_0 = arith.constant 0 : i32
    %c0_i32_1 = arith.constant 0 : i32
    return %c0_i32, %c0_i32_0 : i32, i32
  }
  func.func @transform_11(%arg0: i32) -> (i32, i32) {
    %c0_i32 = arith.constant 0 : i32
    %c0_i32_0 = arith.constant 0 : i32
    %c0_i32_1 = arith.constant 0 : i32
    return %c0_i32, %c0_i32_0 : i32, i32
  }
  func.func @transform_12(%arg0: i32) -> (i32, i32) {
    %c0_i32 = arith.constant 0 : i32
    %c0_i32_0 = arith.constant 0 : i32
    %c0_i32_1 = arith.constant 0 : i32
    return %c0_i32, %c0_i32_0 : i32, i32
  }
  func.func @transform_13(%arg0: i32) -> (i32, i32) {
    %c0_i32 = arith.constant 0 : i32
    %c0_i32_0 = arith.constant 0 : i32
    %c0_i32_1 = arith.constant 0 : i32
    return %c0_i32, %c0_i32_0 : i32, i32
  }
  func.func @transform_14(%arg0: i32) -> (i32, i32, i32) {
    %c0_i32 = arith.constant 0 : i32
    %c0_i32_0 = arith.constant 0 : i32
    %c0_i32_1 = arith.constant 0 : i32
    return %arg0, %c0_i32, %c0_i32_0 : i32, i32, i32
  }
}

</mosaic_0001>

<llo_original>
// kernel: tpu_custom_call.1
$region0: #{tpu_custom_call.1}
  #allocation0 [shape = 'u32[]', space=smem, size = 0x4, offset = 0x4, fixed_abs, tag = 'smem constant byte address 0x4 - core index']
  #allocation1 [shape = 'u32[144,128]{1,0:T(1,128)}', space=vmem, size = 0x12000, scoped, tag = 'internal scratch']
  %s0 = inlined_call_operand.hbm [shape: f32[2,8,128], index: 0, kind: input, shape index: {}]
  %s1 = inlined_call_operand.hbm [shape: f32[8,8], index: 1, kind: input, shape index: {}]
  %s2 = inlined_call_operand.hbm [shape: f32[128,384], index: 2, kind: input, shape index: {}]
  %s3 = inlined_call_operand.hbm [shape: f32[1,384], index: 3, kind: input, shape index: {}]
  %s4 = inlined_call_operand.hbm [shape: f32[128,128], index: 4, kind: input, shape index: {}]
  %s5 = inlined_call_operand.hbm [shape: f32[1,128], index: 5, kind: input, shape index: {}]
  %s6 = inlined_call_operand.vmem [shape: f32[8,128], index: 6, kind: input, shape index: {}]
  %s7 = inlined_call_operand.vmem [shape: f32[8,128], index: 7, kind: input, shape index: {}]
  %s8 = inlined_call_operand.hbm [shape: f32[128,256], index: 8, kind: input, shape index: {}]
  %s9 = inlined_call_operand.vmem [shape: f32[1,256], index: 9, kind: input, shape index: {}]
  %s10 = inlined_call_operand.hbm [shape: f32[256,128], index: 10, kind: input, shape index: {}]
  %s11 = inlined_call_operand.vmem [shape: f32[1,128], index: 11, kind: input, shape index: {}]
  %s12 = inlined_call_operand.vmem [shape: f32[8,128], index: 12, kind: input, shape index: {}]
  %s13 = inlined_call_operand.vmem [shape: f32[8,128], index: 13, kind: input, shape index: {}]
  %s14 = inlined_call_operand.hbm [shape: f32[2,8,128], index: 14, kind: output, shape index: {}]
  %s15 = sld [smem:[#allocation0]]
  $region98: #{tpu_custom_call.1} parent=0
    _
  %s17 = ssub.s32 1, %s15
  %s18 = scalar_select 0, %s17, %s15
  $region1: #{tpu_custom_call.1} parent=0
    #allocation2 [shape = 'u8[8192]{0}', space=vmem, size = 0x2000, scoped, tag = 'input window, operand 0, single buffered']
    #allocation3 [shape = 's32[1]{0}', space=sflag, size = 0x4, scoped, tag = 'scoped memory for tpu_custom_call.1']
    #allocation4 [shape = 's32[1]{0}', space=sflag, size = 0x4, scoped, tag = 'scoped memory for tpu_custom_call.1']
    #allocation5 [shape = 'u8[4096]{0}', space=vmem, size = 0x1000, scoped, tag = 'input window, operand 1, single buffered']
    #allocation6 [shape = 's32[1]{0}', space=sflag, size = 0x4, scoped, tag = 'scoped memory for tpu_custom_call.1']
    #allocation7 [shape = 'u8[196608]{0}', space=vmem, size = 0x30000, scoped, tag = 'input window, operand 2, single buffered']
    #allocation8 [shape = 'u8[1536]{0}', space=vmem, size = 0x800, scoped, tag = 'input window, operand 3, single buffered']
    #allocation9 [shape = 's32[1]{0}', space=sflag, size = 0x4, scoped, tag = 'scoped memory for tpu_custom_call.1']
    #allocation10 [shape = 'u8[65536]{0}', space=vmem, size = 0x10000, scoped, tag = 'input window, operand 4, single buffered']
    #allocation11 [shape = 'u8[512]{0}', space=vmem, size = 0x400, scoped, tag = 'input window, operand 5, single buffered']
    #allocation12 [shape = 's32[1]{0}', space=sflag, size = 0x4, scoped, tag = 'scoped memory for tpu_custom_call.1']
    #allocation13 [shape = 'u8[131072]{0}', space=vmem, size = 0x20000, scoped, tag = 'input window, operand 8, single buffered']
    #allocation14 [shape = 'u8[131072]{0}', space=vmem, size = 0x20000, scoped, tag = 'input window, operand 10, single buffered']
    #allocation15 [shape = 's32[1]{0}', space=sflag, size = 0x4, scoped, tag = 'scoped memory for tpu_custom_call.1']
    #allocation16 [shape = 'u8[8192]{0}', space=vmem, size = 0x2000, scoped, tag = 'output window, operand 0, single buffered']
    %19 = vsyncpa [#allocation3], 0
    %20 = vsyncpa [#allocation6], 0
    %21 = vsyncpa [#allocation9], 0
    %22 = vsyncpa [#allocation12], 0
    %23 = vsyncpa [#allocation15], 0
    %24 = vsyncpa [#allocation4], 0
    // Predicated region
    $region2: #{tpu_custom_call.1} parent=1 // pred_check
      _
    $region3: #{tpu_custom_call.1} parent=1 // pred_check_branch
      %26 = sbr.rel (0) target = $region5
    $region4: #{tpu_custom_call.1} parent=1 // pred_region
      %s28 = ssub.s32 256, 256
      %29 = vsyncadd [#allocation3], %s28
      %s30 = sshll.u32 [#allocation2], 4
      %s31 = int_to_ptr.vmem [resolvable:$true] %s30
      %36 = dma.hbm_to_vmem [thread:$0]  %s0, 256, %s31, [#allocation3], 128, 128, 8
    $region5: #{tpu_custom_call.1} parent=1 // pred_fallthru
      _
    // Predicated region
    $region6: #{tpu_custom_call.1} parent=1 // pred_check
      _
    $region7: #{tpu_custom_call.1} parent=1 // pred_check_branch
      %38 = sbr.rel (0) target = $region9
    $region8: #{tpu_custom_call.1} parent=1 // pred_region
      %s40 = ssub.s32 128, 128
      %41 = vsyncadd [#allocation6], %s40
      %s43 = sshll.u32 [#allocation5], 4
      %s44 = int_to_ptr.vmem [resolvable:$true] %s43
      %46 = dma.hbm_to_vmem [thread:$0]  %s1, 128, %s44, [#allocation6]
    $region9: #{tpu_custom_call.1} parent=1 // pred_fallthru
      _
    // Predicated region
    $region10: #{tpu_custom_call.1} parent=1 // pred_check
      _
    $region11: #{tpu_custom_call.1} parent=1 // pred_check_branch
      %48 = sbr.rel (0) target = $region13
    $region12: #{tpu_custom_call.1} parent=1 // pred_region
      %s50 = ssub.s32 6144, 6144
      %51 = vsyncadd [#allocation6], %s50
      %s52 = sshll.u32 [#allocation7], 4
      %s53 = int_to_ptr.vmem [resolvable:$true] %s52
      %58 = dma.hbm_to_vmem [thread:$0]  %s2, 6144, %s53, [#allocation6], 384, 384, 24
    $region13: #{tpu_custom_call.1} parent=1 // pred_fallthru
      _
    // Predicated region
    $region14: #{tpu_custom_call.1} parent=1 // pred_check
      _
    $region15: #{tpu_custom_call.1} parent=1 // pred_check_branch
      %60 = sbr.rel (0) target = $region17
    $region16: #{tpu_custom_call.1} parent=1 // pred_region
      %s62 = ssub.s32 48, 48
      %63 = vsyncadd [#allocation9], %s62
      %s65 = sshll.u32 [#allocation8], 4
      %s66 = int_to_ptr.vmem [resolvable:$true] %s65
      %68 = dma.hbm_to_vmem [thread:$0]  %s3, 48, %s66, [#allocation9]
    $region17: #{tpu_custom_call.1} parent=1 // pred_fallthru
      _
    // Predicated region
    $region18: #{tpu_custom_call.1} parent=1 // pred_check
      _
    $region19: #{tpu_custom_call.1} parent=1 // pred_check_branch
      %70 = sbr.rel (0) target = $region21
    $region20: #{tpu_custom_call.1} parent=1 // pred_region
      %s72 = ssub.s32 2048, 2048
      %73 = vsyncadd [#allocation9], %s72
      %s74 = sshll.u32 [#allocation10], 4
      %s75 = int_to_ptr.vmem [resolvable:$true] %s74
      %80 = dma.hbm_to_vmem [thread:$0]  %s4, 2048, %s75, [#allocation9], 128, 128, 8
    $region21: #{tpu_custom_call.1} parent=1 // pred_fallthru
      _
    // Predicated region
    $region22: #{tpu_custom_call.1} parent=1 // pred_check
      _
    $region23: #{tpu_custom_call.1} parent=1 // pred_check_branch
      %82 = sbr.rel (0) target = $region25
    $region24: #{tpu_custom_call.1} parent=1 // pred_region
      %s84 = ssub.s32 16, 16
      %85 = vsyncadd [#allocation12], %s84
      %s87 = sshll.u32 [#allocation11], 4
      %s88 = int_to_ptr.vmem [resolvable:$true] %s87
      %90 = dma.hbm_to_vmem [thread:$0]  %s5, 16, %s88, [#allocation12]
    $region25: #{tpu_custom_call.1} parent=1 // pred_fallthru
      _
    // Predicated region
    $region26: #{tpu_custom_call.1} parent=1 // pred_check
      _
    $region27: #{tpu_custom_call.1} parent=1 // pred_check_branch
      %92 = sbr.rel (0) target = $region29
    $region28: #{tpu_custom_call.1} parent=1 // pred_region
      _
    $region29: #{tpu_custom_call.1} parent=1 // pred_fallthru
      _
    // Predicated region
    $region30: #{tpu_custom_call.1} parent=1 // pred_check
      _
    $region31: #{tpu_custom_call.1} parent=1 // pred_check_branch
      %94 = sbr.rel (0) target = $region33
    $region32: #{tpu_custom_call.1} parent=1 // pred_region
      _
    $region33: #{tpu_custom_call.1} parent=1 // pred_fallthru
      _
    // Predicated region
    $region34: #{tpu_custom_call.1} parent=1 // pred_check
      _
    $region35: #{tpu_custom_call.1} parent=1 // pred_check_branch
      %96 = sbr.rel (0) target = $region37
    $region36: #{tpu_custom_call.1} parent=1 // pred_region
      %s98 = ssub.s32 4096, 4096
      %99 = vsyncadd [#allocation12], %s98
      %s100 = sshll.u32 [#allocation13], 4
      %s101 = int_to_ptr.vmem [resolvable:$true] %s100
      %106 = dma.hbm_to_vmem [thread:$0]  %s8, 4096, %s101, [#allocation12], 256, 256, 16
    $region37: #{tpu_custom_call.1} parent=1 // pred_fallthru
      _
    // Predicated region
    $region38: #{tpu_custom_call.1} parent=1 // pred_check
      _
    $region39: #{tpu_custom_call.1} parent=1 // pred_check_branch
      %108 = sbr.rel (0) target = $region41
    $region40: #{tpu_custom_call.1} parent=1 // pred_region
      _
    $region41: #{tpu_custom_call.1} parent=1 // pred_fallthru
      _
    // Predicated region
    $region42: #{tpu_custom_call.1} parent=1 // pred_check
      _
    $region43: #{tpu_custom_call.1} parent=1 // pred_check_branch
      %110 = sbr.rel (0) target = $region45
    $region44: #{tpu_custom_call.1} parent=1 // pred_region
      %s112 = ssub.s32 4096, 4096
      %113 = vsyncadd [#allocation15], %s112
      %s114 = sshll.u32 [#allocation14], 4
      %s115 = int_to_ptr.vmem [resolvable:$true] %s114
      %120 = dma.hbm_to_vmem [thread:$0]  %s10, 4096, %s115, [#allocation15], 128, 128, 8
    $region45: #{tpu_custom_call.1} parent=1 // pred_fallthru
      _
    // Predicated region
    $region46: #{tpu_custom_call.1} parent=1 // pred_check
      _
    $region47: #{tpu_custom_call.1} parent=1 // pred_check_branch
      %122 = sbr.rel (0) target = $region49
    $region48: #{tpu_custom_call.1} parent=1 // pred_region
      _
    $region49: #{tpu_custom_call.1} parent=1 // pred_fallthru
      _
    // Predicated region
    $region50: #{tpu_custom_call.1} parent=1 // pred_check
      _
    $region51: #{tpu_custom_call.1} parent=1 // pred_check_branch
      %124 = sbr.rel (0) target = $region53
    $region52: #{tpu_custom_call.1} parent=1 // pred_region
      _
    $region53: #{tpu_custom_call.1} parent=1 // pred_fallthru
      _
    // Predicated region
    $region54: #{tpu_custom_call.1} parent=1 // pred_check
      _
    $region55: #{tpu_custom_call.1} parent=1 // pred_check_branch
      %126 = sbr.rel (0) target = $region57
    $region56: #{tpu_custom_call.1} parent=1 // pred_region
      _
    $region57: #{tpu_custom_call.1} parent=1 // pred_fallthru
      _
    // Predicated region
    $region58: #{tpu_custom_call.1} parent=1 // pred_check
      _
    $region59: #{tpu_custom_call.1} parent=1 // pred_check_branch
      %128 = sbr.rel (0) target = $region61
    $region60: #{tpu_custom_call.1} parent=1 // pred_region
      %129 = dma.done [#allocation3], 256
    $region61: #{tpu_custom_call.1} parent=1 // pred_fallthru
      _
    // Predicated region
    $region62: #{tpu_custom_call.1} parent=1 // pred_check
      _
    $region63: #{tpu_custom_call.1} parent=1 // pred_check_branch
      %131 = sbr.rel (0) target = $region65
    $region64: #{tpu_custom_call.1} parent=1 // pred_region
      %132 = dma.done [#allocation6], 128
    $region65: #{tpu_custom_call.1} parent=1 // pred_fallthru
      _
    // Predicated region
    $region66: #{tpu_custom_call.1} parent=1 // pred_check
      _
    $region67: #{tpu_custom_call.1} parent=1 // pred_check_branch
      %134 = sbr.rel (0) target = $region69
    $region68: #{tpu_custom_call.1} parent=1 // pred_region
      %135 = dma.done [#allocation6], 6144
    $region69: #{tpu_custom_call.1} parent=1 // pred_fallthru
      _
    // Predicated region
    $region70: #{tpu_custom_call.1} parent=1 // pred_check
      _
    $region71: #{tpu_custom_call.1} parent=1 // pred_check_branch
      %137 = sbr.rel (0) target = $region73
    $region72: #{tpu_custom_call.1} parent=1 // pred_region
      %138 = dma.done [#allocation9], 48
    $region73: #{tpu_custom_call.1} parent=1 // pred_fallthru
      _
    // Predicated region
    $region74: #{tpu_custom_call.1} parent=1 // pred_check
      _
    $region75: #{tpu_custom_call.1} parent=1 // pred_check_branch
      %140 = sbr.rel (0) target = $region77
    $region76: #{tpu_custom_call.1} parent=1 // pred_region
      %141 = dma.done [#allocation9], 2048
    $region77: #{tpu_custom_call.1} parent=1 // pred_fallthru
      _
    // Predicated region
    $region78: #{tpu_custom_call.1} parent=1 // pred_check
      _
    $region79: #{tpu_custom_call.1} parent=1 // pred_check_branch
      %143 = sbr.rel (0) target = $region81
    $region80: #{tpu_custom_call.1} parent=1 // pred_region
      %144 = dma.done [#allocation12], 16
    $region81: #{tpu_custom_call.1} parent=1 // pred_fallthru
      _
    // Predicated region
    $region82: #{tpu_custom_call.1} parent=1 // pred_check
      _
    $region83: #{tpu_custom_call.1} parent=1 // pred_check_branch
      %146 = sbr.rel (0) target = $region85
    $region84: #{tpu_custom_call.1} parent=1 // pred_region
      %147 = dma.done [#allocation12], 4096
    $region85: #{tpu_custom_call.1} parent=1 // pred_fallthru
      _
    // Predicated region
    $region86: #{tpu_custom_call.1} parent=1 // pred_check
      _
    $region87: #{tpu_custom_call.1} parent=1 // pred_check_branch
      %149 = sbr.rel (0) target = $region89
    $region88: #{tpu_custom_call.1} parent=1 // pred_region
      %150 = dma.done [#allocation15], 4096
    $region89: #{tpu_custom_call.1} parent=1 // pred_fallthru
      _
    %v151 = vld [vmem:[#allocation2] sm:$0xff]
    %v152 = vld [vmem:[#allocation2 + $0x8] sm:$0xff]
    %v153 = vld [vmem:[#allocation5] sm:$0xff]
    %v154 = vld [vmem:[#allocation7] sm:$0xff]
    %v155 = vld [vmem:[#allocation7 + $0x8] sm:$0xff]
    %v156 = vld [vmem:[#allocation7 + $0x10] sm:$0xff]
    %v157 = vld [vmem:[#allocation7 + $0x18] sm:$0xff]
    %v158 = vld [vmem:[#allocation7 + $0x20] sm:$0xff]
    %v159 = vld [vmem:[#allocation7 + $0x28] sm:$0xff]
    %v160 = vld [vmem:[#allocation7 + $0x30] sm:$0xff]
    %v161 = vld [vmem:[#allocation7 + $0x38] sm:$0xff]
    %v162 = vld [vmem:[#allocation7 + $0x40] sm:$0xff]
    %v163 = vld [vmem:[#allocation7 + $0x48] sm:$0xff]
    %v164 = vld [vmem:[#allocation7 + $0x50] sm:$0xff]
    %v165 = vld [vmem:[#allocation7 + $0x58] sm:$0xff]
    %v166 = vld [vmem:[#allocation7 + $0x60] sm:$0xff]
    %v167 = vld [vmem:[#allocation7 + $0x68] sm:$0xff]
    %v168 = vld [vmem:[#allocation7 + $0x70] sm:$0xff]
    %v169 = vld [vmem:[#allocation7 + $0x78] sm:$0xff]
    %v170 = vld [vmem:[#allocation7 + $0x80] sm:$0xff]
    %v171 = vld [vmem:[#allocation7 + $0x88] sm:$0xff]
    %v172 = vld [vmem:[#allocation7 + $0x90] sm:$0xff]
    %v173 = vld [vmem:[#allocation7 + $0x98] sm:$0xff]
    %v174 = vld [vmem:[#allocation7 + $0xa0] sm:$0xff]
    %v175 = vld [vmem:[#allocation7 + $0xa8] sm:$0xff]
    %v176 = vld [vmem:[#allocation7 + $0xb0] sm:$0xff]
    %v177 = vld [vmem:[#allocation7 + $0xb8] sm:$0xff]
    %v178 = vld [vmem:[#allocation7 + $0xc0] sm:$0xff]
    %v179 = vld [vmem:[#allocation7 + $0xc8] sm:$0xff]
    %v180 = vld [vmem:[#allocation7 + $0xd0] sm:$0xff]
    %v181 = vld [vmem:[#allocation7 + $0xd8] sm:$0xff]
    %v182 = vld [vmem:[#allocation7 + $0xe0] sm:$0xff]
    %v183 = vld [vmem:[#allocation7 + $0xe8] sm:$0xff]
    %v184 = vld [vmem:[#allocation7 + $0xf0] sm:$0xff]
    %v185 = vld [vmem:[#allocation7 + $0xf8] sm:$0xff]
    %v186 = vld [vmem:[#allocation7 + $0x100] sm:$0xff]
    %v187 = vld [vmem:[#allocation7 + $0x108] sm:$0xff]
    %v188 = vld [vmem:[#allocation7 + $0x110] sm:$0xff]
    %v189 = vld [vmem:[#allocation7 + $0x118] sm:$0xff]
    %v190 = vld [vmem:[#allocation7 + $0x120] sm:$0xff]
    %v191 = vld [vmem:[#allocation7 + $0x128] sm:$0xff]
    %v192 = vld [vmem:[#allocation7 + $0x130] sm:$0xff]
    %v193 = vld [vmem:[#allocation7 + $0x138] sm:$0xff]
    %v194 = vld [vmem:[#allocation7 + $0x140] sm:$0xff]
    %v195 = vld [vmem:[#allocation7 + $0x148] sm:$0xff]
    %v196 = vld [vmem:[#allocation7 + $0x150] sm:$0xff]
    %v197 = vld [vmem:[#allocation7 + $0x158] sm:$0xff]
    %v198 = vld [vmem:[#allocation7 + $0x160] sm:$0xff]
    %v199 = vld [vmem:[#allocation7 + $0x168] sm:$0xff]
    %v200 = vld [vmem:[#allocation7 + $0x170] sm:$0xff]
    %v201 = vld [vmem:[#allocation7 + $0x178] sm:$0xff]
    %v202 = vld [vmem:[#allocation8] sm:$0x7]
    %v203 = vld [vmem:[#allocation10] sm:$0xff]
    %v204 = vld [vmem:[#allocation10 + $0x8] sm:$0xff]
    %v205 = vld [vmem:[#allocation10 + $0x10] sm:$0xff]
    %v206 = vld [vmem:[#allocation10 + $0x18] sm:$0xff]
    %v207 = vld [vmem:[#allocation10 + $0x20] sm:$0xff]
    %v208 = vld [vmem:[#allocation10 + $0x28] sm:$0xff]
    %v209 = vld [vmem:[#allocation10 + $0x30] sm:$0xff]
    %v210 = vld [vmem:[#allocation10 + $0x38] sm:$0xff]
    %v211 = vld [vmem:[#allocation10 + $0x40] sm:$0xff]
    %v212 = vld [vmem:[#allocation10 + $0x48] sm:$0xff]
    %v213 = vld [vmem:[#allocation10 + $0x50] sm:$0xff]
    %v214 = vld [vmem:[#allocation10 + $0x58] sm:$0xff]
    %v215 = vld [vmem:[#allocation10 + $0x60] sm:$0xff]
    %v216 = vld [vmem:[#allocation10 + $0x68] sm:$0xff]
    %v217 = vld [vmem:[#allocation10 + $0x70] sm:$0xff]
    %v218 = vld [vmem:[#allocation10 + $0x78] sm:$0xff]
    %v219 = vld [vmem:[#allocation11] sm:$0x1]
    %v220 = vld [vmem:[%s6] sm:$0xff]
    %v221 = vld [vmem:[%s7] sm:$0xff]
    %v222 = vld [vmem:[#allocation13] sm:$0xff]
    %v223 = vld [vmem:[#allocation13 + $0x8] sm:$0xff]
    %v224 = vld [vmem:[#allocation13 + $0x10] sm:$0xff]
    %v225 = vld [vmem:[#allocation13 + $0x18] sm:$0xff]
    %v226 = vld [vmem:[#allocation13 + $0x20] sm:$0xff]
    %v227 = vld [vmem:[#allocation13 + $0x28] sm:$0xff]
    %v228 = vld [vmem:[#allocation13 + $0x30] sm:$0xff]
    %v229 = vld [vmem:[#allocation13 + $0x38] sm:$0xff]
    %v230 = vld [vmem:[#allocation13 + $0x40] sm:$0xff]
    %v231 = vld [vmem:[#allocation13 + $0x48] sm:$0xff]
    %v232 = vld [vmem:[#allocation13 + $0x50] sm:$0xff]
    %v233 = vld [vmem:[#allocation13 + $0x58] sm:$0xff]
    %v234 = vld [vmem:[#allocation13 + $0x60] sm:$0xff]
    %v235 = vld [vmem:[#allocation13 + $0x68] sm:$0xff]
    %v236 = vld [vmem:[#allocation13 + $0x70] sm:$0xff]
    %v237 = vld [vmem:[#allocation13 + $0x78] sm:$0xff]
    %v238 = vld [vmem:[#allocation13 + $0x80] sm:$0xff]
    %v239 = vld [vmem:[#allocation13 + $0x88] sm:$0xff]
    %v240 = vld [vmem:[#allocation13 + $0x90] sm:$0xff]
    %v241 = vld [vmem:[#allocation13 + $0x98] sm:$0xff]
    %v242 = vld [vmem:[#allocation13 + $0xa0] sm:$0xff]
    %v243 = vld [vmem:[#allocation13 + $0xa8] sm:$0xff]
    %v244 = vld [vmem:[#allocation13 + $0xb0] sm:$0xff]
    %v245 = vld [vmem:[#allocation13 + $0xb8] sm:$0xff]
    %v246 = vld [vmem:[#allocation13 + $0xc0] sm:$0xff]
    %v247 = vld [vmem:[#allocation13 + $0xc8] sm:$0xff]
    %v248 = vld [vmem:[#allocation13 + $0xd0] sm:$0xff]
    %v249 = vld [vmem:[#allocation13 + $0xd8] sm:$0xff]
    %v250 = vld [vmem:[#allocation13 + $0xe0] sm:$0xff]
    %v251 = vld [vmem:[#allocation13 + $0xe8] sm:$0xff]
    %v252 = vld [vmem:[#allocation13 + $0xf0] sm:$0xff]
    %v253 = vld [vmem:[#allocation13 + $0xf8] sm:$0xff]
    %v254 = vld [vmem:[%s9] sm:$0x3]
    %v255 = vld [vmem:[#allocation14] sm:$0xff]
    %v256 = vld [vmem:[#allocation14 + $0x8] sm:$0xff]
    %v257 = vld [vmem:[#allocation14 + $0x10] sm:$0xff]
    %v258 = vld [vmem:[#allocation14 + $0x18] sm:$0xff]
    %v259 = vld [vmem:[#allocation14 + $0x20] sm:$0xff]
    %v260 = vld [vmem:[#allocation14 + $0x28] sm:$0xff]
    %v261 = vld [vmem:[#allocation14 + $0x30] sm:$0xff]
    %v262 = vld [vmem:[#allocation14 + $0x38] sm:$0xff]
    %v263 = vld [vmem:[#allocation14 + $0x40] sm:$0xff]
    %v264 = vld [vmem:[#allocation14 + $0x48] sm:$0xff]
    %v265 = vld [vmem:[#allocation14 + $0x50] sm:$0xff]
    %v266 = vld [vmem:[#allocation14 + $0x58] sm:$0xff]
    %v267 = vld [vmem:[#allocation14 + $0x60] sm:$0xff]
    %v268 = vld [vmem:[#allocation14 + $0x68] sm:$0xff]
    %v269 = vld [vmem:[#allocation14 + $0x70] sm:$0xff]
    %v270 = vld [vmem:[#allocation14 + $0x78] sm:$0xff]
    %v271 = vld [vmem:[#allocation14 + $0x80] sm:$0xff]
    %v272 = vld [vmem:[#allocation14 + $0x88] sm:$0xff]
    %v273 = vld [vmem:[#allocation14 + $0x90] sm:$0xff]
    %v274 = vld [vmem:[#allocation14 + $0x98] sm:$0xff]
    %v275 = vld [vmem:[#allocation14 + $0xa0] sm:$0xff]
    %v276 = vld [vmem:[#allocation14 + $0xa8] sm:$0xff]
    %v277 = vld [vmem:[#allocation14 + $0xb0] sm:$0xff]
    %v278 = vld [vmem:[#allocation14 + $0xb8] sm:$0xff]
    %v279 = vld [vmem:[#allocation14 + $0xc0] sm:$0xff]
    %v280 = vld [vmem:[#allocation14 + $0xc8] sm:$0xff]
    %v281 = vld [vmem:[#allocation14 + $0xd0] sm:$0xff]
    %v282 = vld [vmem:[#allocation14 + $0xd8] sm:$0xff]
    %v283 = vld [vmem:[#allocation14 + $0xe0] sm:$0xff]
    %v284 = vld [vmem:[#allocation14 + $0xe8] sm:$0xff]
    %v285 = vld [vmem:[#allocation14 + $0xf0] sm:$0xff]
    %v286 = vld [vmem:[#allocation14 + $0xf8] sm:$0xff]
    %v287 = vld [vmem:[%s11] sm:$0x1]
    %v288 = vld [vmem:[%s12] sm:$0xff]
    %v289 = vld [vmem:[%s13] sm:$0xff]
    %v291 = vlaneseq
    %v292 = vshrl.u32 %v291, 7
    %v293 = vsub.s32 0, %v292
    %v294 = vrot.slane %v202, %v293
    %v295 = vlaneseq
    %v296 = vshrl.u32 %v295, 7
    %v297 = vsub.s32 1, %v296
    %v298 = vrot.slane %v202, %v297
    %v299 = vlaneseq
    %v300 = vshrl.u32 %v299, 7
    %v301 = vsub.s32 2, %v300
    %v302 = vrot.slane %v202, %v301
    %306 = vmatprep.subr.mxu0 %v155
    %307 = vmatpush1.msra.mxu0 %v154
    %308 = vmatprep.subr.mxu0 %v158
    %309 = vmatpush1.msra.mxu0 %v157
    %310 = vmatprep.subr.mxu0 %v161
    %311 = vmatpush1.msra.mxu0 %v160
    %312 = vmatprep.subr.mxu0 %v164
    %313 = vmatpush1.msra.mxu0 %v163
    %314 = vmatprep.subr.mxu0 %v167
    %315 = vmatpush1.msra.mxu0 %v166
    %316 = vmatprep.subr.mxu0 %v170
    %317 = vmatpush1.msra.mxu0 %v169
    %318 = vmatprep.subr.mxu0 %v173
    %319 = vmatpush1.msra.mxu0 %v172
    %320 = vmatprep.subr.mxu0 %v176
    %321 = vmatpush1.msra.mxu0 %v175
    %322 = vmatprep.subr.mxu0 %v179
    %323 = vmatpush1.msra.mxu0 %v178
    %324 = vmatprep.subr.mxu0 %v182
    %325 = vmatpush1.msra.mxu0 %v181
    %326 = vmatprep.subr.mxu0 %v185
    %327 = vmatpush1.msra.mxu0 %v184
    %328 = vmatprep.subr.mxu0 %v188
    %329 = vmatpush1.msra.mxu0 %v187
    %330 = vmatprep.subr.mxu0 %v191
    %331 = vmatpush1.msra.mxu0 %v190
    %332 = vmatprep.subr.mxu0 %v194
    %333 = vmatpush1.msra.mxu0 %v193
    %334 = vmatprep.subr.mxu0 %v197
    %335 = vmatpush1.msra.mxu0 %v196
    %336 = vmatprep.subr.mxu0 %v200
    %337 = vmatpush1.msra.mxu0 %v199
    %338 = vmatprep.subr.mxu0 0.0
    %339 = vmatpush1.msra.mxu0 0.0
    %340 = vmatprep.subr.mxu0 0.0
    %341 = vmatpush1.msra.mxu0 0.0
    %342 = vmatprep.subr.mxu0 0.0
    %343 = vmatpush1.msra.mxu0 0.0
    %344 = vmatprep.subr.mxu0 0.0
    %345 = vmatpush1.msra.mxu0 0.0
    %346 = vmatprep.subr.mxu0 0.0
    %347 = vmatpush1.msra.mxu0 0.0
    %348 = vmatprep.subr.mxu0 0.0
    %349 = vmatpush1.msra.mxu0 0.0
    %350 = vmatprep.subr.mxu0 0.0
    %351 = vmatpush1.msra.mxu0 0.0
    %352 = vmatprep.subr.mxu0 0.0
    %353 = vmatpush1.msra.mxu0 0.0
    %354 = vmatprep.subr.mxu0 0.0
    %355 = vmatpush1.msra.mxu0 0.0
    %356 = vmatprep.subr.mxu0 0.0
    %357 = vmatpush1.msra.mxu0 0.0
    %358 = vmatprep.subr.mxu0 0.0
    %359 = vmatpush1.msra.mxu0 0.0
    %360 = vmatprep.subr.mxu0 0.0
    %361 = vmatpush1.msra.mxu0 0.0
    %362 = vmatprep.subr.mxu0 0.0
    %363 = vmatpush1.msra.mxu0 0.0
    %364 = vmatprep.subr.mxu0 0.0
    %365 = vmatpush1.msra.mxu0 0.0
    %366 = vmatprep.subr.mxu0 0.0
    %367 = vmatpush1.msra.mxu0 0.0
    %368 = vmatprep.subr.mxu0 0.0
    %369 = vmatpush1.msra.mxu0 0.0
    %370 = vmatprep.mubr.f32.mxu0 0.0
    %371 = vmatmul.mubr.f32.gmra.mrb[0].mxu0 %v151
    %v372 = vpop.f32.mrb[0].mxu0
    %v373 = vadd.f32 %v294, %v372
    %v374 = vpop.f32.mrb[0].mxu0
    %v375 = vadd.f32 %v298, %v374
    %376 = vmatprep.mubr.f32.mxu0 0.0
    %377 = vmatmul.mubr.f32.gmra.mrb[0].mxu0 %v152
    %v378 = vpop.f32.mrb[0].mxu0
    %v379 = vadd.f32 %v294, %v378
    %v380 = vpop.f32.mrb[0].mxu0
    %v381 = vadd.f32 %v298, %v380
    %382 = vdwg.mxu0
    %383 = vmatprep.subr.mxu0 0.0
    %384 = vmatpush1.msra.mxu0 %v156
    %385 = vmatprep.subr.mxu0 0.0
    %386 = vmatpush1.msra.mxu0 %v159
    %387 = vmatprep.subr.mxu0 0.0
    %388 = vmatpush1.msra.mxu0 %v162
    %389 = vmatprep.subr.mxu0 0.0
    %390 = vmatpush1.msra.mxu0 %v165
    %391 = vmatprep.subr.mxu0 0.0
    %392 = vmatpush1.msra.mxu0 %v168
    %393 = vmatprep.subr.mxu0 0.0
    %394 = vmatpush1.msra.mxu0 %v171
    %395 = vmatprep.subr.mxu0 0.0
    %396 = vmatpush1.msra.mxu0 %v174
    %397 = vmatprep.subr.mxu0 0.0
    %398 = vmatpush1.msra.mxu0 %v177
    %399 = vmatprep.subr.mxu0 0.0
    %400 = vmatpush1.msra.mxu0 %v180
    %401 = vmatprep.subr.mxu0 0.0
    %402 = vmatpush1.msra.mxu0 %v183
    %403 = vmatprep.subr.mxu0 0.0
    %404 = vmatpush1.msra.mxu0 %v186
    %405 = vmatprep.subr.mxu0 0.0
    %406 = vmatpush1.msra.mxu0 %v189
    %407 = vmatprep.subr.mxu0 0.0
    %408 = vmatpush1.msra.mxu0 %v192
    %409 = vmatprep.subr.mxu0 0.0
    %410 = vmatpush1.msra.mxu0 %v195
    %411 = vmatprep.subr.mxu0 0.0
    %412 = vmatpush1.msra.mxu0 %v198
    %413 = vmatprep.subr.mxu0 0.0
    %414 = vmatpush1.msra.mxu0 %v201
    %415 = vmatprep.subr.mxu0 0.0
    %416 = vmatpush1.msra.mxu0 0.0
    %417 = vmatprep.subr.mxu0 0.0
    %418 = vmatpush1.msra.mxu0 0.0
    %419 = vmatprep.subr.mxu0 0.0
    %420 = vmatpush1.msra.mxu0 0.0
    %421 = vmatprep.subr.mxu0 0.0
    %422 = vmatpush1.msra.mxu0 0.0
    %423 = vmatprep.subr.mxu0 0.0
    %424 = vmatpush1.msra.mxu0 0.0
    %425 = vmatprep.subr.mxu0 0.0
    %426 = vmatpush1.msra.mxu0 0.0
    %427 = vmatprep.subr.mxu0 0.0
    %428 = vmatpush1.msra.mxu0 0.0
    %429 = vmatprep.subr.mxu0 0.0
    %430 = vmatpush1.msra.mxu0 0.0
    %431 = vmatprep.subr.mxu0 0.0
    %432 = vmatpush1.msra.mxu0 0.0
    %433 = vmatprep.subr.mxu0 0.0
    %434 = vmatpush1.msra.mxu0 0.0
    %435 = vmatprep.subr.mxu0 0.0
    %436 = vmatpush1.msra.mxu0 0.0
    %437 = vmatprep.subr.mxu0 0.0
    %438 = vmatpush1.msra.mxu0 0.0
    %439 = vmatprep.subr.mxu0 0.0
    %440 = vmatpush1.msra.mxu0 0.0
    %441 = vmatprep.subr.mxu0 0.0
    %442 = vmatpush1.msra.mxu0 0.0
    %443 = vmatprep.subr.mxu0 0.0
    %444 = vmatpush1.msra.mxu0 0.0
    %445 = vmatprep.subr.mxu0 0.0
    %446 = vmatpush1.msra.mxu0 0.0
    %447 = vmatprep.mubr.f32.mxu0 0.0
    %448 = vmatmul.mubr.f32.gmra.mrb[0].mxu0 %v151
    %v449 = vpop.f32.mrb[0].mxu0
    %v450 = vadd.f32 %v302, %v449
    %v451 = vpop.f32.mrb[0].mxu0
    %452 = vmatprep.mubr.f32.mxu0 0.0
    %453 = vmatmul.mubr.f32.gmra.mrb[0].mxu0 %v152
    %v454 = vpop.f32.mrb[0].mxu0
    %v455 = vadd.f32 %v302, %v454
    %v456 = vpop.f32.mrb[0].mxu0
    %457 = vdwg.mxu0
    %vm458 = vcmask 261120
    %v460 = vsel %vm458, %v373, 0
    %v463 = vsel %vm458, %v375, 0
    %465 = vmatprep.subr.mxu0 0.0
    %466 = vmatpush1.xpose.msra.mxu0 %v463
    %467 = vmatprep.subr.mxu0 0.0
    %468 = vmatpush1.xpose.msra.mxu0 0.0
    %469 = vmatprep.subr.mxu0 0.0
    %470 = vmatpush1.xpose.msra.mxu0 0.0
    %471 = vmatprep.subr.mxu0 0.0
    %472 = vmatpush1.xpose.msra.mxu0 0.0
    %473 = vmatprep.subr.mxu0 0.0
    %474 = vmatpush1.xpose.msra.mxu0 0.0
    %475 = vmatprep.subr.mxu0 0.0
    %476 = vmatpush1.xpose.msra.mxu0 0.0
    %477 = vmatprep.subr.mxu0 0.0
    %478 = vmatpush1.xpose.msra.mxu0 0.0
    %479 = vmatprep.subr.mxu0 0.0
    %480 = vmatpush1.xpose.msra.mxu0 0.0
    %481 = vmatprep.subr.mxu0 0.0
    %482 = vmatpush1.xpose.msra.mxu0 0.0
    %483 = vmatprep.subr.mxu0 0.0
    %484 = vmatpush1.xpose.msra.mxu0 0.0
    %485 = vmatprep.subr.mxu0 0.0
    %486 = vmatpush1.xpose.msra.mxu0 0.0
    %487 = vmatprep.subr.mxu0 0.0
    %488 = vmatpush1.xpose.msra.mxu0 0.0
    %489 = vmatprep.subr.mxu0 0.0
    %490 = vmatpush1.xpose.msra.mxu0 0.0
    %491 = vmatprep.subr.mxu0 0.0
    %492 = vmatpush1.xpose.msra.mxu0 0.0
    %493 = vmatprep.subr.mxu0 0.0
    %494 = vmatpush1.xpose.msra.mxu0 0.0
    %495 = vmatprep.subr.mxu0 0.0
    %496 = vmatpush1.xpose.msra.mxu0 0.0
    %497 = vmatprep.subr.mxu0 0.0
    %498 = vmatpush1.xpose.msra.mxu0 0.0
    %499 = vmatprep.subr.mxu0 0.0
    %500 = vmatpush1.xpose.msra.mxu0 0.0
    %501 = vmatprep.subr.mxu0 0.0
    %502 = vmatpush1.xpose.msra.mxu0 0.0
    %503 = vmatprep.subr.mxu0 0.0
    %504 = vmatpush1.xpose.msra.mxu0 0.0
    %505 = vmatprep.subr.mxu0 0.0
    %506 = vmatpush1.xpose.msra.mxu0 0.0
    %507 = vmatprep.subr.mxu0 0.0
    %508 = vmatpush1.xpose.msra.mxu0 0.0
    %509 = vmatprep.subr.mxu0 0.0
    %510 = vmatpush1.xpose.msra.mxu0 0.0
    %511 = vmatprep.subr.mxu0 0.0
    %512 = vmatpush1.xpose.msra.mxu0 0.0
    %513 = vmatprep.subr.mxu0 0.0
    %514 = vmatpush1.xpose.msra.mxu0 0.0
    %515 = vmatprep.subr.mxu0 0.0
    %516 = vmatpush1.xpose.msra.mxu0 0.0
    %517 = vmatprep.subr.mxu0 0.0
    %518 = vmatpush1.xpose.msra.mxu0 0.0
    %519 = vmatprep.subr.mxu0 0.0
    %520 = vmatpush1.xpose.msra.mxu0 0.0
    %521 = vmatprep.subr.mxu0 0.0
    %522 = vmatpush1.xpose.msra.mxu0 0.0
    %523 = vmatprep.subr.mxu0 0.0
    %524 = vmatpush1.xpose.msra.mxu0 0.0
    %525 = vmatprep.subr.mxu0 0.0
    %526 = vmatpush1.xpose.msra.mxu0 0.0
    %527 = vmatprep.subr.mxu0 0.0
    %528 = vmatpush1.xpose.msra.mxu0 0.0
    %529 = vmatprep.mubr.f32.mxu0 0.0
    %530 = vmatmul.mubr.f32.gmra.mrb[0].mxu0 %v460
    %v531 = vpop.f32.mrb[0].mxu0
    %v532 = vadd.f32 0.0, %v531
    %v533 = vpop.f32.mrb[0].mxu0
    %534 = vdwg.mxu0
    %v535 = vmul.f32 %v532, 0.17677669
    %v536 = vadd.f32 %v535, %v153
    %vm537 = vcmask 64512
    %v538 = vsel %vm537, %v536, -inf
    %539 = vmax.xlane.f32.xlu0 %v538
    %v540 = vpop.xlane.xlu0 %539
    %v541 = vsub.f32 %v536, %v540
    %v542 = vmul.f32 %v541, 1.442695
    %v543 = vpow.pop %v542
    %v544 = vsel %vm537, %v543, 0.0
    %545 = vadd.xlane.f32.xlu0 %v544
    %v546 = vpop.xlane.xlu0 %545
    %v548 = vsel %vm537, %v543, 0
    %550 = vmatprep.subr.mxu0 0.0
    %551 = vmatpush1.msra.mxu0 %v450
    %552 = vmatprep.subr.mxu0 0.0
    %553 = vmatpush1.msra.mxu0 0.0
    %554 = vmatprep.subr.mxu0 0.0
    %555 = vmatpush1.msra.mxu0 0.0
    %556 = vmatprep.subr.mxu0 0.0
    %557 = vmatpush1.msra.mxu0 0.0
    %558 = vmatprep.subr.mxu0 0.0
    %559 = vmatpush1.msra.mxu0 0.0
    %560 = vmatprep.subr.mxu0 0.0
    %561 = vmatpush1.msra.mxu0 0.0
    %562 = vmatprep.subr.mxu0 0.0
    %563 = vmatpush1.msra.mxu0 0.0
    %564 = vmatprep.subr.mxu0 0.0
    %565 = vmatpush1.msra.mxu0 0.0
    %566 = vmatprep.subr.mxu0 0.0
    %567 = vmatpush1.msra.mxu0 0.0
    %568 = vmatprep.subr.mxu0 0.0
    %569 = vmatpush1.msra.mxu0 0.0
    %570 = vmatprep.subr.mxu0 0.0
    %571 = vmatpush1.msra.mxu0 0.0
    %572 = vmatprep.subr.mxu0 0.0
    %573 = vmatpush1.msra.mxu0 0.0
    %574 = vmatprep.subr.mxu0 0.0
    %575 = vmatpush1.msra.mxu0 0.0
    %576 = vmatprep.subr.mxu0 0.0
    %577 = vmatpush1.msra.mxu0 0.0
    %578 = vmatprep.subr.mxu0 0.0
    %579 = vmatpush1.msra.mxu0 0.0
    %580 = vmatprep.subr.mxu0 0.0
    %581 = vmatpush1.msra.mxu0 0.0
    %582 = vmatprep.subr.mxu0 0.0
    %583 = vmatpush1.msra.mxu0 0.0
    %584 = vmatprep.subr.mxu0 0.0
    %585 = vmatpush1.msra.mxu0 0.0
    %586 = vmatprep.subr.mxu0 0.0
    %587 = vmatpush1.msra.mxu0 0.0
    %588 = vmatprep.subr.mxu0 0.0
    %589 = vmatpush1.msra.mxu0 0.0
    %590 = vmatprep.subr.mxu0 0.0
    %591 = vmatpush1.msra.mxu0 0.0
    %592 = vmatprep.subr.mxu0 0.0
    %593 = vmatpush1.msra.mxu0 0.0
    %594 = vmatprep.subr.mxu0 0.0
    %595 = vmatpush1.msra.mxu0 0.0
    %596 = vmatprep.subr.mxu0 0.0
    %597 = vmatpush1.msra.mxu0 0.0
    %598 = vmatprep.subr.mxu0 0.0
    %599 = vmatpush1.msra.mxu0 0.0
    %600 = vmatprep.subr.mxu0 0.0
    %601 = vmatpush1.msra.mxu0 0.0
    %602 = vmatprep.subr.mxu0 0.0
    %603 = vmatpush1.msra.mxu0 0.0
    %604 = vmatprep.subr.mxu0 0.0
    %605 = vmatpush1.msra.mxu0 0.0
    %606 = vmatprep.subr.mxu0 0.0
    %607 = vmatpush1.msra.mxu0 0.0
    %608 = vmatprep.subr.mxu0 0.0
    %609 = vmatpush1.msra.mxu0 0.0
    %610 = vmatprep.subr.mxu0 0.0
    %611 = vmatpush1.msra.mxu0 0.0
    %612 = vmatprep.subr.mxu0 0.0
    %613 = vmatpush1.msra.mxu0 0.0
    %614 = vmatprep.mubr.f32.mxu0 0.0
    %615 = vmatmul.mubr.f32.gmra.mrb[0].mxu0 %v548
    %v616 = vpop.f32.mrb[0].mxu0
    %v617 = vadd.f32 0.0, %v616
    %v618 = vpop.f32.mrb[0].mxu0
    %619 = vdwg.mxu0
    %v620 = vrcp.pop %v546
    %v621 = vmul.f32 %v617, %v620
    %622 = vrot.lane.b32.xlu0 %v373, 96
    %v623 = vpop.permute.xlu0 %622
    %624 = vrot.lane.b32.xlu0 %v375, 96
    %v625 = vpop.permute.xlu0 %624
    %v626 = vsel %vm458, %v623, 0
    %v628 = vsel %vm458, %v625, 0
    %630 = vmatprep.subr.mxu0 0.0
    %631 = vmatpush1.xpose.msra.mxu0 %v628
    %632 = vmatprep.subr.mxu0 0.0
    %633 = vmatpush1.xpose.msra.mxu0 0.0
    %634 = vmatprep.subr.mxu0 0.0
    %635 = vmatpush1.xpose.msra.mxu0 0.0
    %636 = vmatprep.subr.mxu0 0.0
    %637 = vmatpush1.xpose.msra.mxu0 0.0
    %638 = vmatprep.subr.mxu0 0.0
    %639 = vmatpush1.xpose.msra.mxu0 0.0
    %640 = vmatprep.subr.mxu0 0.0
    %641 = vmatpush1.xpose.msra.mxu0 0.0
    %642 = vmatprep.subr.mxu0 0.0
    %643 = vmatpush1.xpose.msra.mxu0 0.0
    %644 = vmatprep.subr.mxu0 0.0
    %645 = vmatpush1.xpose.msra.mxu0 0.0
    %646 = vmatprep.subr.mxu0 0.0
    %647 = vmatpush1.xpose.msra.mxu0 0.0
    %648 = vmatprep.subr.mxu0 0.0
    %649 = vmatpush1.xpose.msra.mxu0 0.0
    %650 = vmatprep.subr.mxu0 0.0
    %651 = vmatpush1.xpose.msra.mxu0 0.0
    %652 = vmatprep.subr.mxu0 0.0
    %653 = vmatpush1.xpose.msra.mxu0 0.0
    %654 = vmatprep.subr.mxu0 0.0
    %655 = vmatpush1.xpose.msra.mxu0 0.0
    %656 = vmatprep.subr.mxu0 0.0
    %657 = vmatpush1.xpose.msra.mxu0 0.0
    %658 = vmatprep.subr.mxu0 0.0
    %659 = vmatpush1.xpose.msra.mxu0 0.0
    %660 = vmatprep.subr.mxu0 0.0
    %661 = vmatpush1.xpose.msra.mxu0 0.0
    %662 = vmatprep.subr.mxu0 0.0
    %663 = vmatpush1.xpose.msra.mxu0 0.0
    %664 = vmatprep.subr.mxu0 0.0
    %665 = vmatpush1.xpose.msra.mxu0 0.0
    %666 = vmatprep.subr.mxu0 0.0
    %667 = vmatpush1.xpose.msra.mxu0 0.0
    %668 = vmatprep.subr.mxu0 0.0
    %669 = vmatpush1.xpose.msra.mxu0 0.0
    %670 = vmatprep.subr.mxu0 0.0
    %671 = vmatpush1.xpose.msra.mxu0 0.0
    %672 = vmatprep.subr.mxu0 0.0
    %673 = vmatpush1.xpose.msra.mxu0 0.0
    %674 = vmatprep.subr.mxu0 0.0
    %675 = vmatpush1.xpose.msra.mxu0 0.0
    %676 = vmatprep.subr.mxu0 0.0
    %677 = vmatpush1.xpose.msra.mxu0 0.0
    %678 = vmatprep.subr.mxu0 0.0
    %679 = vmatpush1.xpose.msra.mxu0 0.0
    %680 = vmatprep.subr.mxu0 0.0
    %681 = vmatpush1.xpose.msra.mxu0 0.0
    %682 = vmatprep.subr.mxu0 0.0
    %683 = vmatpush1.xpose.msra.mxu0 0.0
    %684 = vmatprep.subr.mxu0 0.0
    %685 = vmatpush1.xpose.msra.mxu0 0.0
    %686 = vmatprep.subr.mxu0 0.0
    %687 = vmatpush1.xpose.msra.mxu0 0.0
    %688 = vmatprep.subr.mxu0 0.0
    %689 = vmatpush1.xpose.msra.mxu0 0.0
    %690 = vmatprep.subr.mxu0 0.0
    %691 = vmatpush1.xpose.msra.mxu0 0.0
    %692 = vmatprep.subr.mxu0 0.0
    %693 = vmatpush1.xpose.msra.mxu0 0.0
    %694 = vmatprep.mubr.f32.mxu0 0.0
    %695 = vmatmul.mubr.f32.gmra.mrb[0].mxu0 %v626
    %v696 = vpop.f32.mrb[0].mxu0
    %v697 = vadd.f32 0.0, %v696
    %v698 = vpop.f32.mrb[0].mxu0
    %699 = vdwg.mxu0
    %v700 = vmul.f32 %v697, 0.17677669
    %v701 = vadd.f32 %v700, %v153
    %v702 = vsel %vm537, %v701, -inf
    %703 = vmax.xlane.f32.xlu0 %v702
    %v704 = vpop.xlane.xlu0 %703
    %v705 = vsub.f32 %v701, %v704
    %v706 = vmul.f32 %v705, 1.442695
    %v707 = vpow.pop %v706
    %v708 = vsel %vm537, %v707, 0.0
    %709 = vadd.xlane.f32.xlu0 %v708
    %v710 = vpop.xlane.xlu0 %709
    %712 = vrot.lane.b32.xlu0 %v450, 96
    %v713 = vpop.permute.xlu0 %712
    %v716 = vsel %vm537, %v707, 0
    %718 = vmatprep.subr.mxu0 0.0
    %719 = vmatpush1.msra.mxu0 %v713
    %720 = vmatprep.subr.mxu0 0.0
    %721 = vmatpush1.msra.mxu0 0.0
    %722 = vmatprep.subr.mxu0 0.0
    %723 = vmatpush1.msra.mxu0 0.0
    %724 = vmatprep.subr.mxu0 0.0
    %725 = vmatpush1.msra.mxu0 0.0
    %726 = vmatprep.subr.mxu0 0.0
    %727 = vmatpush1.msra.mxu0 0.0
    %728 = vmatprep.subr.mxu0 0.0
    %729 = vmatpush1.msra.mxu0 0.0
    %730 = vmatprep.subr.mxu0 0.0
    %731 = vmatpush1.msra.mxu0 0.0
    %732 = vmatprep.subr.mxu0 0.0
    %733 = vmatpush1.msra.mxu0 0.0
    %734 = vmatprep.subr.mxu0 0.0
    %735 = vmatpush1.msra.mxu0 0.0
    %736 = vmatprep.subr.mxu0 0.0
    %737 = vmatpush1.msra.mxu0 0.0
    %738 = vmatprep.subr.mxu0 0.0
    %739 = vmatpush1.msra.mxu0 0.0
    %740 = vmatprep.subr.mxu0 0.0
    %741 = vmatpush1.msra.mxu0 0.0
    %742 = vmatprep.subr.mxu0 0.0
    %743 = vmatpush1.msra.mxu0 0.0
    %744 = vmatprep.subr.mxu0 0.0
    %745 = vmatpush1.msra.mxu0 0.0
    %746 = vmatprep.subr.mxu0 0.0
    %747 = vmatpush1.msra.mxu0 0.0
    %748 = vmatprep.subr.mxu0 0.0
    %749 = vmatpush1.msra.mxu0 0.0
    %750 = vmatprep.subr.mxu0 0.0
    %751 = vmatpush1.msra.mxu0 0.0
    %752 = vmatprep.subr.mxu0 0.0
    %753 = vmatpush1.msra.mxu0 0.0
    %754 = vmatprep.subr.mxu0 0.0
    %755 = vmatpush1.msra.mxu0 0.0
    %756 = vmatprep.subr.mxu0 0.0
    %757 = vmatpush1.msra.mxu0 0.0
    %758 = vmatprep.subr.mxu0 0.0
    %759 = vmatpush1.msra.mxu0 0.0
    %760 = vmatprep.subr.mxu0 0.0
    %761 = vmatpush1.msra.mxu0 0.0
    %762 = vmatprep.subr.mxu0 0.0
    %763 = vmatpush1.msra.mxu0 0.0
    %764 = vmatprep.subr.mxu0 0.0
    %765 = vmatpush1.msra.mxu0 0.0
    %766 = vmatprep.subr.mxu0 0.0
    %767 = vmatpush1.msra.mxu0 0.0
    %768 = vmatprep.subr.mxu0 0.0
    %769 = vmatpush1.msra.mxu0 0.0
    %770 = vmatprep.subr.mxu0 0.0
    %771 = vmatpush1.msra.mxu0 0.0
    %772 = vmatprep.subr.mxu0 0.0
    %773 = vmatpush1.msra.mxu0 0.0
    %774 = vmatprep.subr.mxu0 0.0
    %775 = vmatpush1.msra.mxu0 0.0
    %776 = vmatprep.subr.mxu0 0.0
    %777 = vmatpush1.msra.mxu0 0.0
    %778 = vmatprep.subr.mxu0 0.0
    %779 = vmatpush1.msra.mxu0 0.0
    %780 = vmatprep.subr.mxu0 0.0
    %781 = vmatpush1.msra.mxu0 0.0
    %782 = vmatprep.mubr.f32.mxu0 0.0
    %783 = vmatmul.mubr.f32.gmra.mrb[0].mxu0 %v716
    %v784 = vpop.f32.mrb[0].mxu0
    %v785 = vadd.f32 0.0, %v784
    %v786 = vpop.f32.mrb[0].mxu0
    %787 = vdwg.mxu0
    %v788 = vrcp.pop %v710
    %v789 = vmul.f32 %v785, %v788
    %v791 = vsel %vm458, %v789, 0
    %793 = vmatprep.subr.mxu0 0.0
    %794 = vmatpush1.msra.mxu0 %v207
    %795 = vmatprep.subr.mxu0 0.0
    %796 = vmatpush1.msra.mxu0 %v208
    %797 = vmatprep.subr.mxu0 0.0
    %798 = vmatpush1.msra.mxu0 %v209
    %799 = vmatprep.subr.mxu0 0.0
    %800 = vmatpush1.msra.mxu0 %v210
    %801 = vmatprep.subr.mxu0 0.0
    %802 = vmatpush1.msra.mxu0 0.0
    %803 = vmatprep.subr.mxu0 0.0
    %804 = vmatpush1.msra.mxu0 0.0
    %805 = vmatprep.subr.mxu0 0.0
    %806 = vmatpush1.msra.mxu0 0.0
    %807 = vmatprep.subr.mxu0 0.0
    %808 = vmatpush1.msra.mxu0 0.0
    %809 = vmatprep.subr.mxu0 0.0
    %810 = vmatpush1.msra.mxu0 0.0
    %811 = vmatprep.subr.mxu0 0.0
    %812 = vmatpush1.msra.mxu0 0.0
    %813 = vmatprep.subr.mxu0 0.0
    %814 = vmatpush1.msra.mxu0 0.0
    %815 = vmatprep.subr.mxu0 0.0
    %816 = vmatpush1.msra.mxu0 0.0
    %817 = vmatprep.subr.mxu0 0.0
    %818 = vmatpush1.msra.mxu0 0.0
    %819 = vmatprep.subr.mxu0 0.0
    %820 = vmatpush1.msra.mxu0 0.0
    %821 = vmatprep.subr.mxu0 0.0
    %822 = vmatpush1.msra.mxu0 0.0
    %823 = vmatprep.subr.mxu0 0.0
    %824 = vmatpush1.msra.mxu0 0.0
    %825 = vmatprep.subr.mxu0 0.0
    %826 = vmatpush1.msra.mxu0 0.0
    %827 = vmatprep.subr.mxu0 0.0
    %828 = vmatpush1.msra.mxu0 0.0
    %829 = vmatprep.subr.mxu0 0.0
    %830 = vmatpush1.msra.mxu0 0.0
    %831 = vmatprep.subr.mxu0 0.0
    %832 = vmatpush1.msra.mxu0 0.0
    %833 = vmatprep.subr.mxu0 0.0
    %834 = vmatpush1.msra.mxu0 0.0
    %835 = vmatprep.subr.mxu0 0.0
    %836 = vmatpush1.msra.mxu0 0.0
    %837 = vmatprep.subr.mxu0 0.0
    %838 = vmatpush1.msra.mxu0 0.0
    %839 = vmatprep.subr.mxu0 0.0
    %840 = vmatpush1.msra.mxu0 0.0
    %841 = vmatprep.subr.mxu0 0.0
    %842 = vmatpush1.msra.mxu0 0.0
    %843 = vmatprep.subr.mxu0 0.0
    %844 = vmatpush1.msra.mxu0 0.0
    %845 = vmatprep.subr.mxu0 0.0
    %846 = vmatpush1.msra.mxu0 0.0
    %847 = vmatprep.subr.mxu0 0.0
    %848 = vmatpush1.msra.mxu0 0.0
    %849 = vmatprep.subr.mxu0 0.0
    %850 = vmatpush1.msra.mxu0 0.0
    %851 = vmatprep.subr.mxu0 0.0
    %852 = vmatpush1.msra.mxu0 0.0
    %853 = vmatprep.subr.mxu0 0.0
    %854 = vmatpush1.msra.mxu0 0.0
    %855 = vmatprep.subr.mxu0 0.0
    %856 = vmatpush1.msra.mxu0 0.0
    %857 = vmatprep.mubr.f32.mxu0 0.0
    %858 = vmatmul.mubr.f32.gmra.mrb[0].mxu0 %v791
    %v859 = vpop.f32.mrb[0].mxu0
    %v860 = vadd.f32 0.0, %v859
    %v861 = vpop.f32.mrb[0].mxu0
    %862 = vdwg.mxu0
    %v864 = vsel %vm458, %v621, 0
    %866 = vmatprep.subr.mxu0 0.0
    %867 = vmatpush1.msra.mxu0 %v203
    %868 = vmatprep.subr.mxu0 0.0
    %869 = vmatpush1.msra.mxu0 %v204
    %870 = vmatprep.subr.mxu0 0.0
    %871 = vmatpush1.msra.mxu0 %v205
    %872 = vmatprep.subr.mxu0 0.0
    %873 = vmatpush1.msra.mxu0 %v206
    %874 = vmatprep.subr.mxu0 0.0
    %875 = vmatpush1.msra.mxu0 0.0
    %876 = vmatprep.subr.mxu0 0.0
    %877 = vmatpush1.msra.mxu0 0.0
    %878 = vmatprep.subr.mxu0 0.0
    %879 = vmatpush1.msra.mxu0 0.0
    %880 = vmatprep.subr.mxu0 0.0
    %881 = vmatpush1.msra.mxu0 0.0
    %882 = vmatprep.subr.mxu0 0.0
    %883 = vmatpush1.msra.mxu0 0.0
    %884 = vmatprep.subr.mxu0 0.0
    %885 = vmatpush1.msra.mxu0 0.0
    %886 = vmatprep.subr.mxu0 0.0
    %887 = vmatpush1.msra.mxu0 0.0
    %888 = vmatprep.subr.mxu0 0.0
    %889 = vmatpush1.msra.mxu0 0.0
    %890 = vmatprep.subr.mxu0 0.0
    %891 = vmatpush1.msra.mxu0 0.0
    %892 = vmatprep.subr.mxu0 0.0
    %893 = vmatpush1.msra.mxu0 0.0
    %894 = vmatprep.subr.mxu0 0.0
    %895 = vmatpush1.msra.mxu0 0.0
    %896 = vmatprep.subr.mxu0 0.0
    %897 = vmatpush1.msra.mxu0 0.0
    %898 = vmatprep.subr.mxu0 0.0
    %899 = vmatpush1.msra.mxu0 0.0
    %900 = vmatprep.subr.mxu0 0.0
    %901 = vmatpush1.msra.mxu0 0.0
    %902 = vmatprep.subr.mxu0 0.0
    %903 = vmatpush1.msra.mxu0 0.0
    %904 = vmatprep.subr.mxu0 0.0
    %905 = vmatpush1.msra.mxu0 0.0
    %906 = vmatprep.subr.mxu0 0.0
    %907 = vmatpush1.msra.mxu0 0.0
    %908 = vmatprep.subr.mxu0 0.0
    %909 = vmatpush1.msra.mxu0 0.0
    %910 = vmatprep.subr.mxu0 0.0
    %911 = vmatpush1.msra.mxu0 0.0
    %912 = vmatprep.subr.mxu0 0.0
    %913 = vmatpush1.msra.mxu0 0.0
    %914 = vmatprep.subr.mxu0 0.0
    %915 = vmatpush1.msra.mxu0 0.0
    %916 = vmatprep.subr.mxu0 0.0
    %917 = vmatpush1.msra.mxu0 0.0
    %918 = vmatprep.subr.mxu0 0.0
    %919 = vmatpush1.msra.mxu0 0.0
    %920 = vmatprep.subr.mxu0 0.0
    %921 = vmatpush1.msra.mxu0 0.0
    %922 = vmatprep.subr.mxu0 0.0
    %923 = vmatpush1.msra.mxu0 0.0
    %924 = vmatprep.subr.mxu0 0.0
    %925 = vmatpush1.msra.mxu0 0.0
    %926 = vmatprep.subr.mxu0 0.0
    %927 = vmatpush1.msra.mxu0 0.0
    %928 = vmatprep.subr.mxu0 0.0
    %929 = vmatpush1.msra.mxu0 0.0
    %930 = vmatprep.mubr.f32.mxu0 0.0
    %931 = vmatmul.mubr.f32.gmra.mrb[0].mxu0 %v864
    %v932 = vpop.f32.mrb[0].mxu0
    %v933 = vadd.f32 %v860, %v932
    %v934 = vpop.f32.mrb[0].mxu0
    %935 = vdwg.mxu0
    %936 = vrot.lane.b32.xlu0 %v373, 64
    %v937 = vpop.permute.xlu0 %936
    %938 = vrot.lane.b32.xlu0 %v375, 64
    %v939 = vpop.permute.xlu0 %938
    %v940 = vsel %vm458, %v937, 0
    %v942 = vsel %vm458, %v939, 0
    %944 = vmatprep.subr.mxu0 0.0
    %945 = vmatpush1.xpose.msra.mxu0 %v942
    %946 = vmatprep.subr.mxu0 0.0
    %947 = vmatpush1.xpose.msra.mxu0 0.0
    %948 = vmatprep.subr.mxu0 0.0
    %949 = vmatpush1.xpose.msra.mxu0 0.0
    %950 = vmatprep.subr.mxu0 0.0
    %951 = vmatpush1.xpose.msra.mxu0 0.0
    %952 = vmatprep.subr.mxu0 0.0
    %953 = vmatpush1.xpose.msra.mxu0 0.0
    %954 = vmatprep.subr.mxu0 0.0
    %955 = vmatpush1.xpose.msra.mxu0 0.0
    %956 = vmatprep.subr.mxu0 0.0
    %957 = vmatpush1.xpose.msra.mxu0 0.0
    %958 = vmatprep.subr.mxu0 0.0
    %959 = vmatpush1.xpose.msra.mxu0 0.0
    %960 = vmatprep.subr.mxu0 0.0
    %961 = vmatpush1.xpose.msra.mxu0 0.0
    %962 = vmatprep.subr.mxu0 0.0
    %963 = vmatpush1.xpose.msra.mxu0 0.0
    %964 = vmatprep.subr.mxu0 0.0
    %965 = vmatpush1.xpose.msra.mxu0 0.0
    %966 = vmatprep.subr.mxu0 0.0
    %967 = vmatpush1.xpose.msra.mxu0 0.0
    %968 = vmatprep.subr.mxu0 0.0
    %969 = vmatpush1.xpose.msra.mxu0 0.0
    %970 = vmatprep.subr.mxu0 0.0
    %971 = vmatpush1.xpose.msra.mxu0 0.0
    %972 = vmatprep.subr.mxu0 0.0
    %973 = vmatpush1.xpose.msra.mxu0 0.0
    %974 = vmatprep.subr.mxu0 0.0
    %975 = vmatpush1.xpose.msra.mxu0 0.0
    %976 = vmatprep.subr.mxu0 0.0
    %977 = vmatpush1.xpose.msra.mxu0 0.0
    %978 = vmatprep.subr.mxu0 0.0
    %979 = vmatpush1.xpose.msra.mxu0 0.0
    %980 = vmatprep.subr.mxu0 0.0
    %981 = vmatpush1.xpose.msra.mxu0 0.0
    %982 = vmatprep.subr.mxu0 0.0
    %983 = vmatpush1.xpose.msra.mxu0 0.0
    %984 = vmatprep.subr.mxu0 0.0
    %985 = vmatpush1.xpose.msra.mxu0 0.0
    %986 = vmatprep.subr.mxu0 0.0
    %987 = vmatpush1.xpose.msra.mxu0 0.0
    %988 = vmatprep.subr.mxu0 0.0
    %989 = vmatpush1.xpose.msra.mxu0 0.0
    %990 = vmatprep.subr.mxu0 0.0
    %991 = vmatpush1.xpose.msra.mxu0 0.0
    %992 = vmatprep.subr.mxu0 0.0
    %993 = vmatpush1.xpose.msra.mxu0 0.0
    %994 = vmatprep.subr.mxu0 0.0
    %995 = vmatpush1.xpose.msra.mxu0 0.0
    %996 = vmatprep.subr.mxu0 0.0
    %997 = vmatpush1.xpose.msra.mxu0 0.0
    %998 = vmatprep.subr.mxu0 0.0
    %999 = vmatpush1.xpose.msra.mxu0 0.0
    %1000 = vmatprep.subr.mxu0 0.0
    %1001 = vmatpush1.xpose.msra.mxu0 0.0
    %1002 = vmatprep.subr.mxu0 0.0
    %1003 = vmatpush1.xpose.msra.mxu0 0.0
    %1004 = vmatprep.subr.mxu0 0.0
    %1005 = vmatpush1.xpose.msra.mxu0 0.0
    %1006 = vmatprep.subr.mxu0 0.0
    %1007 = vmatpush1.xpose.msra.mxu0 0.0
    %1008 = vmatprep.mubr.f32.mxu0 0.0
    %1009 = vmatmul.mubr.f32.gmra.mrb[0].mxu0 %v940
    %v1010 = vpop.f32.mrb[0].mxu0
    %v1011 = vadd.f32 0.0, %v1010
    %v1012 = vpop.f32.mrb[0].mxu0
    %1013 = vdwg.mxu0
    %v1014 = vmul.f32 %v1011, 0.17677669
    %v1015 = vadd.f32 %v1014, %v153
    %v1016 = vsel %vm537, %v1015, -inf
    %1017 = vmax.xlane.f32.xlu0 %v1016
    %v1018 = vpop.xlane.xlu0 %1017
    %v1019 = vsub.f32 %v1015, %v1018
    %v1020 = vmul.f32 %v1019, 1.442695
    %v1021 = vpow.pop %v1020
    %v1022 = vsel %vm537, %v1021, 0.0
    %1023 = vadd.xlane.f32.xlu0 %v1022
    %v1024 = vpop.xlane.xlu0 %1023
    %1025 = vrot.lane.b32.xlu0 %v450, 64
    %v1026 = vpop.permute.xlu0 %1025
    %v1029 = vsel %vm537, %v1021, 0
    %1031 = vmatprep.subr.mxu0 0.0
    %1032 = vmatpush1.msra.mxu0 %v1026
    %1033 = vmatprep.subr.mxu0 0.0
    %1034 = vmatpush1.msra.mxu0 0.0
    %1035 = vmatprep.subr.mxu0 0.0
    %1036 = vmatpush1.msra.mxu0 0.0
    %1037 = vmatprep.subr.mxu0 0.0
    %1038 = vmatpush1.msra.mxu0 0.0
    %1039 = vmatprep.subr.mxu0 0.0
    %1040 = vmatpush1.msra.mxu0 0.0
    %1041 = vmatprep.subr.mxu0 0.0
    %1042 = vmatpush1.msra.mxu0 0.0
    %1043 = vmatprep.subr.mxu0 0.0
    %1044 = vmatpush1.msra.mxu0 0.0
    %1045 = vmatprep.subr.mxu0 0.0
    %1046 = vmatpush1.msra.mxu0 0.0
    %1047 = vmatprep.subr.mxu0 0.0
    %1048 = vmatpush1.msra.mxu0 0.0
    %1049 = vmatprep.subr.mxu0 0.0
    %1050 = vmatpush1.msra.mxu0 0.0
    %1051 = vmatprep.subr.mxu0 0.0
    %1052 = vmatpush1.msra.mxu0 0.0
    %1053 = vmatprep.subr.mxu0 0.0
    %1054 = vmatpush1.msra.mxu0 0.0
    %1055 = vmatprep.subr.mxu0 0.0
    %1056 = vmatpush1.msra.mxu0 0.0
    %1057 = vmatprep.subr.mxu0 0.0
    %1058 = vmatpush1.msra.mxu0 0.0
    %1059 = vmatprep.subr.mxu0 0.0
    %1060 = vmatpush1.msra.mxu0 0.0
    %1061 = vmatprep.subr.mxu0 0.0
    %1062 = vmatpush1.msra.mxu0 0.0
    %1063 = vmatprep.subr.mxu0 0.0
    %1064 = vmatpush1.msra.mxu0 0.0
    %1065 = vmatprep.subr.mxu0 0.0
    %1066 = vmatpush1.msra.mxu0 0.0
    %1067 = vmatprep.subr.mxu0 0.0
    %1068 = vmatpush1.msra.mxu0 0.0
    %1069 = vmatprep.subr.mxu0 0.0
    %1070 = vmatpush1.msra.mxu0 0.0
    %1071 = vmatprep.subr.mxu0 0.0
    %1072 = vmatpush1.msra.mxu0 0.0
    %1073 = vmatprep.subr.mxu0 0.0
    %1074 = vmatpush1.msra.mxu0 0.0
    %1075 = vmatprep.subr.mxu0 0.0
    %1076 = vmatpush1.msra.mxu0 0.0
    %1077 = vmatprep.subr.mxu0 0.0
    %1078 = vmatpush1.msra.mxu0 0.0
    %1079 = vmatprep.subr.mxu0 0.0
    %1080 = vmatpush1.msra.mxu0 0.0
    %1081 = vmatprep.subr.mxu0 0.0
    %1082 = vmatpush1.msra.mxu0 0.0
    %1083 = vmatprep.subr.mxu0 0.0
    %1084 = vmatpush1.msra.mxu0 0.0
    %1085 = vmatprep.subr.mxu0 0.0
    %1086 = vmatpush1.msra.mxu0 0.0
    %1087 = vmatprep.subr.mxu0 0.0
    %1088 = vmatpush1.msra.mxu0 0.0
    %1089 = vmatprep.subr.mxu0 0.0
    %1090 = vmatpush1.msra.mxu0 0.0
    %1091 = vmatprep.subr.mxu0 0.0
    %1092 = vmatpush1.msra.mxu0 0.0
    %1093 = vmatprep.subr.mxu0 0.0
    %1094 = vmatpush1.msra.mxu0 0.0
    %1095 = vmatprep.mubr.f32.mxu0 0.0
    %1096 = vmatmul.mubr.f32.gmra.mrb[0].mxu0 %v1029
    %v1097 = vpop.f32.mrb[0].mxu0
    %v1098 = vadd.f32 0.0, %v1097
    %v1099 = vpop.f32.mrb[0].mxu0
    %1100 = vdwg.mxu0
    %v1101 = vrcp.pop %v1024
    %v1102 = vmul.f32 %v1098, %v1101
    %v1104 = vsel %vm458, %v1102, 0
    %1106 = vmatprep.subr.mxu0 0.0
    %1107 = vmatpush1.msra.mxu0 %v211
    %1108 = vmatprep.subr.mxu0 0.0
    %1109 = vmatpush1.msra.mxu0 %v212
    %1110 = vmatprep.subr.mxu0 0.0
    %1111 = vmatpush1.msra.mxu0 %v213
    %1112 = vmatprep.subr.mxu0 0.0
    %1113 = vmatpush1.msra.mxu0 %v214
    %1114 = vmatprep.subr.mxu0 0.0
    %1115 = vmatpush1.msra.mxu0 0.0
    %1116 = vmatprep.subr.mxu0 0.0
    %1117 = vmatpush1.msra.mxu0 0.0
    %1118 = vmatprep.subr.mxu0 0.0
    %1119 = vmatpush1.msra.mxu0 0.0
    %1120 = vmatprep.subr.mxu0 0.0
    %1121 = vmatpush1.msra.mxu0 0.0
    %1122 = vmatprep.subr.mxu0 0.0
    %1123 = vmatpush1.msra.mxu0 0.0
    %1124 = vmatprep.subr.mxu0 0.0
    %1125 = vmatpush1.msra.mxu0 0.0
    %1126 = vmatprep.subr.mxu0 0.0
    %1127 = vmatpush1.msra.mxu0 0.0
    %1128 = vmatprep.subr.mxu0 0.0
    %1129 = vmatpush1.msra.mxu0 0.0
    %1130 = vmatprep.subr.mxu0 0.0
    %1131 = vmatpush1.msra.mxu0 0.0
    %1132 = vmatprep.subr.mxu0 0.0
    %1133 = vmatpush1.msra.mxu0 0.0
    %1134 = vmatprep.subr.mxu0 0.0
    %1135 = vmatpush1.msra.mxu0 0.0
    %1136 = vmatprep.subr.mxu0 0.0
    %1137 = vmatpush1.msra.mxu0 0.0
    %1138 = vmatprep.subr.mxu0 0.0
    %1139 = vmatpush1.msra.mxu0 0.0
    %1140 = vmatprep.subr.mxu0 0.0
    %1141 = vmatpush1.msra.mxu0 0.0
    %1142 = vmatprep.subr.mxu0 0.0
    %1143 = vmatpush1.msra.mxu0 0.0
    %1144 = vmatprep.subr.mxu0 0.0
    %1145 = vmatpush1.msra.mxu0 0.0
    %1146 = vmatprep.subr.mxu0 0.0
    %1147 = vmatpush1.msra.mxu0 0.0
    %1148 = vmatprep.subr.mxu0 0.0
    %1149 = vmatpush1.msra.mxu0 0.0
    %1150 = vmatprep.subr.mxu0 0.0
    %1151 = vmatpush1.msra.mxu0 0.0
    %1152 = vmatprep.subr.mxu0 0.0
    %1153 = vmatpush1.msra.mxu0 0.0
    %1154 = vmatprep.subr.mxu0 0.0
    %1155 = vmatpush1.msra.mxu0 0.0
    %1156 = vmatprep.subr.mxu0 0.0
    %1157 = vmatpush1.msra.mxu0 0.0
    %1158 = vmatprep.subr.mxu0 0.0
    %1159 = vmatpush1.msra.mxu0 0.0
    %1160 = vmatprep.subr.mxu0 0.0
    %1161 = vmatpush1.msra.mxu0 0.0
    %1162 = vmatprep.subr.mxu0 0.0
    %1163 = vmatpush1.msra.mxu0 0.0
    %1164 = vmatprep.subr.mxu0 0.0
    %1165 = vmatpush1.msra.mxu0 0.0
    %1166 = vmatprep.subr.mxu0 0.0
    %1167 = vmatpush1.msra.mxu0 0.0
    %1168 = vmatprep.subr.mxu0 0.0
    %1169 = vmatpush1.msra.mxu0 0.0
    %1170 = vmatprep.mubr.f32.mxu0 0.0
    %1171 = vmatmul.mubr.f32.gmra.mrb[0].mxu0 %v1104
    %v1172 = vpop.f32.mrb[0].mxu0
    %v1173 = vadd.f32 0.0, %v1172
    %v1174 = vpop.f32.mrb[0].mxu0
    %1175 = vdwg.mxu0
    %v1176 = vadd.f32 %v933, %v1173
    %1177 = vrot.lane.b32.xlu0 %v373, 32
    %v1178 = vpop.permute.xlu0 %1177
    %1179 = vrot.lane.b32.xlu0 %v375, 32
    %v1180 = vpop.permute.xlu0 %1179
    %v1181 = vsel %vm458, %v1178, 0
    %v1183 = vsel %vm458, %v1180, 0
    %1185 = vmatprep.subr.mxu0 0.0
    %1186 = vmatpush1.xpose.msra.mxu0 %v1183
    %1187 = vmatprep.subr.mxu0 0.0
    %1188 = vmatpush1.xpose.msra.mxu0 0.0
    %1189 = vmatprep.subr.mxu0 0.0
    %1190 = vmatpush1.xpose.msra.mxu0 0.0
    %1191 = vmatprep.subr.mxu0 0.0
    %1192 = vmatpush1.xpose.msra.mxu0 0.0
    %1193 = vmatprep.subr.mxu0 0.0
    %1194 = vmatpush1.xpose.msra.mxu0 0.0
    %1195 = vmatprep.subr.mxu0 0.0
    %1196 = vmatpush1.xpose.msra.mxu0 0.0
    %1197 = vmatprep.subr.mxu0 0.0
    %1198 = vmatpush1.xpose.msra.mxu0 0.0
    %1199 = vmatprep.subr.mxu0 0.0
    %1200 = vmatpush1.xpose.msra.mxu0 0.0
    %1201 = vmatprep.subr.mxu0 0.0
    %1202 = vmatpush1.xpose.msra.mxu0 0.0
    %1203 = vmatprep.subr.mxu0 0.0
    %1204 = vmatpush1.xpose.msra.mxu0 0.0
    %1205 = vmatprep.subr.mxu0 0.0
    %1206 = vmatpush1.xpose.msra.mxu0 0.0
    %1207 = vmatprep.subr.mxu0 0.0
    %1208 = vmatpush1.xpose.msra.mxu0 0.0
    %1209 = vmatprep.subr.mxu0 0.0
    %1210 = vmatpush1.xpose.msra.mxu0 0.0
    %1211 = vmatprep.subr.mxu0 0.0
    %1212 = vmatpush1.xpose.msra.mxu0 0.0
    %1213 = vmatprep.subr.mxu0 0.0
    %1214 = vmatpush1.xpose.msra.mxu0 0.0
    %1215 = vmatprep.subr.mxu0 0.0
    %1216 = vmatpush1.xpose.msra.mxu0 0.0
    %1217 = vmatprep.subr.mxu0 0.0
    %1218 = vmatpush1.xpose.msra.mxu0 0.0
    %1219 = vmatprep.subr.mxu0 0.0
    %1220 = vmatpush1.xpose.msra.mxu0 0.0
    %1221 = vmatprep.subr.mxu0 0.0
    %1222 = vmatpush1.xpose.msra.mxu0 0.0
    %1223 = vmatprep.subr.mxu0 0.0
    %1224 = vmatpush1.xpose.msra.mxu0 0.0
    %1225 = vmatprep.subr.mxu0 0.0
    %1226 = vmatpush1.xpose.msra.mxu0 0.0
    %1227 = vmatprep.subr.mxu0 0.0
    %1228 = vmatpush1.xpose.msra.mxu0 0.0
    %1229 = vmatprep.subr.mxu0 0.0
    %1230 = vmatpush1.xpose.msra.mxu0 0.0
    %1231 = vmatprep.subr.mxu0 0.0
    %1232 = vmatpush1.xpose.msra.mxu0 0.0
    %1233 = vmatprep.subr.mxu0 0.0
    %1234 = vmatpush1.xpose.msra.mxu0 0.0
    %1235 = vmatprep.subr.mxu0 0.0
    %1236 = vmatpush1.xpose.msra.mxu0 0.0
    %1237 = vmatprep.subr.mxu0 0.0
    %1238 = vmatpush1.xpose.msra.mxu0 0.0
    %1239 = vmatprep.subr.mxu0 0.0
    %1240 = vmatpush1.xpose.msra.mxu0 0.0
    %1241 = vmatprep.subr.mxu0 0.0
    %1242 = vmatpush1.xpose.msra.mxu0 0.0
    %1243 = vmatprep.subr.mxu0 0.0
    %1244 = vmatpush1.xpose.msra.mxu0 0.0
    %1245 = vmatprep.subr.mxu0 0.0
    %1246 = vmatpush1.xpose.msra.mxu0 0.0
    %1247 = vmatprep.subr.mxu0 0.0
    %1248 = vmatpush1.xpose.msra.mxu0 0.0
    %1249 = vmatprep.mubr.f32.mxu0 0.0
    %1250 = vmatmul.mubr.f32.gmra.mrb[0].mxu0 %v1181
    %v1251 = vpop.f32.mrb[0].mxu0
    %v1252 = vadd.f32 0.0, %v1251
    %v1253 = vpop.f32.mrb[0].mxu0
    %1254 = vdwg.mxu0
    %v1255 = vmul.f32 %v1252, 0.17677669
    %v1256 = vadd.f32 %v1255, %v153
    %v1257 = vsel %vm537, %v1256, -inf
    %1258 = vmax.xlane.f32.xlu0 %v1257
    %v1259 = vpop.xlane.xlu0 %1258
    %v1260 = vsub.f32 %v1256, %v1259
    %v1261 = vmul.f32 %v1260, 1.442695
    %v1262 = vpow.pop %v1261
    %v1263 = vsel %vm537, %v1262, 0.0
    %1264 = vadd.xlane.f32.xlu0 %v1263
    %v1265 = vpop.xlane.xlu0 %1264
    %1266 = vrot.lane.b32.xlu0 %v450, 32
    %v1267 = vpop.permute.xlu0 %1266
    %v1270 = vsel %vm537, %v1262, 0
    %1272 = vmatprep.subr.mxu0 0.0
    %1273 = vmatpush1.msra.mxu0 %v1267
    %1274 = vmatprep.subr.mxu0 0.0
    %1275 = vmatpush1.msra.mxu0 0.0
    %1276 = vmatprep.subr.mxu0 0.0
    %1277 = vmatpush1.msra.mxu0 0.0
    %1278 = vmatprep.subr.mxu0 0.0
    %1279 = vmatpush1.msra.mxu0 0.0
    %1280 = vmatprep.subr.mxu0 0.0
    %1281 = vmatpush1.msra.mxu0 0.0
    %1282 = vmatprep.subr.mxu0 0.0
    %1283 = vmatpush1.msra.mxu0 0.0
    %1284 = vmatprep.subr.mxu0 0.0
    %1285 = vmatpush1.msra.mxu0 0.0
    %1286 = vmatprep.subr.mxu0 0.0
    %1287 = vmatpush1.msra.mxu0 0.0
    %1288 = vmatprep.subr.mxu0 0.0
    %1289 = vmatpush1.msra.mxu0 0.0
    %1290 = vmatprep.subr.mxu0 0.0
    %1291 = vmatpush1.msra.mxu0 0.0
    %1292 = vmatprep.subr.mxu0 0.0
    %1293 = vmatpush1.msra.mxu0 0.0
    %1294 = vmatprep.subr.mxu0 0.0
    %1295 = vmatpush1.msra.mxu0 0.0
    %1296 = vmatprep.subr.mxu0 0.0
    %1297 = vmatpush1.msra.mxu0 0.0
    %1298 = vmatprep.subr.mxu0 0.0
    %1299 = vmatpush1.msra.mxu0 0.0
    %1300 = vmatprep.subr.mxu0 0.0
    %1301 = vmatpush1.msra.mxu0 0.0
    %1302 = vmatprep.subr.mxu0 0.0
    %1303 = vmatpush1.msra.mxu0 0.0
    %1304 = vmatprep.subr.mxu0 0.0
    %1305 = vmatpush1.msra.mxu0 0.0
    %1306 = vmatprep.subr.mxu0 0.0
    %1307 = vmatpush1.msra.mxu0 0.0
    %1308 = vmatprep.subr.mxu0 0.0
    %1309 = vmatpush1.msra.mxu0 0.0
    %1310 = vmatprep.subr.mxu0 0.0
    %1311 = vmatpush1.msra.mxu0 0.0
    %1312 = vmatprep.subr.mxu0 0.0
    %1313 = vmatpush1.msra.mxu0 0.0
    %1314 = vmatprep.subr.mxu0 0.0
    %1315 = vmatpush1.msra.mxu0 0.0
    %1316 = vmatprep.subr.mxu0 0.0
    %1317 = vmatpush1.msra.mxu0 0.0
    %1318 = vmatprep.subr.mxu0 0.0
    %1319 = vmatpush1.msra.mxu0 0.0
    %1320 = vmatprep.subr.mxu0 0.0
    %1321 = vmatpush1.msra.mxu0 0.0
    %1322 = vmatprep.subr.mxu0 0.0
    %1323 = vmatpush1.msra.mxu0 0.0
    %1324 = vmatprep.subr.mxu0 0.0
    %1325 = vmatpush1.msra.mxu0 0.0
    %1326 = vmatprep.subr.mxu0 0.0
    %1327 = vmatpush1.msra.mxu0 0.0
    %1328 = vmatprep.subr.mxu0 0.0
    %1329 = vmatpush1.msra.mxu0 0.0
    %1330 = vmatprep.subr.mxu0 0.0
    %1331 = vmatpush1.msra.mxu0 0.0
    %1332 = vmatprep.subr.mxu0 0.0
    %1333 = vmatpush1.msra.mxu0 0.0
    %1334 = vmatprep.subr.mxu0 0.0
    %1335 = vmatpush1.msra.mxu0 0.0
    %1336 = vmatprep.mubr.f32.mxu0 0.0
    %1337 = vmatmul.mubr.f32.gmra.mrb[0].mxu0 %v1270
    %v1338 = vpop.f32.mrb[0].mxu0
    %v1339 = vadd.f32 0.0, %v1338
    %v1340 = vpop.f32.mrb[0].mxu0
    %1341 = vdwg.mxu0
    %v1342 = vrcp.pop %v1265
    %v1343 = vmul.f32 %v1339, %v1342
    %v1345 = vsel %vm458, %v1343, 0
    %1347 = vmatprep.subr.mxu0 0.0
    %1348 = vmatpush1.msra.mxu0 %v215
    %1349 = vmatprep.subr.mxu0 0.0
    %1350 = vmatpush1.msra.mxu0 %v216
    %1351 = vmatprep.subr.mxu0 0.0
    %1352 = vmatpush1.msra.mxu0 %v217
    %1353 = vmatprep.subr.mxu0 0.0
    %1354 = vmatpush1.msra.mxu0 %v218
    %1355 = vmatprep.subr.mxu0 0.0
    %1356 = vmatpush1.msra.mxu0 0.0
    %1357 = vmatprep.subr.mxu0 0.0
    %1358 = vmatpush1.msra.mxu0 0.0
    %1359 = vmatprep.subr.mxu0 0.0
    %1360 = vmatpush1.msra.mxu0 0.0
    %1361 = vmatprep.subr.mxu0 0.0
    %1362 = vmatpush1.msra.mxu0 0.0
    %1363 = vmatprep.subr.mxu0 0.0
    %1364 = vmatpush1.msra.mxu0 0.0
    %1365 = vmatprep.subr.mxu0 0.0
    %1366 = vmatpush1.msra.mxu0 0.0
    %1367 = vmatprep.subr.mxu0 0.0
    %1368 = vmatpush1.msra.mxu0 0.0
    %1369 = vmatprep.subr.mxu0 0.0
    %1370 = vmatpush1.msra.mxu0 0.0
    %1371 = vmatprep.subr.mxu0 0.0
    %1372 = vmatpush1.msra.mxu0 0.0
    %1373 = vmatprep.subr.mxu0 0.0
    %1374 = vmatpush1.msra.mxu0 0.0
    %1375 = vmatprep.subr.mxu0 0.0
    %1376 = vmatpush1.msra.mxu0 0.0
    %1377 = vmatprep.subr.mxu0 0.0
    %1378 = vmatpush1.msra.mxu0 0.0
    %1379 = vmatprep.subr.mxu0 0.0
    %1380 = vmatpush1.msra.mxu0 0.0
    %1381 = vmatprep.subr.mxu0 0.0
    %1382 = vmatpush1.msra.mxu0 0.0
    %1383 = vmatprep.subr.mxu0 0.0
    %1384 = vmatpush1.msra.mxu0 0.0
    %1385 = vmatprep.subr.mxu0 0.0
    %1386 = vmatpush1.msra.mxu0 0.0
    %1387 = vmatprep.subr.mxu0 0.0
    %1388 = vmatpush1.msra.mxu0 0.0
    %1389 = vmatprep.subr.mxu0 0.0
    %1390 = vmatpush1.msra.mxu0 0.0
    %1391 = vmatprep.subr.mxu0 0.0
    %1392 = vmatpush1.msra.mxu0 0.0
    %1393 = vmatprep.subr.mxu0 0.0
    %1394 = vmatpush1.msra.mxu0 0.0
    %1395 = vmatprep.subr.mxu0 0.0
    %1396 = vmatpush1.msra.mxu0 0.0
    %1397 = vmatprep.subr.mxu0 0.0
    %1398 = vmatpush1.msra.mxu0 0.0
    %1399 = vmatprep.subr.mxu0 0.0
    %1400 = vmatpush1.msra.mxu0 0.0
    %1401 = vmatprep.subr.mxu0 0.0
    %1402 = vmatpush1.msra.mxu0 0.0
    %1403 = vmatprep.subr.mxu0 0.0
    %1404 = vmatpush1.msra.mxu0 0.0
    %1405 = vmatprep.subr.mxu0 0.0
    %1406 = vmatpush1.msra.mxu0 0.0
    %1407 = vmatprep.subr.mxu0 0.0
    %1408 = vmatpush1.msra.mxu0 0.0
    %1409 = vmatprep.subr.mxu0 0.0
    %1410 = vmatpush1.msra.mxu0 0.0
    %1411 = vmatprep.mubr.f32.mxu0 0.0
    %1412 = vmatmul.mubr.f32.gmra.mrb[0].mxu0 %v1345
    %v1413 = vpop.f32.mrb[0].mxu0
    %v1414 = vadd.f32 0.0, %v1413
    %v1415 = vpop.f32.mrb[0].mxu0
    %1416 = vdwg.mxu0
    %v1417 = vadd.f32 %v1176, %v1414
    %v1418 = vadd.f32 %v151, %v1417
    %v1420 = vlaneseq
    %v1421 = vshrl.u32 %v1420, 7
    %v1422 = vsub.s32 0, %v1421
    %v1423 = vrot.slane %v219, %v1422
    %v1425 = vadd.f32 %v1418, %v1423
    %1426 = vadd.xlane.f32.xlu0 %v1425
    %v1427 = vpop.xlane.xlu0 %1426
    %v1428 = vrot.slane %v1427, 4
    %v1429 = vadd.f32 %v1427, %v1428
    %v1430 = vrot.slane %v1429, 2
    %v1431 = vadd.f32 %v1429, %v1430
    %v1432 = vrot.slane %v1431, 1
    %v1433 = vadd.f32 %v1431, %v1432
    %s1434 = vtos %v1433
    %v1435 = vrcp.pop 1024.0
    %s1436 = vtos %v1435
    %s1437 = smul.f32 %s1434, %s1436
    %v1438 = vstv %s1437
    %v1439 = vsub.f32 %v1425, %v1438
    %v1440 = vmul.f32 %v1439, %v1439
    %1441 = vadd.xlane.f32.xlu0 %v1440
    %v1442 = vpop.xlane.xlu0 %1441
    %v1443 = vrot.slane %v1442, 4
    %v1444 = vadd.f32 %v1442, %v1443
    %v1445 = vrot.slane %v1444, 2
    %v1446 = vadd.f32 %v1444, %v1445
    %v1447 = vrot.slane %v1446, 1
    %v1448 = vadd.f32 %v1446, %v1447
    %s1449 = vtos %v1448
    %v1450 = vrcp.pop 1024.0
    %s1451 = vtos %v1450
    %s1452 = smul.f32 %s1449, %s1451
    %s1453 = sadd.f32 %s1452, 1e-05
    %v1454 = vstv %s1453
    %v1455 = vrsqrt.pop %v1454
    %s1456 = vtos %v1455
    %v1457 = vstv %s1456
    %v1458 = vmul.f32 %v1439, %v1457
    %v1459 = vmul.f32 %v1458, %v220
    %v1460 = vadd.f32 %v1459, %v221
    %v1462 = vsel %vm458, %v379, 0
    %v1465 = vsel %vm458, %v381, 0
    %1467 = vmatprep.subr.mxu0 0.0
    %1468 = vmatpush1.xpose.msra.mxu0 %v1465
    %1469 = vmatprep.subr.mxu0 0.0
    %1470 = vmatpush1.xpose.msra.mxu0 0.0
    %1471 = vmatprep.subr.mxu0 0.0
    %1472 = vmatpush1.xpose.msra.mxu0 0.0
    %1473 = vmatprep.subr.mxu0 0.0
    %1474 = vmatpush1.xpose.msra.mxu0 0.0
    %1475 = vmatprep.subr.mxu0 0.0
    %1476 = vmatpush1.xpose.msra.mxu0 0.0
    %1477 = vmatprep.subr.mxu0 0.0
    %1478 = vmatpush1.xpose.msra.mxu0 0.0
    %1479 = vmatprep.subr.mxu0 0.0
    %1480 = vmatpush1.xpose.msra.mxu0 0.0
    %1481 = vmatprep.subr.mxu0 0.0
    %1482 = vmatpush1.xpose.msra.mxu0 0.0
    %1483 = vmatprep.subr.mxu0 0.0
    %1484 = vmatpush1.xpose.msra.mxu0 0.0
    %1485 = vmatprep.subr.mxu0 0.0
    %1486 = vmatpush1.xpose.msra.mxu0 0.0
    %1487 = vmatprep.subr.mxu0 0.0
    %1488 = vmatpush1.xpose.msra.mxu0 0.0
    %1489 = vmatprep.subr.mxu0 0.0
    %1490 = vmatpush1.xpose.msra.mxu0 0.0
    %1491 = vmatprep.subr.mxu0 0.0
    %1492 = vmatpush1.xpose.msra.mxu0 0.0
    %1493 = vmatprep.subr.mxu0 0.0
    %1494 = vmatpush1.xpose.msra.mxu0 0.0
    %1495 = vmatprep.subr.mxu0 0.0
    %1496 = vmatpush1.xpose.msra.mxu0 0.0
    %1497 = vmatprep.subr.mxu0 0.0
    %1498 = vmatpush1.xpose.msra.mxu0 0.0
    %1499 = vmatprep.subr.mxu0 0.0
    %1500 = vmatpush1.xpose.msra.mxu0 0.0
    %1501 = vmatprep.subr.mxu0 0.0
    %1502 = vmatpush1.xpose.msra.mxu0 0.0
    %1503 = vmatprep.subr.mxu0 0.0
    %1504 = vmatpush1.xpose.msra.mxu0 0.0
    %1505 = vmatprep.subr.mxu0 0.0
    %1506 = vmatpush1.xpose.msra.mxu0 0.0
    %1507 = vmatprep.subr.mxu0 0.0
    %1508 = vmatpush1.xpose.msra.mxu0 0.0
    %1509 = vmatprep.subr.mxu0 0.0
    %1510 = vmatpush1.xpose.msra.mxu0 0.0
    %1511 = vmatprep.subr.mxu0 0.0
    %1512 = vmatpush1.xpose.msra.mxu0 0.0
    %1513 = vmatprep.subr.mxu0 0.0
    %1514 = vmatpush1.xpose.msra.mxu0 0.0
    %1515 = vmatprep.subr.mxu0 0.0
    %1516 = vmatpush1.xpose.msra.mxu0 0.0
    %1517 = vmatprep.subr.mxu0 0.0
    %1518 = vmatpush1.xpose.msra.mxu0 0.0
    %1519 = vmatprep.subr.mxu0 0.0
    %1520 = vmatpush1.xpose.msra.mxu0 0.0
    %1521 = vmatprep.subr.mxu0 0.0
    %1522 = vmatpush1.xpose.msra.mxu0 0.0
    %1523 = vmatprep.subr.mxu0 0.0
    %1524 = vmatpush1.xpose.msra.mxu0 0.0
    %1525 = vmatprep.subr.mxu0 0.0
    %1526 = vmatpush1.xpose.msra.mxu0 0.0
    %1527 = vmatprep.subr.mxu0 0.0
    %1528 = vmatpush1.xpose.msra.mxu0 0.0
    %1529 = vmatprep.subr.mxu0 0.0
    %1530 = vmatpush1.xpose.msra.mxu0 0.0
    %1531 = vmatprep.mubr.f32.mxu0 0.0
    %1532 = vmatmul.mubr.f32.gmra.mrb[0].mxu0 %v1462
    %v1533 = vpop.f32.mrb[0].mxu0
    %v1534 = vadd.f32 0.0, %v1533
    %v1535 = vpop.f32.mrb[0].mxu0
    %1536 = vdwg.mxu0
    %v1537 = vmul.f32 %v1534, 0.17677669
    %v1538 = vadd.f32 %v1537, %v153
    %v1539 = vsel %vm537, %v1538, -inf
    %1540 = vmax.xlane.f32.xlu0 %v1539
    %v1541 = vpop.xlane.xlu0 %1540
    %v1542 = vsub.f32 %v1538, %v1541
    %v1543 = vmul.f32 %v1542, 1.442695
    %v1544 = vpow.pop %v1543
    %v1545 = vsel %vm537, %v1544, 0.0
    %1546 = vadd.xlane.f32.xlu0 %v1545
    %v1547 = vpop.xlane.xlu0 %1546
    %v1549 = vsel %vm537, %v1544, 0
    %1551 = vmatprep.subr.mxu0 0.0
    %1552 = vmatpush1.msra.mxu0 %v455
    %1553 = vmatprep.subr.mxu0 0.0
    %1554 = vmatpush1.msra.mxu0 0.0
    %1555 = vmatprep.subr.mxu0 0.0
    %1556 = vmatpush1.msra.mxu0 0.0
    %1557 = vmatprep.subr.mxu0 0.0
    %1558 = vmatpush1.msra.mxu0 0.0
    %1559 = vmatprep.subr.mxu0 0.0
    %1560 = vmatpush1.msra.mxu0 0.0
    %1561 = vmatprep.subr.mxu0 0.0
    %1562 = vmatpush1.msra.mxu0 0.0
    %1563 = vmatprep.subr.mxu0 0.0
    %1564 = vmatpush1.msra.mxu0 0.0
    %1565 = vmatprep.subr.mxu0 0.0
    %1566 = vmatpush1.msra.mxu0 0.0
    %1567 = vmatprep.subr.mxu0 0.0
    %1568 = vmatpush1.msra.mxu0 0.0
    %1569 = vmatprep.subr.mxu0 0.0
    %1570 = vmatpush1.msra.mxu0 0.0
    %1571 = vmatprep.subr.mxu0 0.0
    %1572 = vmatpush1.msra.mxu0 0.0
    %1573 = vmatprep.subr.mxu0 0.0
    %1574 = vmatpush1.msra.mxu0 0.0
    %1575 = vmatprep.subr.mxu0 0.0
    %1576 = vmatpush1.msra.mxu0 0.0
    %1577 = vmatprep.subr.mxu0 0.0
    %1578 = vmatpush1.msra.mxu0 0.0
    %1579 = vmatprep.subr.mxu0 0.0
    %1580 = vmatpush1.msra.mxu0 0.0
    %1581 = vmatprep.subr.mxu0 0.0
    %1582 = vmatpush1.msra.mxu0 0.0
    %1583 = vmatprep.subr.mxu0 0.0
    %1584 = vmatpush1.msra.mxu0 0.0
    %1585 = vmatprep.subr.mxu0 0.0
    %1586 = vmatpush1.msra.mxu0 0.0
    %1587 = vmatprep.subr.mxu0 0.0
    %1588 = vmatpush1.msra.mxu0 0.0
    %1589 = vmatprep.subr.mxu0 0.0
    %1590 = vmatpush1.msra.mxu0 0.0
    %1591 = vmatprep.subr.mxu0 0.0
    %1592 = vmatpush1.msra.mxu0 0.0
    %1593 = vmatprep.subr.mxu0 0.0
    %1594 = vmatpush1.msra.mxu0 0.0
    %1595 = vmatprep.subr.mxu0 0.0
    %1596 = vmatpush1.msra.mxu0 0.0
    %1597 = vmatprep.subr.mxu0 0.0
    %1598 = vmatpush1.msra.mxu0 0.0
    %1599 = vmatprep.subr.mxu0 0.0
    %1600 = vmatpush1.msra.mxu0 0.0
    %1601 = vmatprep.subr.mxu0 0.0
    %1602 = vmatpush1.msra.mxu0 0.0
    %1603 = vmatprep.subr.mxu0 0.0
    %1604 = vmatpush1.msra.mxu0 0.0
    %1605 = vmatprep.subr.mxu0 0.0
    %1606 = vmatpush1.msra.mxu0 0.0
    %1607 = vmatprep.subr.mxu0 0.0
    %1608 = vmatpush1.msra.mxu0 0.0
    %1609 = vmatprep.subr.mxu0 0.0
    %1610 = vmatpush1.msra.mxu0 0.0
    %1611 = vmatprep.subr.mxu0 0.0
    %1612 = vmatpush1.msra.mxu0 0.0
    %1613 = vmatprep.subr.mxu0 0.0
    %1614 = vmatpush1.msra.mxu0 0.0
    %1615 = vmatprep.mubr.f32.mxu0 0.0
    %1616 = vmatmul.mubr.f32.gmra.mrb[0].mxu0 %v1549
    %v1617 = vpop.f32.mrb[0].mxu0
    %v1618 = vadd.f32 0.0, %v1617
    %v1619 = vpop.f32.mrb[0].mxu0
    %1620 = vdwg.mxu0
    %v1621 = vrcp.pop %v1547
    %v1622 = vmul.f32 %v1618, %v1621
    %1623 = vrot.lane.b32.xlu0 %v379, 96
    %v1624 = vpop.permute.xlu0 %1623
    %1625 = vrot.lane.b32.xlu0 %v381, 96
    %v1626 = vpop.permute.xlu0 %1625
    %v1627 = vsel %vm458, %v1624, 0
    %v1629 = vsel %vm458, %v1626, 0
    %1631 = vmatprep.subr.mxu0 0.0
    %1632 = vmatpush1.xpose.msra.mxu0 %v1629
    %1633 = vmatprep.subr.mxu0 0.0
    %1634 = vmatpush1.xpose.msra.mxu0 0.0
    %1635 = vmatprep.subr.mxu0 0.0
    %1636 = vmatpush1.xpose.msra.mxu0 0.0
    %1637 = vmatprep.subr.mxu0 0.0
    %1638 = vmatpush1.xpose.msra.mxu0 0.0
    %1639 = vmatprep.subr.mxu0 0.0
    %1640 = vmatpush1.xpose.msra.mxu0 0.0
    %1641 = vmatprep.subr.mxu0 0.0
    %1642 = vmatpush1.xpose.msra.mxu0 0.0
    %1643 = vmatprep.subr.mxu0 0.0
    %1644 = vmatpush1.xpose.msra.mxu0 0.0
    %1645 = vmatprep.subr.mxu0 0.0
    %1646 = vmatpush1.xpose.msra.mxu0 0.0
    %1647 = vmatprep.subr.mxu0 0.0
    %1648 = vmatpush1.xpose.msra.mxu0 0.0
    %1649 = vmatprep.subr.mxu0 0.0
    %1650 = vmatpush1.xpose.msra.mxu0 0.0
    %1651 = vmatprep.subr.mxu0 0.0
    %1652 = vmatpush1.xpose.msra.mxu0 0.0
    %1653 = vmatprep.subr.mxu0 0.0
    %1654 = vmatpush1.xpose.msra.mxu0 0.0
    %1655 = vmatprep.subr.mxu0 0.0
    %1656 = vmatpush1.xpose.msra.mxu0 0.0
    %1657 = vmatprep.subr.mxu0 0.0
    %1658 = vmatpush1.xpose.msra.mxu0 0.0
    %1659 = vmatprep.subr.mxu0 0.0
    %1660 = vmatpush1.xpose.msra.mxu0 0.0
    %1661 = vmatprep.subr.mxu0 0.0
    %1662 = vmatpush1.xpose.msra.mxu0 0.0
    %1663 = vmatprep.subr.mxu0 0.0
    %1664 = vmatpush1.xpose.msra.mxu0 0.0
    %1665 = vmatprep.subr.mxu0 0.0
    %1666 = vmatpush1.xpose.msra.mxu0 0.0
    %1667 = vmatprep.subr.mxu0 0.0
    %1668 = vmatpush1.xpose.msra.mxu0 0.0
    %1669 = vmatprep.subr.mxu0 0.0
    %1670 = vmatpush1.xpose.msra.mxu0 0.0
    %1671 = vmatprep.subr.mxu0 0.0
    %1672 = vmatpush1.xpose.msra.mxu0 0.0
    %1673 = vmatprep.subr.mxu0 0.0
    %1674 = vmatpush1.xpose.msra.mxu0 0.0
    %1675 = vmatprep.subr.mxu0 0.0
    %1676 = vmatpush1.xpose.msra.mxu0 0.0
    %1677 = vmatprep.subr.mxu0 0.0
    %1678 = vmatpush1.xpose.msra.mxu0 0.0
    %1679 = vmatprep.subr.mxu0 0.0
    %1680 = vmatpush1.xpose.msra.mxu0 0.0
    %1681 = vmatprep.subr.mxu0 0.0
    %1682 = vmatpush1.xpose.msra.mxu0 0.0
    %1683 = vmatprep.subr.mxu0 0.0
    %1684 = vmatpush1.xpose.msra.mxu0 0.0
    %1685 = vmatprep.subr.mxu0 0.0
    %1686 = vmatpush1.xpose.msra.mxu0 0.0
    %1687 = vmatprep.subr.mxu0 0.0
    %1688 = vmatpush1.xpose.msra.mxu0 0.0
    %1689 = vmatprep.subr.mxu0 0.0
    %1690 = vmatpush1.xpose.msra.mxu0 0.0
    %1691 = vmatprep.subr.mxu0 0.0
    %1692 = vmatpush1.xpose.msra.mxu0 0.0
    %1693 = vmatprep.subr.mxu0 0.0
    %1694 = vmatpush1.xpose.msra.mxu0 0.0
    %1695 = vmatprep.mubr.f32.mxu0 0.0
    %1696 = vmatmul.mubr.f32.gmra.mrb[0].mxu0 %v1627
    %v1697 = vpop.f32.mrb[0].mxu0
    %v1698 = vadd.f32 0.0, %v1697
    %v1699 = vpop.f32.mrb[0].mxu0
    %1700 = vdwg.mxu0
    %v1701 = vmul.f32 %v1698, 0.17677669
    %v1702 = vadd.f32 %v1701, %v153
    %v1703 = vsel %vm537, %v1702, -inf
    %1704 = vmax.xlane.f32.xlu0 %v1703
    %v1705 = vpop.xlane.xlu0 %1704
    %v1706 = vsub.f32 %v1702, %v1705
    %v1707 = vmul.f32 %v1706, 1.442695
    %v1708 = vpow.pop %v1707
    %v1709 = vsel %vm537, %v1708, 0.0
    %1710 = vadd.xlane.f32.xlu0 %v1709
    %v1711 = vpop.xlane.xlu0 %1710
    %1713 = vrot.lane.b32.xlu0 %v455, 96
    %v1714 = vpop.permute.xlu0 %1713
    %v1717 = vsel %vm537, %v1708, 0
    %1719 = vmatprep.subr.mxu0 0.0
    %1720 = vmatpush1.msra.mxu0 %v1714
    %1721 = vmatprep.subr.mxu0 0.0
    %1722 = vmatpush1.msra.mxu0 0.0
    %1723 = vmatprep.subr.mxu0 0.0
    %1724 = vmatpush1.msra.mxu0 0.0
    %1725 = vmatprep.subr.mxu0 0.0
    %1726 = vmatpush1.msra.mxu0 0.0
    %1727 = vmatprep.subr.mxu0 0.0
    %1728 = vmatpush1.msra.mxu0 0.0
    %1729 = vmatprep.subr.mxu0 0.0
    %1730 = vmatpush1.msra.mxu0 0.0
    %1731 = vmatprep.subr.mxu0 0.0
    %1732 = vmatpush1.msra.mxu0 0.0
    %1733 = vmatprep.subr.mxu0 0.0
    %1734 = vmatpush1.msra.mxu0 0.0
    %1735 = vmatprep.subr.mxu0 0.0
    %1736 = vmatpush1.msra.mxu0 0.0
    %1737 = vmatprep.subr.mxu0 0.0
    %1738 = vmatpush1.msra.mxu0 0.0
    %1739 = vmatprep.subr.mxu0 0.0
    %1740 = vmatpush1.msra.mxu0 0.0
    %1741 = vmatprep.subr.mxu0 0.0
    %1742 = vmatpush1.msra.mxu0 0.0
    %1743 = vmatprep.subr.mxu0 0.0
    %1744 = vmatpush1.msra.mxu0 0.0
    %1745 = vmatprep.subr.mxu0 0.0
    %1746 = vmatpush1.msra.mxu0 0.0
    %1747 = vmatprep.subr.mxu0 0.0
    %1748 = vmatpush1.msra.mxu0 0.0
    %1749 = vmatprep.subr.mxu0 0.0
    %1750 = vmatpush1.msra.mxu0 0.0
    %1751 = vmatprep.subr.mxu0 0.0
    %1752 = vmatpush1.msra.mxu0 0.0
    %1753 = vmatprep.subr.mxu0 0.0
    %1754 = vmatpush1.msra.mxu0 0.0
    %1755 = vmatprep.subr.mxu0 0.0
    %1756 = vmatpush1.msra.mxu0 0.0
    %1757 = vmatprep.subr.mxu0 0.0
    %1758 = vmatpush1.msra.mxu0 0.0
    %1759 = vmatprep.subr.mxu0 0.0
    %1760 = vmatpush1.msra.mxu0 0.0
    %1761 = vmatprep.subr.mxu0 0.0
    %1762 = vmatpush1.msra.mxu0 0.0
    %1763 = vmatprep.subr.mxu0 0.0
    %1764 = vmatpush1.msra.mxu0 0.0
    %1765 = vmatprep.subr.mxu0 0.0
    %1766 = vmatpush1.msra.mxu0 0.0
    %1767 = vmatprep.subr.mxu0 0.0
    %1768 = vmatpush1.msra.mxu0 0.0
    %1769 = vmatprep.subr.mxu0 0.0
    %1770 = vmatpush1.msra.mxu0 0.0
    %1771 = vmatprep.subr.mxu0 0.0
    %1772 = vmatpush1.msra.mxu0 0.0
    %1773 = vmatprep.subr.mxu0 0.0
    %1774 = vmatpush1.msra.mxu0 0.0
    %1775 = vmatprep.subr.mxu0 0.0
    %1776 = vmatpush1.msra.mxu0 0.0
    %1777 = vmatprep.subr.mxu0 0.0
    %1778 = vmatpush1.msra.mxu0 0.0
    %1779 = vmatprep.subr.mxu0 0.0
    %1780 = vmatpush1.msra.mxu0 0.0
    %1781 = vmatprep.subr.mxu0 0.0
    %1782 = vmatpush1.msra.mxu0 0.0
    %1783 = vmatprep.mubr.f32.mxu0 0.0
    %1784 = vmatmul.mubr.f32.gmra.mrb[0].mxu0 %v1717
    %v1785 = vpop.f32.mrb[0].mxu0
    %v1786 = vadd.f32 0.0, %v1785
    %v1787 = vpop.f32.mrb[0].mxu0
    %1788 = vdwg.mxu0
    %v1789 = vrcp.pop %v1711
    %v1790 = vmul.f32 %v1786, %v1789
    %v1792 = vsel %vm458, %v1790, 0
    %1794 = vmatprep.subr.mxu0 0.0
    %1795 = vmatpush1.msra.mxu0 %v207
    %1796 = vmatprep.subr.mxu0 0.0
    %1797 = vmatpush1.msra.mxu0 %v208
    %1798 = vmatprep.subr.mxu0 0.0
    %1799 = vmatpush1.msra.mxu0 %v209
    %1800 = vmatprep.subr.mxu0 0.0
    %1801 = vmatpush1.msra.mxu0 %v210
    %1802 = vmatprep.subr.mxu0 0.0
    %1803 = vmatpush1.msra.mxu0 0.0
    %1804 = vmatprep.subr.mxu0 0.0
    %1805 = vmatpush1.msra.mxu0 0.0
    %1806 = vmatprep.subr.mxu0 0.0
    %1807 = vmatpush1.msra.mxu0 0.0
    %1808 = vmatprep.subr.mxu0 0.0
    %1809 = vmatpush1.msra.mxu0 0.0
    %1810 = vmatprep.subr.mxu0 0.0
    %1811 = vmatpush1.msra.mxu0 0.0
    %1812 = vmatprep.subr.mxu0 0.0
    %1813 = vmatpush1.msra.mxu0 0.0
    %1814 = vmatprep.subr.mxu0 0.0
    %1815 = vmatpush1.msra.mxu0 0.0
    %1816 = vmatprep.subr.mxu0 0.0
    %1817 = vmatpush1.msra.mxu0 0.0
    %1818 = vmatprep.subr.mxu0 0.0
    %1819 = vmatpush1.msra.mxu0 0.0
    %1820 = vmatprep.subr.mxu0 0.0
    %1821 = vmatpush1.msra.mxu0 0.0
    %1822 = vmatprep.subr.mxu0 0.0
    %1823 = vmatpush1.msra.mxu0 0.0
    %1824 = vmatprep.subr.mxu0 0.0
    %1825 = vmatpush1.msra.mxu0 0.0
    %1826 = vmatprep.subr.mxu0 0.0
    %1827 = vmatpush1.msra.mxu0 0.0
    %1828 = vmatprep.subr.mxu0 0.0
    %1829 = vmatpush1.msra.mxu0 0.0
    %1830 = vmatprep.subr.mxu0 0.0
    %1831 = vmatpush1.msra.mxu0 0.0
    %1832 = vmatprep.subr.mxu0 0.0
    %1833 = vmatpush1.msra.mxu0 0.0
    %1834 = vmatprep.subr.mxu0 0.0
    %1835 = vmatpush1.msra.mxu0 0.0
    %1836 = vmatprep.subr.mxu0 0.0
    %1837 = vmatpush1.msra.mxu0 0.0
    %1838 = vmatprep.subr.mxu0 0.0
    %1839 = vmatpush1.msra.mxu0 0.0
    %1840 = vmatprep.subr.mxu0 0.0
    %1841 = vmatpush1.msra.mxu0 0.0
    %1842 = vmatprep.subr.mxu0 0.0
    %1843 = vmatpush1.msra.mxu0 0.0
    %1844 = vmatprep.subr.mxu0 0.0
    %1845 = vmatpush1.msra.mxu0 0.0
    %1846 = vmatprep.subr.mxu0 0.0
    %1847 = vmatpush1.msra.mxu0 0.0
    %1848 = vmatprep.subr.mxu0 0.0
    %1849 = vmatpush1.msra.mxu0 0.0
    %1850 = vmatprep.subr.mxu0 0.0
    %1851 = vmatpush1.msra.mxu0 0.0
    %1852 = vmatprep.subr.mxu0 0.0
    %1853 = vmatpush1.msra.mxu0 0.0
    %1854 = vmatprep.subr.mxu0 0.0
    %1855 = vmatpush1.msra.mxu0 0.0
    %1856 = vmatprep.subr.mxu0 0.0
    %1857 = vmatpush1.msra.mxu0 0.0
    %1858 = vmatprep.mubr.f32.mxu0 0.0
    %1859 = vmatmul.mubr.f32.gmra.mrb[0].mxu0 %v1792
    %v1860 = vpop.f32.mrb[0].mxu0
    %v1861 = vadd.f32 0.0, %v1860
    %v1862 = vpop.f32.mrb[0].mxu0
    %1863 = vdwg.mxu0
    %v1865 = vsel %vm458, %v1622, 0
    %1867 = vmatprep.subr.mxu0 0.0
    %1868 = vmatpush1.msra.mxu0 %v203
    %1869 = vmatprep.subr.mxu0 0.0
    %1870 = vmatpush1.msra.mxu0 %v204
    %1871 = vmatprep.subr.mxu0 0.0
    %1872 = vmatpush1.msra.mxu0 %v205
    %1873 = vmatprep.subr.mxu0 0.0
    %1874 = vmatpush1.msra.mxu0 %v206
    %1875 = vmatprep.subr.mxu0 0.0
    %1876 = vmatpush1.msra.mxu0 0.0
    %1877 = vmatprep.subr.mxu0 0.0
    %1878 = vmatpush1.msra.mxu0 0.0
    %1879 = vmatprep.subr.mxu0 0.0
    %1880 = vmatpush1.msra.mxu0 0.0
    %1881 = vmatprep.subr.mxu0 0.0
    %1882 = vmatpush1.msra.mxu0 0.0
    %1883 = vmatprep.subr.mxu0 0.0
    %1884 = vmatpush1.msra.mxu0 0.0
    %1885 = vmatprep.subr.mxu0 0.0
    %1886 = vmatpush1.msra.mxu0 0.0
    %1887 = vmatprep.subr.mxu0 0.0
    %1888 = vmatpush1.msra.mxu0 0.0
    %1889 = vmatprep.subr.mxu0 0.0
    %1890 = vmatpush1.msra.mxu0 0.0
    %1891 = vmatprep.subr.mxu0 0.0
    %1892 = vmatpush1.msra.mxu0 0.0
    %1893 = vmatprep.subr.mxu0 0.0
    %1894 = vmatpush1.msra.mxu0 0.0
    %1895 = vmatprep.subr.mxu0 0.0
    %1896 = vmatpush1.msra.mxu0 0.0
    %1897 = vmatprep.subr.mxu0 0.0
    %1898 = vmatpush1.msra.mxu0 0.0
    %1899 = vmatprep.subr.mxu0 0.0
    %1900 = vmatpush1.msra.mxu0 0.0
    %1901 = vmatprep.subr.mxu0 0.0
    %1902 = vmatpush1.msra.mxu0 0.0
    %1903 = vmatprep.subr.mxu0 0.0
    %1904 = vmatpush1.msra.mxu0 0.0
    %1905 = vmatprep.subr.mxu0 0.0
    %1906 = vmatpush1.msra.mxu0 0.0
    %1907 = vmatprep.subr.mxu0 0.0
    %1908 = vmatpush1.msra.mxu0 0.0
    %1909 = vmatprep.subr.mxu0 0.0
    %1910 = vmatpush1.msra.mxu0 0.0
    %1911 = vmatprep.subr.mxu0 0.0
    %1912 = vmatpush1.msra.mxu0 0.0
    %1913 = vmatprep.subr.mxu0 0.0
    %1914 = vmatpush1.msra.mxu0 0.0
    %1915 = vmatprep.subr.mxu0 0.0
    %1916 = vmatpush1.msra.mxu0 0.0
    %1917 = vmatprep.subr.mxu0 0.0
    %1918 = vmatpush1.msra.mxu0 0.0
    %1919 = vmatprep.subr.mxu0 0.0
    %1920 = vmatpush1.msra.mxu0 0.0
    %1921 = vmatprep.subr.mxu0 0.0
    %1922 = vmatpush1.msra.mxu0 0.0
    %1923 = vmatprep.subr.mxu0 0.0
    %1924 = vmatpush1.msra.mxu0 0.0
    %1925 = vmatprep.subr.mxu0 0.0
    %1926 = vmatpush1.msra.mxu0 0.0
    %1927 = vmatprep.subr.mxu0 0.0
    %1928 = vmatpush1.msra.mxu0 0.0
    %1929 = vmatprep.subr.mxu0 0.0
    %1930 = vmatpush1.msra.mxu0 0.0
    %1931 = vmatprep.mubr.f32.mxu0 0.0
    %1932 = vmatmul.mubr.f32.gmra.mrb[0].mxu0 %v1865
    %v1933 = vpop.f32.mrb[0].mxu0
    %v1934 = vadd.f32 %v1861, %v1933
    %v1935 = vpop.f32.mrb[0].mxu0
    %1936 = vdwg.mxu0
    %1937 = vrot.lane.b32.xlu0 %v379, 64
    %v1938 = vpop.permute.xlu0 %1937
    %1939 = vrot.lane.b32.xlu0 %v381, 64
    %v1940 = vpop.permute.xlu0 %1939
    %v1941 = vsel %vm458, %v1938, 0
    %v1943 = vsel %vm458, %v1940, 0
    %1945 = vmatprep.subr.mxu0 0.0
    %1946 = vmatpush1.xpose.msra.mxu0 %v1943
    %1947 = vmatprep.subr.mxu0 0.0
    %1948 = vmatpush1.xpose.msra.mxu0 0.0
    %1949 = vmatprep.subr.mxu0 0.0
    %1950 = vmatpush1.xpose.msra.mxu0 0.0
    %1951 = vmatprep.subr.mxu0 0.0
    %1952 = vmatpush1.xpose.msra.mxu0 0.0
    %1953 = vmatprep.subr.mxu0 0.0
    %1954 = vmatpush1.xpose.msra.mxu0 0.0
    %1955 = vmatprep.subr.mxu0 0.0
    %1956 = vmatpush1.xpose.msra.mxu0 0.0
    %1957 = vmatprep.subr.mxu0 0.0
    %1958 = vmatpush1.xpose.msra.mxu0 0.0
    %1959 = vmatprep.subr.mxu0 0.0
    %1960 = vmatpush1.xpose.msra.mxu0 0.0
    %1961 = vmatprep.subr.mxu0 0.0
    %1962 = vmatpush1.xpose.msra.mxu0 0.0
    %1963 = vmatprep.subr.mxu0 0.0
    %1964 = vmatpush1.xpose.msra.mxu0 0.0
    %1965 = vmatprep.subr.mxu0 0.0
    %1966 = vmatpush1.xpose.msra.mxu0 0.0
    %1967 = vmatprep.subr.mxu0 0.0
    %1968 = vmatpush1.xpose.msra.mxu0 0.0
    %1969 = vmatprep.subr.mxu0 0.0
    %1970 = vmatpush1.xpose.msra.mxu0 0.0
    %1971 = vmatprep.subr.mxu0 0.0
    %1972 = vmatpush1.xpose.msra.mxu0 0.0
    %1973 = vmatprep.subr.mxu0 0.0
    %1974 = vmatpush1.xpose.msra.mxu0 0.0
    %1975 = vmatprep.subr.mxu0 0.0
    %1976 = vmatpush1.xpose.msra.mxu0 0.0
    %1977 = vmatprep.subr.mxu0 0.0
    %1978 = vmatpush1.xpose.msra.mxu0 0.0
    %1979 = vmatprep.subr.mxu0 0.0
    %1980 = vmatpush1.xpose.msra.mxu0 0.0
    %1981 = vmatprep.subr.mxu0 0.0
    %1982 = vmatpush1.xpose.msra.mxu0 0.0
    %1983 = vmatprep.subr.mxu0 0.0
    %1984 = vmatpush1.xpose.msra.mxu0 0.0
    %1985 = vmatprep.subr.mxu0 0.0
    %1986 = vmatpush1.xpose.msra.mxu0 0.0
    %1987 = vmatprep.subr.mxu0 0.0
    %1988 = vmatpush1.xpose.msra.mxu0 0.0
    %1989 = vmatprep.subr.mxu0 0.0
    %1990 = vmatpush1.xpose.msra.mxu0 0.0
    %1991 = vmatprep.subr.mxu0 0.0
    %1992 = vmatpush1.xpose.msra.mxu0 0.0
    %1993 = vmatprep.subr.mxu0 0.0
    %1994 = vmatpush1.xpose.msra.mxu0 0.0
    %1995 = vmatprep.subr.mxu0 0.0
    %1996 = vmatpush1.xpose.msra.mxu0 0.0
    %1997 = vmatprep.subr.mxu0 0.0
    %1998 = vmatpush1.xpose.msra.mxu0 0.0
    %1999 = vmatprep.subr.mxu0 0.0
    %2000 = vmatpush1.xpose.msra.mxu0 0.0
    %2001 = vmatprep.subr.mxu0 0.0
    %2002 = vmatpush1.xpose.msra.mxu0 0.0
    %2003 = vmatprep.subr.mxu0 0.0
    %2004 = vmatpush1.xpose.msra.mxu0 0.0
    %2005 = vmatprep.subr.mxu0 0.0
    %2006 = vmatpush1.xpose.msra.mxu0 0.0
    %2007 = vmatprep.subr.mxu0 0.0
    %2008 = vmatpush1.xpose.msra.mxu0 0.0
    %2009 = vmatprep.mubr.f32.mxu0 0.0
    %2010 = vmatmul.mubr.f32.gmra.mrb[0].mxu0 %v1941
    %v2011 = vpop.f32.mrb[0].mxu0
    %v2012 = vadd.f32 0.0, %v2011
    %v2013 = vpop.f32.mrb[0].mxu0
    %2014 = vdwg.mxu0
    %v2015 = vmul.f32 %v2012, 0.17677669
    %v2016 = vadd.f32 %v2015, %v153
    %v2017 = vsel %vm537, %v2016, -inf
    %2018 = vmax.xlane.f32.xlu0 %v2017
    %v2019 = vpop.xlane.xlu0 %2018
    %v2020 = vsub.f32 %v2016, %v2019
    %v2021 = vmul.f32 %v2020, 1.442695
    %v2022 = vpow.pop %v2021
    %v2023 = vsel %vm537, %v2022, 0.0
    %2024 = vadd.xlane.f32.xlu0 %v2023
    %v2025 = vpop.xlane.xlu0 %2024
    %2026 = vrot.lane.b32.xlu0 %v455, 64
    %v2027 = vpop.permute.xlu0 %2026
    %v2030 = vsel %vm537, %v2022, 0
    %2032 = vmatprep.subr.mxu0 0.0
    %2033 = vmatpush1.msra.mxu0 %v2027
    %2034 = vmatprep.subr.mxu0 0.0
    %2035 = vmatpush1.msra.mxu0 0.0
    %2036 = vmatprep.subr.mxu0 0.0
    %2037 = vmatpush1.msra.mxu0 0.0
    %2038 = vmatprep.subr.mxu0 0.0
    %2039 = vmatpush1.msra.mxu0 0.0
    %2040 = vmatprep.subr.mxu0 0.0
    %2041 = vmatpush1.msra.mxu0 0.0
    %2042 = vmatprep.subr.mxu0 0.0
    %2043 = vmatpush1.msra.mxu0 0.0
    %2044 = vmatprep.subr.mxu0 0.0
    %2045 = vmatpush1.msra.mxu0 0.0
    %2046 = vmatprep.subr.mxu0 0.0
    %2047 = vmatpush1.msra.mxu0 0.0
    %2048 = vmatprep.subr.mxu0 0.0
    %2049 = vmatpush1.msra.mxu0 0.0
    %2050 = vmatprep.subr.mxu0 0.0
    %2051 = vmatpush1.msra.mxu0 0.0
    %2052 = vmatprep.subr.mxu0 0.0
    %2053 = vmatpush1.msra.mxu0 0.0
    %2054 = vmatprep.subr.mxu0 0.0
    %2055 = vmatpush1.msra.mxu0 0.0
    %2056 = vmatprep.subr.mxu0 0.0
    %2057 = vmatpush1.msra.mxu0 0.0
    %2058 = vmatprep.subr.mxu0 0.0
    %2059 = vmatpush1.msra.mxu0 0.0
    %2060 = vmatprep.subr.mxu0 0.0
    %2061 = vmatpush1.msra.mxu0 0.0
    %2062 = vmatprep.subr.mxu0 0.0
    %2063 = vmatpush1.msra.mxu0 0.0
    %2064 = vmatprep.subr.mxu0 0.0
    %2065 = vmatpush1.msra.mxu0 0.0
    %2066 = vmatprep.subr.mxu0 0.0
    %2067 = vmatpush1.msra.mxu0 0.0
    %2068 = vmatprep.subr.mxu0 0.0
    %2069 = vmatpush1.msra.mxu0 0.0
    %2070 = vmatprep.subr.mxu0 0.0
    %2071 = vmatpush1.msra.mxu0 0.0
    %2072 = vmatprep.subr.mxu0 0.0
    %2073 = vmatpush1.msra.mxu0 0.0
    %2074 = vmatprep.subr.mxu0 0.0
    %2075 = vmatpush1.msra.mxu0 0.0
    %2076 = vmatprep.subr.mxu0 0.0
    %2077 = vmatpush1.msra.mxu0 0.0
    %2078 = vmatprep.subr.mxu0 0.0
    %2079 = vmatpush1.msra.mxu0 0.0
    %2080 = vmatprep.subr.mxu0 0.0
    %2081 = vmatpush1.msra.mxu0 0.0
    %2082 = vmatprep.subr.mxu0 0.0
    %2083 = vmatpush1.msra.mxu0 0.0
    %2084 = vmatprep.subr.mxu0 0.0
    %2085 = vmatpush1.msra.mxu0 0.0
    %2086 = vmatprep.subr.mxu0 0.0
    %2087 = vmatpush1.msra.mxu0 0.0
    %2088 = vmatprep.subr.mxu0 0.0
    %2089 = vmatpush1.msra.mxu0 0.0
    %2090 = vmatprep.subr.mxu0 0.0
    %2091 = vmatpush1.msra.mxu0 0.0
    %2092 = vmatprep.subr.mxu0 0.0
    %2093 = vmatpush1.msra.mxu0 0.0
    %2094 = vmatprep.subr.mxu0 0.0
    %2095 = vmatpush1.msra.mxu0 0.0
    %2096 = vmatprep.mubr.f32.mxu0 0.0
    %2097 = vmatmul.mubr.f32.gmra.mrb[0].mxu0 %v2030
    %v2098 = vpop.f32.mrb[0].mxu0
    %v2099 = vadd.f32 0.0, %v2098
    %v2100 = vpop.f32.mrb[0].mxu0
    %2101 = vdwg.mxu0
    %v2102 = vrcp.pop %v2025
    %v2103 = vmul.f32 %v2099, %v2102
    %v2105 = vsel %vm458, %v2103, 0
    %2107 = vmatprep.subr.mxu0 0.0
    %2108 = vmatpush1.msra.mxu0 %v211
    %2109 = vmatprep.subr.mxu0 0.0
    %2110 = vmatpush1.msra.mxu0 %v212
    %2111 = vmatprep.subr.mxu0 0.0
    %2112 = vmatpush1.msra.mxu0 %v213
    %2113 = vmatprep.subr.mxu0 0.0
    %2114 = vmatpush1.msra.mxu0 %v214
    %2115 = vmatprep.subr.mxu0 0.0
    %2116 = vmatpush1.msra.mxu0 0.0
    %2117 = vmatprep.subr.mxu0 0.0
    %2118 = vmatpush1.msra.mxu0 0.0
    %2119 = vmatprep.subr.mxu0 0.0
    %2120 = vmatpush1.msra.mxu0 0.0
    %2121 = vmatprep.subr.mxu0 0.0
    %2122 = vmatpush1.msra.mxu0 0.0
    %2123 = vmatprep.subr.mxu0 0.0
    %2124 = vmatpush1.msra.mxu0 0.0
    %2125 = vmatprep.subr.mxu0 0.0
    %2126 = vmatpush1.msra.mxu0 0.0
    %2127 = vmatprep.subr.mxu0 0.0
    %2128 = vmatpush1.msra.mxu0 0.0
    %2129 = vmatprep.subr.mxu0 0.0
    %2130 = vmatpush1.msra.mxu0 0.0
    %2131 = vmatprep.subr.mxu0 0.0
    %2132 = vmatpush1.msra.mxu0 0.0
    %2133 = vmatprep.subr.mxu0 0.0
    %2134 = vmatpush1.msra.mxu0 0.0
    %2135 = vmatprep.subr.mxu0 0.0
    %2136 = vmatpush1.msra.mxu0 0.0
    %2137 = vmatprep.subr.mxu0 0.0
    %2138 = vmatpush1.msra.mxu0 0.0
    %2139 = vmatprep.subr.mxu0 0.0
    %2140 = vmatpush1.msra.mxu0 0.0
    %2141 = vmatprep.subr.mxu0 0.0
    %2142 = vmatpush1.msra.mxu0 0.0
    %2143 = vmatprep.subr.mxu0 0.0
    %2144 = vmatpush1.msra.mxu0 0.0
    %2145 = vmatprep.subr.mxu0 0.0
    %2146 = vmatpush1.msra.mxu0 0.0
    %2147 = vmatprep.subr.mxu0 0.0
    %2148 = vmatpush1.msra.mxu0 0.0
    %2149 = vmatprep.subr.mxu0 0.0
    %2150 = vmatpush1.msra.mxu0 0.0
    %2151 = vmatprep.subr.mxu0 0.0
    %2152 = vmatpush1.msra.mxu0 0.0
    %2153 = vmatprep.subr.mxu0 0.0
    %2154 = vmatpush1.msra.mxu0 0.0
    %2155 = vmatprep.subr.mxu0 0.0
    %2156 = vmatpush1.msra.mxu0 0.0
    %2157 = vmatprep.subr.mxu0 0.0
    %2158 = vmatpush1.msra.mxu0 0.0
    %2159 = vmatprep.subr.mxu0 0.0
    %2160 = vmatpush1.msra.mxu0 0.0
    %2161 = vmatprep.subr.mxu0 0.0
    %2162 = vmatpush1.msra.mxu0 0.0
    %2163 = vmatprep.subr.mxu0 0.0
    %2164 = vmatpush1.msra.mxu0 0.0
    %2165 = vmatprep.subr.mxu0 0.0
    %2166 = vmatpush1.msra.mxu0 0.0
    %2167 = vmatprep.subr.mxu0 0.0
    %2168 = vmatpush1.msra.mxu0 0.0
    %2169 = vmatprep.subr.mxu0 0.0
    %2170 = vmatpush1.msra.mxu0 0.0
    %2171 = vmatprep.mubr.f32.mxu0 0.0
    %2172 = vmatmul.mubr.f32.gmra.mrb[0].mxu0 %v2105
    %v2173 = vpop.f32.mrb[0].mxu0
    %v2174 = vadd.f32 0.0, %v2173
    %v2175 = vpop.f32.mrb[0].mxu0
    %2176 = vdwg.mxu0
    %v2177 = vadd.f32 %v1934, %v2174
    %2178 = vrot.lane.b32.xlu0 %v379, 32
    %v2179 = vpop.permute.xlu0 %2178
    %2180 = vrot.lane.b32.xlu0 %v381, 32
    %v2181 = vpop.permute.xlu0 %2180
    %v2182 = vsel %vm458, %v2179, 0
    %v2184 = vsel %vm458, %v2181, 0
    %2186 = vmatprep.subr.mxu0 0.0
    %2187 = vmatpush1.xpose.msra.mxu0 %v2184
    %2188 = vmatprep.subr.mxu0 0.0
    %2189 = vmatpush1.xpose.msra.mxu0 0.0
    %2190 = vmatprep.subr.mxu0 0.0
    %2191 = vmatpush1.xpose.msra.mxu0 0.0
    %2192 = vmatprep.subr.mxu0 0.0
    %2193 = vmatpush1.xpose.msra.mxu0 0.0
    %2194 = vmatprep.subr.mxu0 0.0
    %2195 = vmatpush1.xpose.msra.mxu0 0.0
    %2196 = vmatprep.subr.mxu0 0.0
    %2197 = vmatpush1.xpose.msra.mxu0 0.0
    %2198 = vmatprep.subr.mxu0 0.0
    %2199 = vmatpush1.xpose.msra.mxu0 0.0
    %2200 = vmatprep.subr.mxu0 0.0
    %2201 = vmatpush1.xpose.msra.mxu0 0.0
    %2202 = vmatprep.subr.mxu0 0.0
    %2203 = vmatpush1.xpose.msra.mxu0 0.0
    %2204 = vmatprep.subr.mxu0 0.0
    %2205 = vmatpush1.xpose.msra.mxu0 0.0
    %2206 = vmatprep.subr.mxu0 0.0
    %2207 = vmatpush1.xpose.msra.mxu0 0.0
    %2208 = vmatprep.subr.mxu0 0.0
    %2209 = vmatpush1.xpose.msra.mxu0 0.0
    %2210 = vmatprep.subr.mxu0 0.0
    %2211 = vmatpush1.xpose.msra.mxu0 0.0
    %2212 = vmatprep.subr.mxu0 0.0
    %2213 = vmatpush1.xpose.msra.mxu0 0.0
    %2214 = vmatprep.subr.mxu0 0.0
    %2215 = vmatpush1.xpose.msra.mxu0 0.0
    %2216 = vmatprep.subr.mxu0 0.0
    %2217 = vmatpush1.xpose.msra.mxu0 0.0
    %2218 = vmatprep.subr.mxu0 0.0
    %2219 = vmatpush1.xpose.msra.mxu0 0.0
    %2220 = vmatprep.subr.mxu0 0.0
    %2221 = vmatpush1.xpose.msra.mxu0 0.0
    %2222 = vmatprep.subr.mxu0 0.0
    %2223 = vmatpush1.xpose.msra.mxu0 0.0
    %2224 = vmatprep.subr.mxu0 0.0
    %2225 = vmatpush1.xpose.msra.mxu0 0.0
    %2226 = vmatprep.subr.mxu0 0.0
    %2227 = vmatpush1.xpose.msra.mxu0 0.0
    %2228 = vmatprep.subr.mxu0 0.0
    %2229 = vmatpush1.xpose.msra.mxu0 0.0
    %2230 = vmatprep.subr.mxu0 0.0
    %2231 = vmatpush1.xpose.msra.mxu0 0.0
    %2232 = vmatprep.subr.mxu0 0.0
    %2233 = vmatpush1.xpose.msra.mxu0 0.0
    %2234 = vmatprep.subr.mxu0 0.0
    %2235 = vmatpush1.xpose.msra.mxu0 0.0
    %2236 = vmatprep.subr.mxu0 0.0
    %2237 = vmatpush1.xpose.msra.mxu0 0.0
    %2238 = vmatprep.subr.mxu0 0.0
    %2239 = vmatpush1.xpose.msra.mxu0 0.0
    %2240 = vmatprep.subr.mxu0 0.0
    %2241 = vmatpush1.xpose.msra.mxu0 0.0
    %2242 = vmatprep.subr.mxu0 0.0
    %2243 = vmatpush1.xpose.msra.mxu0 0.0
    %2244 = vmatprep.subr.mxu0 0.0
    %2245 = vmatpush1.xpose.msra.mxu0 0.0
    %2246 = vmatprep.subr.mxu0 0.0
    %2247 = vmatpush1.xpose.msra.mxu0 0.0
    %2248 = vmatprep.subr.mxu0 0.0
    %2249 = vmatpush1.xpose.msra.mxu0 0.0
    %2250 = vmatprep.mubr.f32.mxu0 0.0
    %2251 = vmatmul.mubr.f32.gmra.mrb[0].mxu0 %v2182
    %v2252 = vpop.f32.mrb[0].mxu0
    %v2253 = vadd.f32 0.0, %v2252
    %v2254 = vpop.f32.mrb[0].mxu0
    %2255 = vdwg.mxu0
    %v2256 = vmul.f32 %v2253, 0.17677669
    %v2257 = vadd.f32 %v2256, %v153
    %v2258 = vsel %vm537, %v2257, -inf
    %2259 = vmax.xlane.f32.xlu0 %v2258
    %v2260 = vpop.xlane.xlu0 %2259
    %v2261 = vsub.f32 %v2257, %v2260
    %v2262 = vmul.f32 %v2261, 1.442695
    %v2263 = vpow.pop %v2262
    %v2264 = vsel %vm537, %v2263, 0.0
    %2265 = vadd.xlane.f32.xlu0 %v2264
    %v2266 = vpop.xlane.xlu0 %2265
    %2267 = vrot.lane.b32.xlu0 %v455, 32
    %v2268 = vpop.permute.xlu0 %2267
    %v2271 = vsel %vm537, %v2263, 0
    %2273 = vmatprep.subr.mxu0 0.0
    %2274 = vmatpush1.msra.mxu0 %v2268
    %2275 = vmatprep.subr.mxu0 0.0
    %2276 = vmatpush1.msra.mxu0 0.0
    %2277 = vmatprep.subr.mxu0 0.0
    %2278 = vmatpush1.msra.mxu0 0.0
    %2279 = vmatprep.subr.mxu0 0.0
    %2280 = vmatpush1.msra.mxu0 0.0
    %2281 = vmatprep.subr.mxu0 0.0
    %2282 = vmatpush1.msra.mxu0 0.0
    %2283 = vmatprep.subr.mxu0 0.0
    %2284 = vmatpush1.msra.mxu0 0.0
    %2285 = vmatprep.subr.mxu0 0.0
    %2286 = vmatpush1.msra.mxu0 0.0
    %2287 = vmatprep.subr.mxu0 0.0
    %2288 = vmatpush1.msra.mxu0 0.0
    %2289 = vmatprep.subr.mxu0 0.0
    %2290 = vmatpush1.msra.mxu0 0.0
    %2291 = vmatprep.subr.mxu0 0.0
    %2292 = vmatpush1.msra.mxu0 0.0
    %2293 = vmatprep.subr.mxu0 0.0
    %2294 = vmatpush1.msra.mxu0 0.0
    %2295 = vmatprep.subr.mxu0 0.0
    %2296 = vmatpush1.msra.mxu0 0.0
    %2297 = vmatprep.subr.mxu0 0.0
    %2298 = vmatpush1.msra.mxu0 0.0
    %2299 = vmatprep.subr.mxu0 0.0
    %2300 = vmatpush1.msra.mxu0 0.0
    %2301 = vmatprep.subr.mxu0 0.0
    %2302 = vmatpush1.msra.mxu0 0.0
    %2303 = vmatprep.subr.mxu0 0.0
    %2304 = vmatpush1.msra.mxu0 0.0
    %2305 = vmatprep.subr.mxu0 0.0
    %2306 = vmatpush1.msra.mxu0 0.0
    %2307 = vmatprep.subr.mxu0 0.0
    %2308 = vmatpush1.msra.mxu0 0.0
    %2309 = vmatprep.subr.mxu0 0.0
    %2310 = vmatpush1.msra.mxu0 0.0
    %2311 = vmatprep.subr.mxu0 0.0
    %2312 = vmatpush1.msra.mxu0 0.0
    %2313 = vmatprep.subr.mxu0 0.0
    %2314 = vmatpush1.msra.mxu0 0.0
    %2315 = vmatprep.subr.mxu0 0.0
    %2316 = vmatpush1.msra.mxu0 0.0
    %2317 = vmatprep.subr.mxu0 0.0
    %2318 = vmatpush1.msra.mxu0 0.0
    %2319 = vmatprep.subr.mxu0 0.0
    %2320 = vmatpush1.msra.mxu0 0.0
    %2321 = vmatprep.subr.mxu0 0.0
    %2322 = vmatpush1.msra.mxu0 0.0
    %2323 = vmatprep.subr.mxu0 0.0
    %2324 = vmatpush1.msra.mxu0 0.0
    %2325 = vmatprep.subr.mxu0 0.0
    %2326 = vmatpush1.msra.mxu0 0.0
    %2327 = vmatprep.subr.mxu0 0.0
    %2328 = vmatpush1.msra.mxu0 0.0
    %2329 = vmatprep.subr.mxu0 0.0
    %2330 = vmatpush1.msra.mxu0 0.0
    %2331 = vmatprep.subr.mxu0 0.0
    %2332 = vmatpush1.msra.mxu0 0.0
    %2333 = vmatprep.subr.mxu0 0.0
    %2334 = vmatpush1.msra.mxu0 0.0
    %2335 = vmatprep.subr.mxu0 0.0
    %2336 = vmatpush1.msra.mxu0 0.0
    %2337 = vmatprep.mubr.f32.mxu0 0.0
    %2338 = vmatmul.mubr.f32.gmra.mrb[0].mxu0 %v2271
    %v2339 = vpop.f32.mrb[0].mxu0
    %v2340 = vadd.f32 0.0, %v2339
    %v2341 = vpop.f32.mrb[0].mxu0
    %2342 = vdwg.mxu0
    %v2343 = vrcp.pop %v2266
    %v2344 = vmul.f32 %v2340, %v2343
    %v2346 = vsel %vm458, %v2344, 0
    %2348 = vmatprep.subr.mxu0 0.0
    %2349 = vmatpush1.msra.mxu0 %v215
    %2350 = vmatprep.subr.mxu0 0.0
    %2351 = vmatpush1.msra.mxu0 %v216
    %2352 = vmatprep.subr.mxu0 0.0
    %2353 = vmatpush1.msra.mxu0 %v217
    %2354 = vmatprep.subr.mxu0 0.0
    %2355 = vmatpush1.msra.mxu0 %v218
    %2356 = vmatprep.subr.mxu0 0.0
    %2357 = vmatpush1.msra.mxu0 0.0
    %2358 = vmatprep.subr.mxu0 0.0
    %2359 = vmatpush1.msra.mxu0 0.0
    %2360 = vmatprep.subr.mxu0 0.0
    %2361 = vmatpush1.msra.mxu0 0.0
    %2362 = vmatprep.subr.mxu0 0.0
    %2363 = vmatpush1.msra.mxu0 0.0
    %2364 = vmatprep.subr.mxu0 0.0
    %2365 = vmatpush1.msra.mxu0 0.0
    %2366 = vmatprep.subr.mxu0 0.0
    %2367 = vmatpush1.msra.mxu0 0.0
    %2368 = vmatprep.subr.mxu0 0.0
    %2369 = vmatpush1.msra.mxu0 0.0
    %2370 = vmatprep.subr.mxu0 0.0
    %2371 = vmatpush1.msra.mxu0 0.0
    %2372 = vmatprep.subr.mxu0 0.0
    %2373 = vmatpush1.msra.mxu0 0.0
    %2374 = vmatprep.subr.mxu0 0.0
    %2375 = vmatpush1.msra.mxu0 0.0
    %2376 = vmatprep.subr.mxu0 0.0
    %2377 = vmatpush1.msra.mxu0 0.0
    %2378 = vmatprep.subr.mxu0 0.0
    %2379 = vmatpush1.msra.mxu0 0.0
    %2380 = vmatprep.subr.mxu0 0.0
    %2381 = vmatpush1.msra.mxu0 0.0
    %2382 = vmatprep.subr.mxu0 0.0
    %2383 = vmatpush1.msra.mxu0 0.0
    %2384 = vmatprep.subr.mxu0 0.0
    %2385 = vmatpush1.msra.mxu0 0.0
    %2386 = vmatprep.subr.mxu0 0.0
    %2387 = vmatpush1.msra.mxu0 0.0
    %2388 = vmatprep.subr.mxu0 0.0
    %2389 = vmatpush1.msra.mxu0 0.0
    %2390 = vmatprep.subr.mxu0 0.0
    %2391 = vmatpush1.msra.mxu0 0.0
    %2392 = vmatprep.subr.mxu0 0.0
    %2393 = vmatpush1.msra.mxu0 0.0
    %2394 = vmatprep.subr.mxu0 0.0
    %2395 = vmatpush1.msra.mxu0 0.0
    %2396 = vmatprep.subr.mxu0 0.0
    %2397 = vmatpush1.msra.mxu0 0.0
    %2398 = vmatprep.subr.mxu0 0.0
    %2399 = vmatpush1.msra.mxu0 0.0
    %2400 = vmatprep.subr.mxu0 0.0
    %2401 = vmatpush1.msra.mxu0 0.0
    %2402 = vmatprep.subr.mxu0 0.0
    %2403 = vmatpush1.msra.mxu0 0.0
    %2404 = vmatprep.subr.mxu0 0.0
    %2405 = vmatpush1.msra.mxu0 0.0
    %2406 = vmatprep.subr.mxu0 0.0
    %2407 = vmatpush1.msra.mxu0 0.0
    %2408 = vmatprep.subr.mxu0 0.0
    %2409 = vmatpush1.msra.mxu0 0.0
    %2410 = vmatprep.subr.mxu0 0.0
    %2411 = vmatpush1.msra.mxu0 0.0
    %2412 = vmatprep.mubr.f32.mxu0 0.0
    %2413 = vmatmul.mubr.f32.gmra.mrb[0].mxu0 %v2346
    %v2414 = vpop.f32.mrb[0].mxu0
    %v2415 = vadd.f32 0.0, %v2414
    %v2416 = vpop.f32.mrb[0].mxu0
    %2417 = vdwg.mxu0
    %v2418 = vadd.f32 %v2177, %v2415
    %v2419 = vadd.f32 %v152, %v2418
    %v2420 = vadd.f32 %v2419, %v1423
    %2421 = vadd.xlane.f32.xlu0 %v2420
    %v2422 = vpop.xlane.xlu0 %2421
    %v2423 = vrot.slane %v2422, 4
    %v2424 = vadd.f32 %v2422, %v2423
    %v2425 = vrot.slane %v2424, 2
    %v2426 = vadd.f32 %v2424, %v2425
    %v2427 = vrot.slane %v2426, 1
    %v2428 = vadd.f32 %v2426, %v2427
    %s2429 = vtos %v2428
    %v2430 = vrcp.pop 1024.0
    %s2431 = vtos %v2430
    %s2432 = smul.f32 %s2429, %s2431
    %v2433 = vstv %s2432
    %v2434 = vsub.f32 %v2420, %v2433
    %v2435 = vmul.f32 %v2434, %v2434
    %2436 = vadd.xlane.f32.xlu0 %v2435
    %v2437 = vpop.xlane.xlu0 %2436
    %v2438 = vrot.slane %v2437, 4
    %v2439 = vadd.f32 %v2437, %v2438
    %v2440 = vrot.slane %v2439, 2
    %v2441 = vadd.f32 %v2439, %v2440
    %v2442 = vrot.slane %v2441, 1
    %v2443 = vadd.f32 %v2441, %v2442
    %s2444 = vtos %v2443
    %v2445 = vrcp.pop 1024.0
    %s2446 = vtos %v2445
    %s2447 = smul.f32 %s2444, %s2446
    %s2448 = sadd.f32 %s2447, 1e-05
    %v2449 = vstv %s2448
    %v2450 = vrsqrt.pop %v2449
    %s2451 = vtos %v2450
    %v2452 = vstv %s2451
    %v2453 = vmul.f32 %v2434, %v2452
    %v2454 = vmul.f32 %v2453, %v220
    %v2455 = vadd.f32 %v2454, %v221
    %v2457 = vlaneseq
    %v2458 = vshrl.u32 %v2457, 7
    %v2459 = vsub.s32 0, %v2458
    %v2460 = vrot.slane %v254, %v2459
    %v2461 = vlaneseq
    %v2462 = vshrl.u32 %v2461, 7
    %v2463 = vsub.s32 1, %v2462
    %v2464 = vrot.slane %v254, %v2463
    %2467 = vmatprep.subr.mxu0 %v223
    %2468 = vmatpush1.msra.mxu0 %v222
    %2469 = vmatprep.subr.mxu0 %v225
    %2470 = vmatpush1.msra.mxu0 %v224
    %2471 = vmatprep.subr.mxu0 %v227
    %2472 = vmatpush1.msra.mxu0 %v226
    %2473 = vmatprep.subr.mxu0 %v229
    %2474 = vmatpush1.msra.mxu0 %v228
    %2475 = vmatprep.subr.mxu0 %v231
    %2476 = vmatpush1.msra.mxu0 %v230
    %2477 = vmatprep.subr.mxu0 %v233
    %2478 = vmatpush1.msra.mxu0 %v232
    %2479 = vmatprep.subr.mxu0 %v235
    %2480 = vmatpush1.msra.mxu0 %v234
    %2481 = vmatprep.subr.mxu0 %v237
    %2482 = vmatpush1.msra.mxu0 %v236
    %2483 = vmatprep.subr.mxu0 %v239
    %2484 = vmatpush1.msra.mxu0 %v238
    %2485 = vmatprep.subr.mxu0 %v241
    %2486 = vmatpush1.msra.mxu0 %v240
    %2487 = vmatprep.subr.mxu0 %v243
    %2488 = vmatpush1.msra.mxu0 %v242
    %2489 = vmatprep.subr.mxu0 %v245
    %2490 = vmatpush1.msra.mxu0 %v244
    %2491 = vmatprep.subr.mxu0 %v247
    %2492 = vmatpush1.msra.mxu0 %v246
    %2493 = vmatprep.subr.mxu0 %v249
    %2494 = vmatpush1.msra.mxu0 %v248
    %2495 = vmatprep.subr.mxu0 %v251
    %2496 = vmatpush1.msra.mxu0 %v250
    %2497 = vmatprep.subr.mxu0 %v253
    %2498 = vmatpush1.msra.mxu0 %v252
    %2499 = vmatprep.subr.mxu0 0.0
    %2500 = vmatpush1.msra.mxu0 0.0
    %2501 = vmatprep.subr.mxu0 0.0
    %2502 = vmatpush1.msra.mxu0 0.0
    %2503 = vmatprep.subr.mxu0 0.0
    %2504 = vmatpush1.msra.mxu0 0.0
    %2505 = vmatprep.subr.mxu0 0.0
    %2506 = vmatpush1.msra.mxu0 0.0
    %2507 = vmatprep.subr.mxu0 0.0
    %2508 = vmatpush1.msra.mxu0 0.0
    %2509 = vmatprep.subr.mxu0 0.0
    %2510 = vmatpush1.msra.mxu0 0.0
    %2511 = vmatprep.subr.mxu0 0.0
    %2512 = vmatpush1.msra.mxu0 0.0
    %2513 = vmatprep.subr.mxu0 0.0
    %2514 = vmatpush1.msra.mxu0 0.0
    %2515 = vmatprep.subr.mxu0 0.0
    %2516 = vmatpush1.msra.mxu0 0.0
    %2517 = vmatprep.subr.mxu0 0.0
    %2518 = vmatpush1.msra.mxu0 0.0
    %2519 = vmatprep.subr.mxu0 0.0
    %2520 = vmatpush1.msra.mxu0 0.0
    %2521 = vmatprep.subr.mxu0 0.0
    %2522 = vmatpush1.msra.mxu0 0.0
    %2523 = vmatprep.subr.mxu0 0.0
    %2524 = vmatpush1.msra.mxu0 0.0
    %2525 = vmatprep.subr.mxu0 0.0
    %2526 = vmatpush1.msra.mxu0 0.0
    %2527 = vmatprep.subr.mxu0 0.0
    %2528 = vmatpush1.msra.mxu0 0.0
    %2529 = vmatprep.subr.mxu0 0.0
    %2530 = vmatpush1.msra.mxu0 0.0
    %2531 = vmatprep.mubr.f32.mxu0 0.0
    %2532 = vmatmul.mubr.f32.gmra.mrb[0].mxu0 %v1460
    %v2533 = vpop.f32.mrb[0].mxu0
    %v2534 = vadd.f32 %v2460, %v2533
    %v2535 = vpop.f32.mrb[0].mxu0
    %v2536 = vadd.f32 %v2464, %v2535
    %2537 = vmatprep.mubr.f32.mxu0 0.0
    %2538 = vmatmul.mubr.f32.gmra.mrb[0].mxu0 %v2455
    %v2539 = vpop.f32.mrb[0].mxu0
    %v2540 = vadd.f32 %v2460, %v2539
    %v2541 = vpop.f32.mrb[0].mxu0
    %v2542 = vadd.f32 %v2464, %v2541
    %2543 = vdwg.mxu0
    %v2544 = vmax.f32 %v2534, 0.0
    %v2545 = vmax.f32 %v2536, 0.0
    %v2546 = vmax.f32 %v2540, 0.0
    %v2547 = vmax.f32 %v2542, 0.0
    %v2549 = vlaneseq
    %v2550 = vshrl.u32 %v2549, 7
    %v2551 = vsub.s32 0, %v2550
    %v2552 = vrot.slane %v287, %v2551
    %2554 = vmatprep.subr.mxu0 0.0
    %2555 = vmatpush1.msra.mxu0 %v255
    %2556 = vmatprep.subr.mxu0 0.0
    %2557 = vmatpush1.msra.mxu0 %v256
    %2558 = vmatprep.subr.mxu0 0.0
    %2559 = vmatpush1.msra.mxu0 %v257
    %2560 = vmatprep.subr.mxu0 0.0
    %2561 = vmatpush1.msra.mxu0 %v258
    %2562 = vmatprep.subr.mxu0 0.0
    %2563 = vmatpush1.msra.mxu0 %v259
    %2564 = vmatprep.subr.mxu0 0.0
    %2565 = vmatpush1.msra.mxu0 %v260
    %2566 = vmatprep.subr.mxu0 0.0
    %2567 = vmatpush1.msra.mxu0 %v261
    %2568 = vmatprep.subr.mxu0 0.0
    %2569 = vmatpush1.msra.mxu0 %v262
    %2570 = vmatprep.subr.mxu0 0.0
    %2571 = vmatpush1.msra.mxu0 %v263
    %2572 = vmatprep.subr.mxu0 0.0
    %2573 = vmatpush1.msra.mxu0 %v264
    %2574 = vmatprep.subr.mxu0 0.0
    %2575 = vmatpush1.msra.mxu0 %v265
    %2576 = vmatprep.subr.mxu0 0.0
    %2577 = vmatpush1.msra.mxu0 %v266
    %2578 = vmatprep.subr.mxu0 0.0
    %2579 = vmatpush1.msra.mxu0 %v267
    %2580 = vmatprep.subr.mxu0 0.0
    %2581 = vmatpush1.msra.mxu0 %v268
    %2582 = vmatprep.subr.mxu0 0.0
    %2583 = vmatpush1.msra.mxu0 %v269
    %2584 = vmatprep.subr.mxu0 0.0
    %2585 = vmatpush1.msra.mxu0 %v270
    %2586 = vmatprep.subr.mxu0 0.0
    %2587 = vmatpush1.msra.mxu0 %v271
    %2588 = vmatprep.subr.mxu0 0.0
    %2589 = vmatpush1.msra.mxu0 %v272
    %2590 = vmatprep.subr.mxu0 0.0
    %2591 = vmatpush1.msra.mxu0 %v273
    %2592 = vmatprep.subr.mxu0 0.0
    %2593 = vmatpush1.msra.mxu0 %v274
    %2594 = vmatprep.subr.mxu0 0.0
    %2595 = vmatpush1.msra.mxu0 %v275
    %2596 = vmatprep.subr.mxu0 0.0
    %2597 = vmatpush1.msra.mxu0 %v276
    %2598 = vmatprep.subr.mxu0 0.0
    %2599 = vmatpush1.msra.mxu0 %v277
    %2600 = vmatprep.subr.mxu0 0.0
    %2601 = vmatpush1.msra.mxu0 %v278
    %2602 = vmatprep.subr.mxu0 0.0
    %2603 = vmatpush1.msra.mxu0 %v279
    %2604 = vmatprep.subr.mxu0 0.0
    %2605 = vmatpush1.msra.mxu0 %v280
    %2606 = vmatprep.subr.mxu0 0.0
    %2607 = vmatpush1.msra.mxu0 %v281
    %2608 = vmatprep.subr.mxu0 0.0
    %2609 = vmatpush1.msra.mxu0 %v282
    %2610 = vmatprep.subr.mxu0 0.0
    %2611 = vmatpush1.msra.mxu0 %v283
    %2612 = vmatprep.subr.mxu0 0.0
    %2613 = vmatpush1.msra.mxu0 %v284
    %2614 = vmatprep.subr.mxu0 0.0
    %2615 = vmatpush1.msra.mxu0 %v285
    %2616 = vmatprep.subr.mxu0 0.0
    %2617 = vmatpush1.msra.mxu0 %v286
    %2618 = vmatprep.mubr.f32.mxu0 %v2545
    %2619 = vmatmul.mubr.f32.gmra.mrb[0].mxu0 %v2544
    %v2620 = vpop.f32.mrb[0].mxu0
    %v2621 = vadd.f32 %v2552, %v2620
    %v2622 = vpop.f32.mrb[0].mxu0
    %2623 = vmatprep.mubr.f32.mxu0 %v2547
    %2624 = vmatmul.mubr.f32.gmra.mrb[0].mxu0 %v2546
    %v2625 = vpop.f32.mrb[0].mxu0
    %v2626 = vadd.f32 %v2552, %v2625
    %v2627 = vpop.f32.mrb[0].mxu0
    %2628 = vdwg.mxu0
    %v2629 = vadd.f32 %v1460, %v2621
    %2630 = vadd.xlane.f32.xlu0 %v2629
    %v2631 = vpop.xlane.xlu0 %2630
    %v2632 = vrot.slane %v2631, 4
    %v2633 = vadd.f32 %v2631, %v2632
    %v2634 = vrot.slane %v2633, 2
    %v2635 = vadd.f32 %v2633, %v2634
    %v2636 = vrot.slane %v2635, 1
    %v2637 = vadd.f32 %v2635, %v2636
    %s2638 = vtos %v2637
    %v2639 = vrcp.pop 1024.0
    %s2640 = vtos %v2639
    %s2641 = smul.f32 %s2638, %s2640
    %v2642 = vstv %s2641
    %v2643 = vsub.f32 %v2629, %v2642
    %v2644 = vmul.f32 %v2643, %v2643
    %2645 = vadd.xlane.f32.xlu0 %v2644
    %v2646 = vpop.xlane.xlu0 %2645
    %v2647 = vrot.slane %v2646, 4
    %v2648 = vadd.f32 %v2646, %v2647
    %v2649 = vrot.slane %v2648, 2
    %v2650 = vadd.f32 %v2648, %v2649
    %v2651 = vrot.slane %v2650, 1
    %v2652 = vadd.f32 %v2650, %v2651
    %s2653 = vtos %v2652
    %v2654 = vrcp.pop 1024.0
    %s2655 = vtos %v2654
    %s2656 = smul.f32 %s2653, %s2655
    %s2657 = sadd.f32 %s2656, 1e-05
    %v2658 = vstv %s2657
    %v2659 = vrsqrt.pop %v2658
    %s2660 = vtos %v2659
    %v2661 = vstv %s2660
    %v2662 = vmul.f32 %v2643, %v2661
    %v2663 = vmul.f32 %v2662, %v288
    %v2664 = vadd.f32 %v2663, %v289
    %v2665 = vadd.f32 %v2455, %v2626
    %2666 = vadd.xlane.f32.xlu0 %v2665
    %v2667 = vpop.xlane.xlu0 %2666
    %v2668 = vrot.slane %v2667, 4
    %v2669 = vadd.f32 %v2667, %v2668
    %v2670 = vrot.slane %v2669, 2
    %v2671 = vadd.f32 %v2669, %v2670
    %v2672 = vrot.slane %v2671, 1
    %v2673 = vadd.f32 %v2671, %v2672
    %s2674 = vtos %v2673
    %v2675 = vrcp.pop 1024.0
    %s2676 = vtos %v2675
    %s2677 = smul.f32 %s2674, %s2676
    %v2678 = vstv %s2677
    %v2679 = vsub.f32 %v2665, %v2678
    %v2680 = vmul.f32 %v2679, %v2679
    %2681 = vadd.xlane.f32.xlu0 %v2680
    %v2682 = vpop.xlane.xlu0 %2681
    %v2683 = vrot.slane %v2682, 4
    %v2684 = vadd.f32 %v2682, %v2683
    %v2685 = vrot.slane %v2684, 2
    %v2686 = vadd.f32 %v2684, %v2685
    %v2687 = vrot.slane %v2686, 1
    %v2688 = vadd.f32 %v2686, %v2687
    %s2689 = vtos %v2688
    %v2690 = vrcp.pop 1024.0
    %s2691 = vtos %v2690
    %s2692 = smul.f32 %s2689, %s2691
    %s2693 = sadd.f32 %s2692, 1e-05
    %v2694 = vstv %s2693
    %v2695 = vrsqrt.pop %v2694
    %s2696 = vtos %v2695
    %v2697 = vstv %s2696
    %v2698 = vmul.f32 %v2679, %v2697
    %v2699 = vmul.f32 %v2698, %v288
    %v2700 = vadd.f32 %v2699, %v289
    %2701 = vst [vmem:[#allocation16] sm:$0xff] %v2664
    %2702 = vst [vmem:[#allocation16 + $0x8] sm:$0xff] %v2700
    // Predicated region
    $region90: #{tpu_custom_call.1} parent=1 // pred_check
      _
    $region91: #{tpu_custom_call.1} parent=1 // pred_check_branch
      %2704 = sbr.rel (0) target = $region93
    $region92: #{tpu_custom_call.1} parent=1 // pred_region
      %s2706 = ssub.s32 256, 256
      %2707 = vsyncadd [#allocation4], %s2706
      %s2708 = sshll.u32 [#allocation16], 4
      %s2709 = int_to_ptr.vmem [resolvable:$true] %s2708
      %2714 = dma.vmem_to_hbm [thread:$0]  %s2709, 256, %s14, [#allocation4], 128, 128, 8
    $region93: #{tpu_custom_call.1} parent=1 // pred_fallthru
      _
    // Predicated region
    $region94: #{tpu_custom_call.1} parent=1 // pred_check
      _
    $region95: #{tpu_custom_call.1} parent=1 // pred_check_branch
      %2716 = sbr.rel (0) target = $region97
    $region96: #{tpu_custom_call.1} parent=1 // pred_region
      %2717 = dma.done [#allocation4], 256
    $region97: #{tpu_custom_call.1} parent=1 // pred_fallthru
      _
    %2718 = vsyncpa [#allocation3], 1
    %2719 = vsyncpa [#allocation6], 1
    %2720 = vsyncpa [#allocation9], 1
    %2721 = vsyncpa [#allocation12], 1
    %2722 = vsyncpa [#allocation15], 1
    %2723 = vsyncpa [#allocation4], 1

</llo_original>
